<compile_context>
chip_gen: v6e
topology: v6e:2x2x1
jax: 0.10.0
libtpu: 0.0.40
codegen_flags: <defaults>
</compile_context>

<pallas_src>
import math

import jax
import jax.numpy as jnp
from jax import lax
from jax.experimental import pallas as pl
from jax.experimental.pallas import tpu as pltpu


# ---------------------------------------------------------------------------
# Model dimensions.  The module requires 5*hidden_size == word_dim + 200
# (200 = char-conv output channels), so hidden_size=64 -> word_dim=120.
NUM_HWY_LAYERS = 2
HIDDEN_SIZE = 64
CHAR_CONV_OUT = 200
D = 5 * HIDDEN_SIZE              # 320: the dim the highway Linears act on
WORD_DIM = D - CHAR_CONV_OUT     # 120
CHAR_DIM = 64                    # char embedding dim == depthwise conv channels
WORD_VOCAB = 100
CHAR_VOCAB = 60

# Kernel-side padded dims (lane-dense layouts).
VPAD = 128                       # both vocabularies padded to one MXU K-pass
WORD_PAD = 128                   # word feature columns 120 -> 128
CHAR_OUT_PAD = 256               # char-conv output channels 200 -> 256
D_PAD = WORD_PAD + CHAR_OUT_PAD  # 384: highway feature dim, 3*128 lane aligned


def _round_up(x, n):
    return ((x + n - 1) // n) * n


# ---------------------------------------------------------------------------
# Kernel 1: embedding lookup as a one-hot matmul against a VMEM-resident table.
def onehot_gather_kernel(idx_ref, table_ref, o_ref):
    """idx_ref: (tile, 1) int32; table_ref: (VPAD, d_pad) f32 resident;
    o_ref: (tile, d_pad) f32.  Out-of-vocab (padded) rows are never selected."""
    tile = o_ref.shape[0]
    vpad = table_ref.shape[0]
    onehot = (lax.broadcasted_iota(jnp.int32, (tile, vpad), 1)
              == idx_ref[...]).astype(jnp.float32)
    # f32 x f32 on the MXU -> (near-)exact row selection; table stays f32.
    o_ref[...] = jnp.dot(onehot, table_ref[...],
                         preferred_element_type=jnp.float32).astype(o_ref.dtype)


def embedding_lookup(table_pad, idx):
    """out[..., :] = table_pad[idx[...]]; table_pad is (VPAD, d_pad) f32."""
    flat = idx.reshape(-1, 1).astype(jnp.int32)
    n = flat.shape[0]
    tile = min(512, _round_up(n, 8))          # big row tiles, no forced split
    n_pad = _round_up(n, tile)
    if n_pad != n:
        flat = jnp.pad(flat, ((0, n_pad - n), (0, 0)))
    vpad, dpad = table_pad.shape
    out = pl.pallas_call(
        onehot_gather_kernel,
        out_shape=jax.ShapeDtypeStruct((n_pad, dpad), jnp.float32),
        grid_spec=pl.GridSpec(
            grid=(n_pad // tile,),
            in_specs=[
                pl.BlockSpec((tile, 1), lambda i: (i, 0)),        # index tile
                pl.BlockSpec((vpad, dpad), lambda i: (0, 0)),     # table (resident)
            ],
            out_specs=pl.BlockSpec((tile, dpad), lambda i: (i, 0)),
        ),
        compiler_params=pltpu.CompilerParams(
            dimension_semantics=("parallel",)),
    )(flat, table_pad)
    return out[:n].reshape(idx.shape + (dpad,))


# ---------------------------------------------------------------------------
# Kernel 2: fused 1x1 char conv + bias + ReLU + max over char positions.
def char_conv_max_kernel(x_ref, w_ref, b_ref, o_ref):
    """x_ref: (tile_bs, C*E) f32 (C char positions, channels-last, free view);
    w_ref: (E, 256) bf16; b_ref: (1, 256) f32; o_ref: (tile_bs, 256) f32.

    max_c relu(x_c @ w + b) == relu(max_c(x_c @ w) + b)  (relu, +b monotonic)."""
    e = w_ref.shape[0]
    c = x_ref.shape[1] // e
    w = w_ref[...]
    m = None
    for cc in range(c):                                  # static unroll (C == 16)
        xc = x_ref[:, cc * e:(cc + 1) * e].astype(jnp.bfloat16)
        y = jnp.dot(xc, w, preferred_element_type=jnp.float32)
        m = y if m is None else jnp.maximum(m, y)
    o_ref[...] = jnp.maximum(m + b_ref[...], 0.0).astype(o_ref.dtype)


def char_conv_relu_max(rows, w1p, b1p):
    """rows: (n_bs, C*E) f32; w1p: (E, 256) bf16; b1p: (1, 256) f32
    -> (n_bs, 256) f32 with columns 200:256 exactly zero."""
    n_bs, c_e = rows.shape
    opad = w1p.shape[1]
    tile = min(512, _round_up(n_bs, 8))
    n_pad = _round_up(n_bs, tile)
    if n_pad != n_bs:
        rows = jnp.pad(rows, ((0, n_pad - n_bs), (0, 0)))
    out = pl.pallas_call(
        char_conv_max_kernel,
        out_shape=jax.ShapeDtypeStruct((n_pad, opad), jnp.float32),
        grid_spec=pl.GridSpec(
            grid=(n_pad // tile,),
            in_specs=[
                pl.BlockSpec((tile, c_e), lambda i: (i, 0)),          # activation rows
                pl.BlockSpec((w1p.shape[0], opad), lambda i: (0, 0)),  # weight (resident)
                pl.BlockSpec((1, opad), lambda i: (0, 0)),             # bias   (resident)
            ],
            out_specs=pl.BlockSpec((tile, opad), lambda i: (i, 0)),
        ),
        compiler_params=pltpu.CompilerParams(
            dimension_semantics=("parallel",)),
    )(rows, w1p, b1p)
    return out[:n_bs]


# ---------------------------------------------------------------------------
# Kernel 3: fused 2-layer HighwayEncoder on the 384-wide padded feature dim.
def highway_kernel(x_ref, w_ref, b_ref, o_ref):
    """x_ref/o_ref: (tm, 384) f32.  w_ref: (L, 384, 768) bf16 with output
    columns [0:384) = gate, [384:768) = transform (128-aligned slice points).
    b_ref: (L, 768) f32.  Padded feature columns stay exactly zero."""
    dpad = x_ref.shape[1]
    x = x_ref[...]
    for l in range(w_ref.shape[0]):                      # static unroll (L == 2)
        y = jnp.dot(x.astype(jnp.bfloat16), w_ref[l],
                    preferred_element_type=jnp.float32) + b_ref[l]
        g = jax.nn.sigmoid(y[:, :dpad])                  # gate      (EUP)
        t = jnp.maximum(y[:, dpad:], 0.0)                # transform (VPU)
        x = x + g * (t - x)                              # == g*t + (1-g)*x
    o_ref[...] = x.astype(o_ref.dtype)


def highway_encoder(x, w_fused, b_fused):
    """x: (m, 384) f32; w_fused: (L, 384, 768) bf16; b_fused: (L, 768) f32."""
    m, dpad = x.shape
    tm = min(512, _round_up(m, 8))           # only split the grid when there is work
    m_pad = _round_up(m, tm)
    if m_pad != m:
        x = jnp.pad(x, ((0, m_pad - m), (0, 0)))
    num_layers, _, d2 = w_fused.shape
    out = pl.pallas_call(
        highway_kernel,
        out_shape=jax.ShapeDtypeStruct((m_pad, dpad), jnp.float32),
        grid_spec=pl.GridSpec(
            grid=(m_pad // tm,),
            in_specs=[
                pl.BlockSpec((tm, dpad), lambda i: (i, 0)),               # row tile
                pl.BlockSpec((num_layers, dpad, d2), lambda i: (0, 0, 0)),  # weights (resident)
                pl.BlockSpec((num_layers, d2), lambda i: (0, 0)),           # biases  (resident)
            ],
            out_specs=pl.BlockSpec((tm, dpad), lambda i: (i, 0)),
        ),
        compiler_params=pltpu.CompilerParams(
            dimension_semantics=("parallel",)),
    )(x, w_fused, b_fused)
    return out[:m]


# ---------------------------------------------------------------------------
# Full Embedding.forward (inference mode: dropout = identity).
def embedding_forward(w_idxs, c_idxs, params):
    b, s = w_idxs.shape
    c = c_idxs.shape[-1]

    # Embedding lookups (VMEM-resident one-hot gather kernels).
    word_emb = embedding_lookup(params["word_tab"], w_idxs)     # (B,S,128), cols 120:128 = 0
    char_emb = embedding_lookup(params["char_tab"], c_idxs)     # (B,S,C,64)

    # Char conv path, channels-last end to end (no HBM transposes).
    # TODO(synk): depthwise 7x7 grouped Conv2d is left to XLA (lax.conv); no
    # clean single-Pallas-kernel equivalent implemented here.
    dw = lax.conv_general_dilated(
        char_emb, params["wd_hwio"], (1, 1), ((3, 3), (3, 3)),
        dimension_numbers=("NHWC", "HWIO", "NHWC"),
        feature_group_count=CHAR_DIM)
    dw = dw + params["bd"]                                       # (B,S,C,E)
    rows = dw.reshape(b * s, c * CHAR_DIM)                       # free view
    char_feat = char_conv_relu_max(rows, params["w1p"], params["b1p"])  # (B*S,256)

    # Padded concat (word 128 | char 256) -> fused highway on 384 lanes.
    emb = jnp.concatenate([word_emb.reshape(b * s, WORD_PAD), char_feat], axis=-1)
    hwy = highway_encoder(emb, params["w_hwy"], params["b_hwy"])          # (B*S,384)

    # Drop the padding columns back out to the logical 320-dim output.
    out = jnp.concatenate(
        [hwy[:, :WORD_DIM], hwy[:, WORD_PAD:WORD_PAD + CHAR_CONV_OUT]], axis=-1)
    return out.reshape(b, s, D)


# ---------------------------------------------------------------------------
# Pure-JAX f32 reference matching the PyTorch forward (eval mode).
def embedding_forward_ref(w_idxs, c_idxs, params):
    word_emb = params["word_vectors"][w_idxs]                    # (B,S,120)
    char_emb = params["char_vectors"][c_idxs]                    # (B,S,C,64)
    dw = lax.conv_general_dilated(
        char_emb, params["wd_hwio"], (1, 1), ((3, 3), (3, 3)),
        dimension_numbers=("NHWC", "HWIO", "NHWC"),
        feature_group_count=CHAR_DIM)
    dw = dw + params["bd"]
    y = dw @ params["w1"].T + params["b1"]                       # (B,S,C,200)
    char_feat = jnp.max(jnp.maximum(y, 0.0), axis=2)             # (B,S,200)
    emb = jnp.concatenate([word_emb, char_feat], axis=-1)        # (B,S,320)
    for l in range(NUM_HWY_LAYERS):
        g = jax.nn.sigmoid(emb @ params["wg"][l] + params["bg"][l])
        t = jnp.maximum(emb @ params["wt"][l] + params["bt"][l], 0.0)
        emb = g * t + (1.0 - g) * emb
    return emb


# ---------------------------------------------------------------------------
def init_params(key):
    """PyTorch-style inits plus the packed / padded layouts the kernels use."""
    ks = jax.random.split(key, 10)
    word_vectors = jax.random.normal(ks[0], (WORD_VOCAB, WORD_DIM), jnp.float32)
    char_vectors = jax.random.normal(ks[1], (CHAR_VOCAB, CHAR_DIM), jnp.float32)

    bconv = 1.0 / math.sqrt(7 * 7)                       # depthwise fan-in = 1*7*7
    wd = jax.random.uniform(ks[2], (CHAR_DIM, 1, 7, 7), jnp.float32, -bconv, bconv)
    bd = jax.random.uniform(ks[3], (CHAR_DIM,), jnp.float32, -bconv, bconv)

    bpw = 1.0 / math.sqrt(CHAR_DIM)                      # pointwise fan-in = E
    w1 = jax.random.uniform(ks[4], (CHAR_CONV_OUT, CHAR_DIM), jnp.float32, -bpw, bpw)
    b1 = jax.random.uniform(ks[5], (CHAR_CONV_OUT,), jnp.float32, -bpw, bpw)

    bl = 1.0 / math.sqrt(D)                              # highway Linear fan-in = D
    wt = jax.random.uniform(ks[6], (NUM_HWY_LAYERS, D, D), jnp.float32, -bl, bl)
    bt = jax.random.uniform(ks[7], (NUM_HWY_LAYERS, D), jnp.float32, -bl, bl)
    wg = jax.random.uniform(ks[8], (NUM_HWY_LAYERS, D, D), jnp.float32, -bl, bl)
    bg = jax.random.uniform(ks[9], (NUM_HWY_LAYERS, D), jnp.float32, -bl, bl)

    params = dict(word_vectors=word_vectors, char_vectors=char_vectors,
                  wd=wd, bd=bd, w1=w1, b1=b1, wt=wt, bt=bt, wg=wg, bg=bg)

    # VMEM-resident, zero-padded embedding tables (vocab -> 128, word dim -> 128).
    params["word_tab"] = (jnp.zeros((VPAD, WORD_PAD), jnp.float32)
                          .at[:WORD_VOCAB, :WORD_DIM].set(word_vectors))
    params["char_tab"] = (jnp.zeros((VPAD, CHAR_DIM), jnp.float32)
                          .at[:CHAR_VOCAB, :].set(char_vectors))

    # Depthwise conv weight in HWIO for the channels-last XLA conv.
    params["wd_hwio"] = jnp.transpose(wd, (2, 3, 1, 0))          # (7,7,1,E)

    # Pointwise conv weight (E, 256) bf16 + bias (1, 256) f32, zero-padded cols.
    params["w1p"] = (jnp.zeros((CHAR_DIM, CHAR_OUT_PAD), jnp.float32)
                     .at[:, :CHAR_CONV_OUT].set(w1.T)).astype(jnp.bfloat16)
    params["b1p"] = (jnp.zeros((1, CHAR_OUT_PAD), jnp.float32)
                     .at[:, :CHAR_CONV_OUT].set(b1))

    # Fused, 128-aligned highway weights: logical feature dims [word 0:120,
    # char 120:320] map to padded positions [0:120, 128:328]; output columns
    # are [gate (0:384) | transform (384:768)].  Padding rows/cols stay zero.
    pos = jnp.concatenate([jnp.arange(WORD_DIM), WORD_PAD + jnp.arange(CHAR_CONV_OUT)])
    w_hwy = jnp.zeros((NUM_HWY_LAYERS, D_PAD, 2 * D_PAD), jnp.float32)
    w_hwy = w_hwy.at[:, pos[:, None], pos[None, :]].set(wg)
    w_hwy = w_hwy.at[:, pos[:, None], D_PAD + pos[None, :]].set(wt)
    params["w_hwy"] = w_hwy.astype(jnp.bfloat16)
    b_hwy = jnp.zeros((NUM_HWY_LAYERS, 2 * D_PAD), jnp.float32)
    b_hwy = b_hwy.at[:, pos].set(bg)
    b_hwy = b_hwy.at[:, D_PAD + pos].set(bt)
    params["b_hwy"] = b_hwy
    return params


if __name__ == "__main__":
    key = jax.random.PRNGKey(0)
    k_w, k_c, k_p = jax.random.split(key, 3)

    batch, seq, char_len = 2, 8, 16
    w_idxs = jax.random.randint(k_w, (batch, seq), 0, WORD_VOCAB, dtype=jnp.int32)
    c_idxs = jax.random.randint(k_c, (batch, seq, char_len), 0, CHAR_VOCAB,
                                dtype=jnp.int32)
    params = init_params(k_p)

    fwd = jax.jit(embedding_forward)
    out = jax.block_until_ready(fwd(w_idxs, c_idxs, params))

    ref = embedding_forward_ref(w_idxs, c_idxs, params)
    assert out.shape == (batch, seq, D), out.shape
    # bf16 matmul inputs (char conv + highway) with f32 accumulation -> relaxed
    # tolerance vs. the pure-f32 reference; the embedding gather itself is f32.
    assert jnp.allclose(out, ref, atol=5e-2, rtol=5e-2), (
        "max abs diff = %f" % float(jnp.max(jnp.abs(out - ref))))

    print("KERNEL_OK")
</pallas_src>

<mosaic_0001>
module attributes {stable_mosaic.version = 11 : i64} {
  func.func @onehot_gather_kernel(%arg0: i32, %arg1: memref<256x1xi32, #tpu.memory_space<vmem>>, %arg2: memref<128x64xf32, #tpu.memory_space<vmem>>, %arg3: memref<256x64xf32, #tpu.memory_space<vmem>>) attributes {dimension_semantics = [#tpu.dimension_semantics<parallel>], iteration_bounds = array<i64: 1>, scalar_prefetch = 0 : i64, scratch_operands = 0 : i64, tpu.core_type = #tpu.core_type<tc>, window_params = [{transform_indices = @transform_0, window_bounds = array<i64: 256, 1>}, {pipeline_mode = #tpu.pipeline_mode<synchronous>, transform_indices = @transform_1, window_bounds = array<i64: 128, 64>}, {transform_indices = @transform_2, window_bounds = array<i64: 256, 64>}]} {
    %0 = tpu.iota {dimensions = array<i32: 1>} : vector<256x128xi32>
    %c0 = arith.constant 0 : index
    %c0_0 = arith.constant 0 : index
    %1 = vector.load %arg1[%c0, %c0_0] : memref<256x1xi32, #tpu.memory_space<vmem>>, vector<256x1xi32>
    %2 = vector.broadcast %1 : vector<256x1xi32> to vector<256x128xi32>
    %3 = arith.cmpi eq, %0, %2 : vector<256x128xi32>
    %4 = arith.extui %3 : vector<256x128xi1> to vector<256x128xi32>
    %5 = arith.sitofp %4 : vector<256x128xi32> to vector<256x128xf32>
    %c0_1 = arith.constant 0 : index
    %c0_2 = arith.constant 0 : index
    %6 = vector.load %arg2[%c0_1, %c0_2] : memref<128x64xf32, #tpu.memory_space<vmem>>, vector<128x64xf32>
    %cst = arith.constant dense<0.000000e+00> : vector<256x64xf32>
    %7 = tpu.matmul %5, %6, %cst {dimension_numbers = #tpu.dot_dimension_numbers<[1], [0], [0], [1], [0, 0, 1, 1], [], []>} : vector<256x128xf32>, vector<128x64xf32>, vector<256x64xf32> -> vector<256x64xf32>
    %c0_3 = arith.constant 0 : index
    %c0_4 = arith.constant 0 : index
    %8 = vector.load %arg3[%c0_3, %c0_4] : memref<256x64xf32, #tpu.memory_space<vmem>>, vector<256x64xf32>
    tpu.vector_store %arg3[%c0_3, %c0_4], %7 {strides = array<i32>} : memref<256x64xf32, #tpu.memory_space<vmem>>, vector<256x64xf32>,
    return
  }
  func.func @transform_0(%arg0: i32) -> (i32, i32) {
    %c0_i32 = arith.constant 0 : i32
    %c0_i32_0 = arith.constant 0 : i32
    return %arg0, %c0_i32 : i32, i32
  }
  func.func @transform_1(%arg0: i32) -> (i32, i32) {
    %c0_i32 = arith.constant 0 : i32
    %c0_i32_0 = arith.constant 0 : i32
    %c0_i32_1 = arith.constant 0 : i32
    return %c0_i32, %c0_i32_0 : i32, i32
  }
  func.func @transform_2(%arg0: i32) -> (i32, i32) {
    %c0_i32 = arith.constant 0 : i32
    %c0_i32_0 = arith.constant 0 : i32
    return %arg0, %c0_i32 : i32, i32
  }
}

module attributes {stable_mosaic.version = 11 : i64} {
  func.func @char_conv_max_kernel(%arg0: i32, %arg1: memref<16x1024xf32, #tpu.memory_space<vmem>>, %arg2: memref<64x256xbf16, #tpu.memory_space<vmem>>, %arg3: memref<1x256xf32, #tpu.memory_space<vmem>>, %arg4: memref<16x256xf32, #tpu.memory_space<vmem>>) attributes {dimension_semantics = [#tpu.dimension_semantics<parallel>], iteration_bounds = array<i64: 1>, scalar_prefetch = 0 : i64, scratch_operands = 0 : i64, tpu.core_type = #tpu.core_type<tc>, window_params = [{transform_indices = @transform_0, window_bounds = array<i64: 16, 1024>}, {pipeline_mode = #tpu.pipeline_mode<synchronous>, transform_indices = @transform_1, window_bounds = array<i64: 64, 256>}, {pipeline_mode = #tpu.pipeline_mode<synchronous>, transform_indices = @transform_2, window_bounds = array<i64: 1, 256>}, {transform_indices = @transform_3, window_bounds = array<i64: 16, 256>}]} {
    %c0 = arith.constant 0 : index
    %c0_0 = arith.constant 0 : index
    %0 = vector.load %arg2[%c0, %c0_0] : memref<64x256xbf16, #tpu.memory_space<vmem>>, vector<64x256xbf16>
    %c0_1 = arith.constant 0 : index
    %c0_2 = arith.constant 0 : index
    %1 = vector.load %arg1[%c0_1, %c0_2] : memref<16x1024xf32, #tpu.memory_space<vmem>>, vector<16x64xf32>
    %2 = arith.truncf %1 : vector<16x64xf32> to vector<16x64xbf16>
    %cst = arith.constant dense<0.000000e+00> : vector<16x256xf32>
    %3 = tpu.matmul %2, %0, %cst {dimension_numbers = #tpu.dot_dimension_numbers<[1], [0], [0], [1], [0, 0, 1, 1], [], []>} : vector<16x64xbf16>, vector<64x256xbf16>, vector<16x256xf32> -> vector<16x256xf32>
    %c0_3 = arith.constant 0 : index
    %c64 = arith.constant 64 : index
    %4 = vector.load %arg1[%c0_3, %c64] : memref<16x1024xf32, #tpu.memory_space<vmem>>, vector<16x64xf32>
    %5 = arith.truncf %4 : vector<16x64xf32> to vector<16x64xbf16>
    %cst_4 = arith.constant dense<0.000000e+00> : vector<16x256xf32>
    %6 = tpu.matmul %5, %0, %cst_4 {dimension_numbers = #tpu.dot_dimension_numbers<[1], [0], [0], [1], [0, 0, 1, 1], [], []>} : vector<16x64xbf16>, vector<64x256xbf16>, vector<16x256xf32> -> vector<16x256xf32>
    %7 = arith.maximumf %3, %6 : vector<16x256xf32>
    %c0_5 = arith.constant 0 : index
    %c128 = arith.constant 128 : index
    %8 = vector.load %arg1[%c0_5, %c128] : memref<16x1024xf32, #tpu.memory_space<vmem>>, vector<16x64xf32>
    %9 = arith.truncf %8 : vector<16x64xf32> to vector<16x64xbf16>
    %cst_6 = arith.constant dense<0.000000e+00> : vector<16x256xf32>
    %10 = tpu.matmul %9, %0, %cst_6 {dimension_numbers = #tpu.dot_dimension_numbers<[1], [0], [0], [1], [0, 0, 1, 1], [], []>} : vector<16x64xbf16>, vector<64x256xbf16>, vector<16x256xf32> -> vector<16x256xf32>
    %11 = arith.maximumf %7, %10 : vector<16x256xf32>
    %c0_7 = arith.constant 0 : index
    %c192 = arith.constant 192 : index
    %12 = vector.load %arg1[%c0_7, %c192] : memref<16x1024xf32, #tpu.memory_space<vmem>>, vector<16x64xf32>
    %13 = arith.truncf %12 : vector<16x64xf32> to vector<16x64xbf16>
    %cst_8 = arith.constant dense<0.000000e+00> : vector<16x256xf32>
    %14 = tpu.matmul %13, %0, %cst_8 {dimension_numbers = #tpu.dot_dimension_numbers<[1], [0], [0], [1], [0, 0, 1, 1], [], []>} : vector<16x64xbf16>, vector<64x256xbf16>, vector<16x256xf32> -> vector<16x256xf32>
    %15 = arith.maximumf %11, %14 : vector<16x256xf32>
    %c0_9 = arith.constant 0 : index
    %c256 = arith.constant 256 : index
    %16 = vector.load %arg1[%c0_9, %c256] : memref<16x1024xf32, #tpu.memory_space<vmem>>, vector<16x64xf32>
    %17 = arith.truncf %16 : vector<16x64xf32> to vector<16x64xbf16>
    %cst_10 = arith.constant dense<0.000000e+00> : vector<16x256xf32>
    %18 = tpu.matmul %17, %0, %cst_10 {dimension_numbers = #tpu.dot_dimension_numbers<[1], [0], [0], [1], [0, 0, 1, 1], [], []>} : vector<16x64xbf16>, vector<64x256xbf16>, vector<16x256xf32> -> vector<16x256xf32>
    %19 = arith.maximumf %15, %18 : vector<16x256xf32>
    %c0_11 = arith.constant 0 : index
    %c320 = arith.constant 320 : index
    %20 = vector.load %arg1[%c0_11, %c320] : memref<16x1024xf32, #tpu.memory_space<vmem>>, vector<16x64xf32>
    %21 = arith.truncf %20 : vector<16x64xf32> to vector<16x64xbf16>
    %cst_12 = arith.constant dense<0.000000e+00> : vector<16x256xf32>
    %22 = tpu.matmul %21, %0, %cst_12 {dimension_numbers = #tpu.dot_dimension_numbers<[1], [0], [0], [1], [0, 0, 1, 1], [], []>} : vector<16x64xbf16>, vector<64x256xbf16>, vector<16x256xf32> -> vector<16x256xf32>
    %23 = arith.maximumf %19, %22 : vector<16x256xf32>
    %c0_13 = arith.constant 0 : index
    %c384 = arith.constant 384 : index
    %24 = vector.load %arg1[%c0_13, %c384] : memref<16x1024xf32, #tpu.memory_space<vmem>>, vector<16x64xf32>
    %25 = arith.truncf %24 : vector<16x64xf32> to vector<16x64xbf16>
    %cst_14 = arith.constant dense<0.000000e+00> : vector<16x256xf32>
    %26 = tpu.matmul %25, %0, %cst_14 {dimension_numbers = #tpu.dot_dimension_numbers<[1], [0], [0], [1], [0, 0, 1, 1], [], []>} : vector<16x64xbf16>, vector<64x256xbf16>, vector<16x256xf32> -> vector<16x256xf32>
    %27 = arith.maximumf %23, %26 : vector<16x256xf32>
    %c0_15 = arith.constant 0 : index
    %c448 = arith.constant 448 : index
    %28 = vector.load %arg1[%c0_15, %c448] : memref<16x1024xf32, #tpu.memory_space<vmem>>, vector<16x64xf32>
    %29 = arith.truncf %28 : vector<16x64xf32> to vector<16x64xbf16>
    %cst_16 = arith.constant dense<0.000000e+00> : vector<16x256xf32>
    %30 = tpu.matmul %29, %0, %cst_16 {dimension_numbers = #tpu.dot_dimension_numbers<[1], [0], [0], [1], [0, 0, 1, 1], [], []>} : vector<16x64xbf16>, vector<64x256xbf16>, vector<16x256xf32> -> vector<16x256xf32>
    %31 = arith.maximumf %27, %30 : vector<16x256xf32>
    %c0_17 = arith.constant 0 : index
    %c512 = arith.constant 512 : index
    %32 = vector.load %arg1[%c0_17, %c512] : memref<16x1024xf32, #tpu.memory_space<vmem>>, vector<16x64xf32>
    %33 = arith.truncf %32 : vector<16x64xf32> to vector<16x64xbf16>
    %cst_18 = arith.constant dense<0.000000e+00> : vector<16x256xf32>
    %34 = tpu.matmul %33, %0, %cst_18 {dimension_numbers = #tpu.dot_dimension_numbers<[1], [0], [0], [1], [0, 0, 1, 1], [], []>} : vector<16x64xbf16>, vector<64x256xbf16>, vector<16x256xf32> -> vector<16x256xf32>
    %35 = arith.maximumf %31, %34 : vector<16x256xf32>
    %c0_19 = arith.constant 0 : index
    %c576 = arith.constant 576 : index
    %36 = vector.load %arg1[%c0_19, %c576] : memref<16x1024xf32, #tpu.memory_space<vmem>>, vector<16x64xf32>
    %37 = arith.truncf %36 : vector<16x64xf32> to vector<16x64xbf16>
    %cst_20 = arith.constant dense<0.000000e+00> : vector<16x256xf32>
    %38 = tpu.matmul %37, %0, %cst_20 {dimension_numbers = #tpu.dot_dimension_numbers<[1], [0], [0], [1], [0, 0, 1, 1], [], []>} : vector<16x64xbf16>, vector<64x256xbf16>, vector<16x256xf32> -> vector<16x256xf32>
    %39 = arith.maximumf %35, %38 : vector<16x256xf32>
    %c0_21 = arith.constant 0 : index
    %c640 = arith.constant 640 : index
    %40 = vector.load %arg1[%c0_21, %c640] : memref<16x1024xf32, #tpu.memory_space<vmem>>, vector<16x64xf32>
    %41 = arith.truncf %40 : vector<16x64xf32> to vector<16x64xbf16>
    %cst_22 = arith.constant dense<0.000000e+00> : vector<16x256xf32>
    %42 = tpu.matmul %41, %0, %cst_22 {dimension_numbers = #tpu.dot_dimension_numbers<[1], [0], [0], [1], [0, 0, 1, 1], [], []>} : vector<16x64xbf16>, vector<64x256xbf16>, vector<16x256xf32> -> vector<16x256xf32>
    %43 = arith.maximumf %39, %42 : vector<16x256xf32>
    %c0_23 = arith.constant 0 : index
    %c704 = arith.constant 704 : index
    %44 = vector.load %arg1[%c0_23, %c704] : memref<16x1024xf32, #tpu.memory_space<vmem>>, vector<16x64xf32>
    %45 = arith.truncf %44 : vector<16x64xf32> to vector<16x64xbf16>
    %cst_24 = arith.constant dense<0.000000e+00> : vector<16x256xf32>
    %46 = tpu.matmul %45, %0, %cst_24 {dimension_numbers = #tpu.dot_dimension_numbers<[1], [0], [0], [1], [0, 0, 1, 1], [], []>} : vector<16x64xbf16>, vector<64x256xbf16>, vector<16x256xf32> -> vector<16x256xf32>
    %47 = arith.maximumf %43, %46 : vector<16x256xf32>
    %c0_25 = arith.constant 0 : index
    %c768 = arith.constant 768 : index
    %48 = vector.load %arg1[%c0_25, %c768] : memref<16x1024xf32, #tpu.memory_space<vmem>>, vector<16x64xf32>
    %49 = arith.truncf %48 : vector<16x64xf32> to vector<16x64xbf16>
    %cst_26 = arith.constant dense<0.000000e+00> : vector<16x256xf32>
    %50 = tpu.matmul %49, %0, %cst_26 {dimension_numbers = #tpu.dot_dimension_numbers<[1], [0], [0], [1], [0, 0, 1, 1], [], []>} : vector<16x64xbf16>, vector<64x256xbf16>, vector<16x256xf32> -> vector<16x256xf32>
    %51 = arith.maximumf %47, %50 : vector<16x256xf32>
    %c0_27 = arith.constant 0 : index
    %c832 = arith.constant 832 : index
    %52 = vector.load %arg1[%c0_27, %c832] : memref<16x1024xf32, #tpu.memory_space<vmem>>, vector<16x64xf32>
    %53 = arith.truncf %52 : vector<16x64xf32> to vector<16x64xbf16>
    %cst_28 = arith.constant dense<0.000000e+00> : vector<16x256xf32>
    %54 = tpu.matmul %53, %0, %cst_28 {dimension_numbers = #tpu.dot_dimension_numbers<[1], [0], [0], [1], [0, 0, 1, 1], [], []>} : vector<16x64xbf16>, vector<64x256xbf16>, vector<16x256xf32> -> vector<16x256xf32>
    %55 = arith.maximumf %51, %54 : vector<16x256xf32>
    %c0_29 = arith.constant 0 : index
    %c896 = arith.constant 896 : index
    %56 = vector.load %arg1[%c0_29, %c896] : memref<16x1024xf32, #tpu.memory_space<vmem>>, vector<16x64xf32>
    %57 = arith.truncf %56 : vector<16x64xf32> to vector<16x64xbf16>
    %cst_30 = arith.constant dense<0.000000e+00> : vector<16x256xf32>
    %58 = tpu.matmul %57, %0, %cst_30 {dimension_numbers = #tpu.dot_dimension_numbers<[1], [0], [0], [1], [0, 0, 1, 1], [], []>} : vector<16x64xbf16>, vector<64x256xbf16>, vector<16x256xf32> -> vector<16x256xf32>
    %59 = arith.maximumf %55, %58 : vector<16x256xf32>
    %c0_31 = arith.constant 0 : index
    %c960 = arith.constant 960 : index
    %60 = vector.load %arg1[%c0_31, %c960] : memref<16x1024xf32, #tpu.memory_space<vmem>>, vector<16x64xf32>
    %61 = arith.truncf %60 : vector<16x64xf32> to vector<16x64xbf16>
    %cst_32 = arith.constant dense<0.000000e+00> : vector<16x256xf32>
    %62 = tpu.matmul %61, %0, %cst_32 {dimension_numbers = #tpu.dot_dimension_numbers<[1], [0], [0], [1], [0, 0, 1, 1], [], []>} : vector<16x64xbf16>, vector<64x256xbf16>, vector<16x256xf32> -> vector<16x256xf32>
    %63 = arith.maximumf %59, %62 : vector<16x256xf32>
    %c0_33 = arith.constant 0 : index
    %c0_34 = arith.constant 0 : index
    %64 = vector.load %arg3[%c0_33, %c0_34] : memref<1x256xf32, #tpu.memory_space<vmem>>, vector<1x256xf32>
    %65 = vector.broadcast %64 : vector<1x256xf32> to vector<16x256xf32>
    %66 = arith.addf %63, %65 : vector<16x256xf32>
    %cst_35 = arith.constant 0.000000e+00 : f32
    %67 = vector.broadcast %cst_35 : f32 to vector<16x256xf32>
    %68 = arith.maximumf %66, %67 : vector<16x256xf32>
    %c0_36 = arith.constant 0 : index
    %c0_37 = arith.constant 0 : index
    %69 = vector.load %arg4[%c0_36, %c0_37] : memref<16x256xf32, #tpu.memory_space<vmem>>, vector<16x256xf32>
    tpu.vector_store %arg4[%c0_36, %c0_37], %68 {strides = array<i32>} : memref<16x256xf32, #tpu.memory_space<vmem>>, vector<16x256xf32>,
    return
  }
  func.func @transform_0(%arg0: i32) -> (i32, i32) {
    %c0_i32 = arith.constant 0 : i32
    %c0_i32_0 = arith.constant 0 : i32
    return %arg0, %c0_i32 : i32, i32
  }
  func.func @transform_1(%arg0: i32) -> (i32, i32) {
    %c0_i32 = arith.constant 0 : i32
    %c0_i32_0 = arith.constant 0 : i32
    %c0_i32_1 = arith.constant 0 : i32
    return %c0_i32, %c0_i32_0 : i32, i32
  }
  func.func @transform_2(%arg0: i32) -> (i32, i32) {
    %c0_i32 = arith.constant 0 : i32
    %c0_i32_0 = arith.constant 0 : i32
    %c0_i32_1 = arith.constant 0 : i32
    return %c0_i32, %c0_i32_0 : i32, i32
  }
  func.func @transform_3(%arg0: i32) -> (i32, i32) {
    %c0_i32 = arith.constant 0 : i32
    %c0_i32_0 = arith.constant 0 : i32
    return %arg0, %c0_i32 : i32, i32
  }
}

module attributes {stable_mosaic.version = 11 : i64} {
  func.func @onehot_gather_kernel(%arg0: i32, %arg1: memref<16x1xi32, #tpu.memory_space<vmem>>, %arg2: memref<128x128xf32, #tpu.memory_space<vmem>>, %arg3: memref<16x128xf32, #tpu.memory_space<vmem>>) attributes {dimension_semantics = [#tpu.dimension_semantics<parallel>], iteration_bounds = array<i64: 1>, scalar_prefetch = 0 : i64, scratch_operands = 0 : i64, tpu.core_type = #tpu.core_type<tc>, window_params = [{transform_indices = @transform_0, window_bounds = array<i64: 16, 1>}, {pipeline_mode = #tpu.pipeline_mode<synchronous>, transform_indices = @transform_1, window_bounds = array<i64: 128, 128>}, {transform_indices = @transform_2, window_bounds = array<i64: 16, 128>}]} {
    %0 = tpu.iota {dimensions = array<i32: 1>} : vector<16x128xi32>
    %c0 = arith.constant 0 : index
    %c0_0 = arith.constant 0 : index
    %1 = vector.load %arg1[%c0, %c0_0] : memref<16x1xi32, #tpu.memory_space<vmem>>, vector<16x1xi32>
    %2 = vector.broadcast %1 : vector<16x1xi32> to vector<16x128xi32>
    %3 = arith.cmpi eq, %0, %2 : vector<16x128xi32>
    %4 = arith.extui %3 : vector<16x128xi1> to vector<16x128xi32>
    %5 = arith.sitofp %4 : vector<16x128xi32> to vector<16x128xf32>
    %c0_1 = arith.constant 0 : index
    %c0_2 = arith.constant 0 : index
    %6 = vector.load %arg2[%c0_1, %c0_2] : memref<128x128xf32, #tpu.memory_space<vmem>>, vector<128x128xf32>
    %cst = arith.constant dense<0.000000e+00> : vector<16x128xf32>
    %7 = tpu.matmul %5, %6, %cst {dimension_numbers = #tpu.dot_dimension_numbers<[1], [0], [0], [1], [0, 0, 1, 1], [], []>} : vector<16x128xf32>, vector<128x128xf32>, vector<16x128xf32> -> vector<16x128xf32>
    %c0_3 = arith.constant 0 : index
    %c0_4 = arith.constant 0 : index
    %8 = vector.load %arg3[%c0_3, %c0_4] : memref<16x128xf32, #tpu.memory_space<vmem>>, vector<16x128xf32>
    tpu.vector_store %arg3[%c0_3, %c0_4], %7 {strides = array<i32>} : memref<16x128xf32, #tpu.memory_space<vmem>>, vector<16x128xf32>,
    return
  }
  func.func @transform_0(%arg0: i32) -> (i32, i32) {
    %c0_i32 = arith.constant 0 : i32
    %c0_i32_0 = arith.constant 0 : i32
    return %arg0, %c0_i32 : i32, i32
  }
  func.func @transform_1(%arg0: i32) -> (i32, i32) {
    %c0_i32 = arith.constant 0 : i32
    %c0_i32_0 = arith.constant 0 : i32
    %c0_i32_1 = arith.constant 0 : i32
    return %c0_i32, %c0_i32_0 : i32, i32
  }
  func.func @transform_2(%arg0: i32) -> (i32, i32) {
    %c0_i32 = arith.constant 0 : i32
    %c0_i32_0 = arith.constant 0 : i32
    return %arg0, %c0_i32 : i32, i32
  }
}

module attributes {stable_mosaic.version = 11 : i64} {
  func.func @highway_kernel(%arg0: i32, %arg1: memref<16x384xf32, #tpu.memory_space<vmem>>, %arg2: memref<2x384x768xbf16, #tpu.memory_space<vmem>>, %arg3: memref<2x768xf32, #tpu.memory_space<vmem>>, %arg4: memref<16x384xf32, #tpu.memory_space<vmem>>) attributes {dimension_semantics = [#tpu.dimension_semantics<parallel>], iteration_bounds = array<i64: 1>, scalar_prefetch = 0 : i64, scratch_operands = 0 : i64, tpu.core_type = #tpu.core_type<tc>, window_params = [{transform_indices = @transform_0, window_bounds = array<i64: 16, 384>}, {pipeline_mode = #tpu.pipeline_mode<synchronous>, transform_indices = @transform_1, window_bounds = array<i64: 2, 384, 768>}, {pipeline_mode = #tpu.pipeline_mode<synchronous>, transform_indices = @transform_2, window_bounds = array<i64: 2, 768>}, {transform_indices = @transform_3, window_bounds = array<i64: 16, 384>}]} {
    %c0 = arith.constant 0 : index
    %c0_0 = arith.constant 0 : index
    %0 = vector.load %arg1[%c0, %c0_0] : memref<16x384xf32, #tpu.memory_space<vmem>>, vector<16x384xf32>
    %1 = arith.truncf %0 : vector<16x384xf32> to vector<16x384xbf16>
    %c0_1 = arith.constant 0 : index
    %c0_2 = arith.constant 0 : index
    %c0_3 = arith.constant 0 : index
    %2 = vector.load %arg2[%c0_1, %c0_2, %c0_3] : memref<2x384x768xbf16, #tpu.memory_space<vmem>>, vector<1x384x768xbf16>
    %3 = vector.shape_cast %2 : vector<1x384x768xbf16> to vector<384x768xbf16>
    %cst = arith.constant dense<0.000000e+00> : vector<16x768xf32>
    %4 = tpu.matmul %1, %3, %cst {dimension_numbers = #tpu.dot_dimension_numbers<[1], [0], [0], [1], [0, 0, 1, 1], [], []>} : vector<16x384xbf16>, vector<384x768xbf16>, vector<16x768xf32> -> vector<16x768xf32>
    %c0_4 = arith.constant 0 : index
    %c0_5 = arith.constant 0 : index
    %5 = vector.load %arg3[%c0_4, %c0_5] : memref<2x768xf32, #tpu.memory_space<vmem>>, vector<1x768xf32>
    %6 = vector.shape_cast %5 : vector<1x768xf32> to vector<768xf32>
    %7 = vector.shape_cast %6 : vector<768xf32> to vector<1x768xf32>
    %8 = vector.broadcast %7 : vector<1x768xf32> to vector<16x768xf32>
    %9 = arith.addf %4, %8 : vector<16x768xf32>
    %10 = vector.extract_strided_slice %9 {offsets = [0, 0], sizes = [16, 384], strides = [1, 1]} : vector<16x768xf32> to vector<16x384xf32>
    %11 = arith.negf %10 : vector<16x384xf32>
    %12 = math.exp %11 : vector<16x384xf32>
    %cst_6 = arith.constant 1.000000e+00 : f32
    %13 = vector.broadcast %cst_6 : f32 to vector<16x384xf32>
    %14 = arith.addf %13, %12 : vector<16x384xf32>
    %15 = arith.divf %13, %14 : vector<16x384xf32>
    %16 = vector.extract_strided_slice %9 {offsets = [0, 384], sizes = [16, 384], strides = [1, 1]} : vector<16x768xf32> to vector<16x384xf32>
    %cst_7 = arith.constant 0.000000e+00 : f32
    %17 = vector.broadcast %cst_7 : f32 to vector<16x384xf32>
    %18 = arith.maximumf %16, %17 : vector<16x384xf32>
    %19 = arith.subf %18, %0 : vector<16x384xf32>
    %20 = arith.mulf %15, %19 : vector<16x384xf32>
    %21 = arith.addf %0, %20 : vector<16x384xf32>
    %22 = arith.truncf %21 : vector<16x384xf32> to vector<16x384xbf16>
    %c1 = arith.constant 1 : index
    %c0_8 = arith.constant 0 : index
    %c0_9 = arith.constant 0 : index
    %23 = vector.load %arg2[%c1, %c0_8, %c0_9] : memref<2x384x768xbf16, #tpu.memory_space<vmem>>, vector<1x384x768xbf16>
    %24 = vector.shape_cast %23 : vector<1x384x768xbf16> to vector<384x768xbf16>
    %cst_10 = arith.constant dense<0.000000e+00> : vector<16x768xf32>
    %25 = tpu.matmul %22, %24, %cst_10 {dimension_numbers = #tpu.dot_dimension_numbers<[1], [0], [0], [1], [0, 0, 1, 1], [], []>} : vector<16x384xbf16>, vector<384x768xbf16>, vector<16x768xf32> -> vector<16x768xf32>
    %c1_11 = arith.constant 1 : index
    %c0_12 = arith.constant 0 : index
    %26 = vector.load %arg3[%c1_11, %c0_12] : memref<2x768xf32, #tpu.memory_space<vmem>>, vector<1x768xf32>
    %27 = vector.shape_cast %26 : vector<1x768xf32> to vector<768xf32>
    %28 = vector.shape_cast %27 : vector<768xf32> to vector<1x768xf32>
    %29 = vector.broadcast %28 : vector<1x768xf32> to vector<16x768xf32>
    %30 = arith.addf %25, %29 : vector<16x768xf32>
    %31 = vector.extract_strided_slice %30 {offsets = [0, 0], sizes = [16, 384], strides = [1, 1]} : vector<16x768xf32> to vector<16x384xf32>
    %32 = arith.negf %31 : vector<16x384xf32>
    %33 = math.exp %32 : vector<16x384xf32>
    %cst_13 = arith.constant 1.000000e+00 : f32
    %34 = vector.broadcast %cst_13 : f32 to vector<16x384xf32>
    %35 = arith.addf %34, %33 : vector<16x384xf32>
    %36 = arith.divf %34, %35 : vector<16x384xf32>
    %37 = vector.extract_strided_slice %30 {offsets = [0, 384], sizes = [16, 384], strides = [1, 1]} : vector<16x768xf32> to vector<16x384xf32>
    %cst_14 = arith.constant 0.000000e+00 : f32
    %38 = vector.broadcast %cst_14 : f32 to vector<16x384xf32>
    %39 = arith.maximumf %37, %38 : vector<16x384xf32>
    %40 = arith.subf %39, %21 : vector<16x384xf32>
    %41 = arith.mulf %36, %40 : vector<16x384xf32>
    %42 = arith.addf %21, %41 : vector<16x384xf32>
    %c0_15 = arith.constant 0 : index
    %c0_16 = arith.constant 0 : index
    %43 = vector.load %arg4[%c0_15, %c0_16] : memref<16x384xf32, #tpu.memory_space<vmem>>, vector<16x384xf32>
    tpu.vector_store %arg4[%c0_15, %c0_16], %42 {strides = array<i32>} : memref<16x384xf32, #tpu.memory_space<vmem>>, vector<16x384xf32>,
    return
  }
  func.func @transform_0(%arg0: i32) -> (i32, i32) {
    %c0_i32 = arith.constant 0 : i32
    %c0_i32_0 = arith.constant 0 : i32
    return %arg0, %c0_i32 : i32, i32
  }
  func.func @transform_1(%arg0: i32) -> (i32, i32, i32) {
    %c0_i32 = arith.constant 0 : i32
    %c0_i32_0 = arith.constant 0 : i32
    %c0_i32_1 = arith.constant 0 : i32
    %c0_i32_2 = arith.constant 0 : i32
    return %c0_i32, %c0_i32_0, %c0_i32_1 : i32, i32, i32
  }
  func.func @transform_2(%arg0: i32) -> (i32, i32) {
    %c0_i32 = arith.constant 0 : i32
    %c0_i32_0 = arith.constant 0 : i32
    %c0_i32_1 = arith.constant 0 : i32
    return %c0_i32, %c0_i32_0 : i32, i32
  }
  func.func @transform_3(%arg0: i32) -> (i32, i32) {
    %c0_i32 = arith.constant 0 : i32
    %c0_i32_0 = arith.constant 0 : i32
    return %arg0, %c0_i32 : i32, i32
  }
}

</mosaic_0001>

<llo_original>
// kernel: embedding_forward.5
$region0: #{embedding_forward.5}
  #allocation0 [shape = 'u32[]', space=smem, size = 0x4, offset = 0x4, fixed_abs, tag = 'smem constant byte address 0x4 - core index']
  #allocation1 [shape = 'u32[144,128]{1,0:T(1,128)}', space=vmem, size = 0x12000, scoped, tag = 'internal scratch']
  %s0 = inlined_call_operand.vmem [shape: s32[256,1], index: 0, kind: input, shape index: {}]
  %s1 = inlined_call_operand.vmem [shape: f32[128,64], index: 1, kind: input, shape index: {}]
  %s2 = inlined_call_operand.vmem [shape: f32[256,64], index: 2, kind: output, shape index: {}]
  %s3 = sld [smem:[#allocation0]]
  $region18: #{embedding_forward.5} parent=0
    _
  %s5 = ssub.s32 1, %s3
  %s6 = scalar_select 0, %s5, %s3
  // Predicated region
  $region2: #{embedding_forward.5} parent=0 // pred_check
    _
  $region3: #{embedding_forward.5} parent=0 // pred_check_branch
    %8 = sbr.rel (0) target = $region5
  $region4: #{embedding_forward.5} parent=0 // pred_region
    _
  $region5: #{embedding_forward.5} parent=0 // pred_fallthru
    _
  // Predicated region
  $region6: #{embedding_forward.5} parent=0 // pred_check
    _
  $region7: #{embedding_forward.5} parent=0 // pred_check_branch
    %10 = sbr.rel (0) target = $region9
  $region8: #{embedding_forward.5} parent=0 // pred_region
    _
  $region9: #{embedding_forward.5} parent=0 // pred_fallthru
    _
  %v11 = vlaneseq
  %v12 = vand.u32 %v11, 127
  %v13 = vld [vmem:[%s0] sm:$0xff]
  %v14 = vld [vmem:[%s0 + $0x8] sm:$0xff]
  %v15 = vld [vmem:[%s0 + $0x10] sm:$0xff]
  %v16 = vld [vmem:[%s0 + $0x18] sm:$0xff]
  %v17 = vld [vmem:[%s0 + $0x20] sm:$0xff]
  %v18 = vld [vmem:[%s0 + $0x28] sm:$0xff]
  %v19 = vld [vmem:[%s0 + $0x30] sm:$0xff]
  %v20 = vld [vmem:[%s0 + $0x38] sm:$0xff]
  %v21 = vld [vmem:[%s0 + $0x40] sm:$0xff]
  %v22 = vld [vmem:[%s0 + $0x48] sm:$0xff]
  %v23 = vld [vmem:[%s0 + $0x50] sm:$0xff]
  %v24 = vld [vmem:[%s0 + $0x58] sm:$0xff]
  %v25 = vld [vmem:[%s0 + $0x60] sm:$0xff]
  %v26 = vld [vmem:[%s0 + $0x68] sm:$0xff]
  %v27 = vld [vmem:[%s0 + $0x70] sm:$0xff]
  %v28 = vld [vmem:[%s0 + $0x78] sm:$0xff]
  %v29 = vld [vmem:[%s0 + $0x80] sm:$0xff]
  %v30 = vld [vmem:[%s0 + $0x88] sm:$0xff]
  %v31 = vld [vmem:[%s0 + $0x90] sm:$0xff]
  %v32 = vld [vmem:[%s0 + $0x98] sm:$0xff]
  %v33 = vld [vmem:[%s0 + $0xa0] sm:$0xff]
  %v34 = vld [vmem:[%s0 + $0xa8] sm:$0xff]
  %v35 = vld [vmem:[%s0 + $0xb0] sm:$0xff]
  %v36 = vld [vmem:[%s0 + $0xb8] sm:$0xff]
  %v37 = vld [vmem:[%s0 + $0xc0] sm:$0xff]
  %v38 = vld [vmem:[%s0 + $0xc8] sm:$0xff]
  %v39 = vld [vmem:[%s0 + $0xd0] sm:$0xff]
  %v40 = vld [vmem:[%s0 + $0xd8] sm:$0xff]
  %v41 = vld [vmem:[%s0 + $0xe0] sm:$0xff]
  %v42 = vld [vmem:[%s0 + $0xe8] sm:$0xff]
  %v43 = vld [vmem:[%s0 + $0xf0] sm:$0xff]
  %v44 = vld [vmem:[%s0 + $0xf8] sm:$0xff]
  %45 = vset.pattern.permute.xlu0 0
  %46 = vperm.xlu0 %45, %v13
  %v47 = vpop.permute.xlu0 %46
  %48 = vset.pattern.permute.xlu0 0
  %49 = vperm.xlu0 %48, %v14
  %v50 = vpop.permute.xlu0 %49
  %51 = vset.pattern.permute.xlu0 0
  %52 = vperm.xlu0 %51, %v15
  %v53 = vpop.permute.xlu0 %52
  %54 = vset.pattern.permute.xlu0 0
  %55 = vperm.xlu0 %54, %v16
  %v56 = vpop.permute.xlu0 %55
  %57 = vset.pattern.permute.xlu0 0
  %58 = vperm.xlu0 %57, %v17
  %v59 = vpop.permute.xlu0 %58
  %60 = vset.pattern.permute.xlu0 0
  %61 = vperm.xlu0 %60, %v18
  %v62 = vpop.permute.xlu0 %61
  %63 = vset.pattern.permute.xlu0 0
  %64 = vperm.xlu0 %63, %v19
  %v65 = vpop.permute.xlu0 %64
  %66 = vset.pattern.permute.xlu0 0
  %67 = vperm.xlu0 %66, %v20
  %v68 = vpop.permute.xlu0 %67
  %69 = vset.pattern.permute.xlu0 0
  %70 = vperm.xlu0 %69, %v21
  %v71 = vpop.permute.xlu0 %70
  %72 = vset.pattern.permute.xlu0 0
  %73 = vperm.xlu0 %72, %v22
  %v74 = vpop.permute.xlu0 %73
  %75 = vset.pattern.permute.xlu0 0
  %76 = vperm.xlu0 %75, %v23
  %v77 = vpop.permute.xlu0 %76
  %78 = vset.pattern.permute.xlu0 0
  %79 = vperm.xlu0 %78, %v24
  %v80 = vpop.permute.xlu0 %79
  %81 = vset.pattern.permute.xlu0 0
  %82 = vperm.xlu0 %81, %v25
  %v83 = vpop.permute.xlu0 %82
  %84 = vset.pattern.permute.xlu0 0
  %85 = vperm.xlu0 %84, %v26
  %v86 = vpop.permute.xlu0 %85
  %87 = vset.pattern.permute.xlu0 0
  %88 = vperm.xlu0 %87, %v27
  %v89 = vpop.permute.xlu0 %88
  %90 = vset.pattern.permute.xlu0 0
  %91 = vperm.xlu0 %90, %v28
  %v92 = vpop.permute.xlu0 %91
  %93 = vset.pattern.permute.xlu0 0
  %94 = vperm.xlu0 %93, %v29
  %v95 = vpop.permute.xlu0 %94
  %96 = vset.pattern.permute.xlu0 0
  %97 = vperm.xlu0 %96, %v30
  %v98 = vpop.permute.xlu0 %97
  %99 = vset.pattern.permute.xlu0 0
  %100 = vperm.xlu0 %99, %v31
  %v101 = vpop.permute.xlu0 %100
  %102 = vset.pattern.permute.xlu0 0
  %103 = vperm.xlu0 %102, %v32
  %v104 = vpop.permute.xlu0 %103
  %105 = vset.pattern.permute.xlu0 0
  %106 = vperm.xlu0 %105, %v33
  %v107 = vpop.permute.xlu0 %106
  %108 = vset.pattern.permute.xlu0 0
  %109 = vperm.xlu0 %108, %v34
  %v110 = vpop.permute.xlu0 %109
  %111 = vset.pattern.permute.xlu0 0
  %112 = vperm.xlu0 %111, %v35
  %v113 = vpop.permute.xlu0 %112
  %114 = vset.pattern.permute.xlu0 0
  %115 = vperm.xlu0 %114, %v36
  %v116 = vpop.permute.xlu0 %115
  %117 = vset.pattern.permute.xlu0 0
  %118 = vperm.xlu0 %117, %v37
  %v119 = vpop.permute.xlu0 %118
  %120 = vset.pattern.permute.xlu0 0
  %121 = vperm.xlu0 %120, %v38
  %v122 = vpop.permute.xlu0 %121
  %123 = vset.pattern.permute.xlu0 0
  %124 = vperm.xlu0 %123, %v39
  %v125 = vpop.permute.xlu0 %124
  %126 = vset.pattern.permute.xlu0 0
  %127 = vperm.xlu0 %126, %v40
  %v128 = vpop.permute.xlu0 %127
  %129 = vset.pattern.permute.xlu0 0
  %130 = vperm.xlu0 %129, %v41
  %v131 = vpop.permute.xlu0 %130
  %132 = vset.pattern.permute.xlu0 0
  %133 = vperm.xlu0 %132, %v42
  %v134 = vpop.permute.xlu0 %133
  %135 = vset.pattern.permute.xlu0 0
  %136 = vperm.xlu0 %135, %v43
  %v137 = vpop.permute.xlu0 %136
  %138 = vset.pattern.permute.xlu0 0
  %139 = vperm.xlu0 %138, %v44
  %v140 = vpop.permute.xlu0 %139
  %vm141 = vcmp.eq.s32.totalorder %v12, %v47
  %vm142 = vcmp.eq.s32.totalorder %v12, %v50
  %vm143 = vcmp.eq.s32.totalorder %v12, %v53
  %vm144 = vcmp.eq.s32.totalorder %v12, %v56
  %vm145 = vcmp.eq.s32.totalorder %v12, %v59
  %vm146 = vcmp.eq.s32.totalorder %v12, %v62
  %vm147 = vcmp.eq.s32.totalorder %v12, %v65
  %vm148 = vcmp.eq.s32.totalorder %v12, %v68
  %vm149 = vcmp.eq.s32.totalorder %v12, %v71
  %vm150 = vcmp.eq.s32.totalorder %v12, %v74
  %vm151 = vcmp.eq.s32.totalorder %v12, %v77
  %vm152 = vcmp.eq.s32.totalorder %v12, %v80
  %vm153 = vcmp.eq.s32.totalorder %v12, %v83
  %vm154 = vcmp.eq.s32.totalorder %v12, %v86
  %vm155 = vcmp.eq.s32.totalorder %v12, %v89
  %vm156 = vcmp.eq.s32.totalorder %v12, %v92
  %vm157 = vcmp.eq.s32.totalorder %v12, %v95
  %vm158 = vcmp.eq.s32.totalorder %v12, %v98
  %vm159 = vcmp.eq.s32.totalorder %v12, %v101
  %vm160 = vcmp.eq.s32.totalorder %v12, %v104
  %vm161 = vcmp.eq.s32.totalorder %v12, %v107
  %vm162 = vcmp.eq.s32.totalorder %v12, %v110
  %vm163 = vcmp.eq.s32.totalorder %v12, %v113
  %vm164 = vcmp.eq.s32.totalorder %v12, %v116
  %vm165 = vcmp.eq.s32.totalorder %v12, %v119
  %vm166 = vcmp.eq.s32.totalorder %v12, %v122
  %vm167 = vcmp.eq.s32.totalorder %v12, %v125
  %vm168 = vcmp.eq.s32.totalorder %v12, %v128
  %vm169 = vcmp.eq.s32.totalorder %v12, %v131
  %vm170 = vcmp.eq.s32.totalorder %v12, %v134
  %vm171 = vcmp.eq.s32.totalorder %v12, %v137
  %vm172 = vcmp.eq.s32.totalorder %v12, %v140
  %v173 = vsel %vm141, 1, 0
  %v174 = vsel %vm142, 1, 0
  %v175 = vsel %vm143, 1, 0
  %v176 = vsel %vm144, 1, 0
  %v177 = vsel %vm145, 1, 0
  %v178 = vsel %vm146, 1, 0
  %v179 = vsel %vm147, 1, 0
  %v180 = vsel %vm148, 1, 0
  %v181 = vsel %vm149, 1, 0
  %v182 = vsel %vm150, 1, 0
  %v183 = vsel %vm151, 1, 0
  %v184 = vsel %vm152, 1, 0
  %v185 = vsel %vm153, 1, 0
  %v186 = vsel %vm154, 1, 0
  %v187 = vsel %vm155, 1, 0
  %v188 = vsel %vm156, 1, 0
  %v189 = vsel %vm157, 1, 0
  %v190 = vsel %vm158, 1, 0
  %v191 = vsel %vm159, 1, 0
  %v192 = vsel %vm160, 1, 0
  %v193 = vsel %vm161, 1, 0
  %v194 = vsel %vm162, 1, 0
  %v195 = vsel %vm163, 1, 0
  %v196 = vsel %vm164, 1, 0
  %v197 = vsel %vm165, 1, 0
  %v198 = vsel %vm166, 1, 0
  %v199 = vsel %vm167, 1, 0
  %v200 = vsel %vm168, 1, 0
  %v201 = vsel %vm169, 1, 0
  %v202 = vsel %vm170, 1, 0
  %v203 = vsel %vm171, 1, 0
  %v204 = vsel %vm172, 1, 0
  %v205 = vcvt.s32.f32 %v173
  %v206 = vcvt.s32.f32 %v174
  %v207 = vcvt.s32.f32 %v175
  %v208 = vcvt.s32.f32 %v176
  %v209 = vcvt.s32.f32 %v177
  %v210 = vcvt.s32.f32 %v178
  %v211 = vcvt.s32.f32 %v179
  %v212 = vcvt.s32.f32 %v180
  %v213 = vcvt.s32.f32 %v181
  %v214 = vcvt.s32.f32 %v182
  %v215 = vcvt.s32.f32 %v183
  %v216 = vcvt.s32.f32 %v184
  %v217 = vcvt.s32.f32 %v185
  %v218 = vcvt.s32.f32 %v186
  %v219 = vcvt.s32.f32 %v187
  %v220 = vcvt.s32.f32 %v188
  %v221 = vcvt.s32.f32 %v189
  %v222 = vcvt.s32.f32 %v190
  %v223 = vcvt.s32.f32 %v191
  %v224 = vcvt.s32.f32 %v192
  %v225 = vcvt.s32.f32 %v193
  %v226 = vcvt.s32.f32 %v194
  %v227 = vcvt.s32.f32 %v195
  %v228 = vcvt.s32.f32 %v196
  %v229 = vcvt.s32.f32 %v197
  %v230 = vcvt.s32.f32 %v198
  %v231 = vcvt.s32.f32 %v199
  %v232 = vcvt.s32.f32 %v200
  %v233 = vcvt.s32.f32 %v201
  %v234 = vcvt.s32.f32 %v202
  %v235 = vcvt.s32.f32 %v203
  %v236 = vcvt.s32.f32 %v204
  %v237 = vld [vmem:[%s1] sm:$0xff]
  %v238 = vld [vmem:[%s1 + $0x8] sm:$0xff]
  %v239 = vld [vmem:[%s1 + $0x10] sm:$0xff]
  %v240 = vld [vmem:[%s1 + $0x18] sm:$0xff]
  %v241 = vld [vmem:[%s1 + $0x20] sm:$0xff]
  %v242 = vld [vmem:[%s1 + $0x28] sm:$0xff]
  %v243 = vld [vmem:[%s1 + $0x30] sm:$0xff]
  %v244 = vld [vmem:[%s1 + $0x38] sm:$0xff]
  %v245 = vld [vmem:[%s1 + $0x40] sm:$0xff]
  %v246 = vld [vmem:[%s1 + $0x48] sm:$0xff]
  %v247 = vld [vmem:[%s1 + $0x50] sm:$0xff]
  %v248 = vld [vmem:[%s1 + $0x58] sm:$0xff]
  %v249 = vld [vmem:[%s1 + $0x60] sm:$0xff]
  %v250 = vld [vmem:[%s1 + $0x68] sm:$0xff]
  %v251 = vld [vmem:[%s1 + $0x70] sm:$0xff]
  %v252 = vld [vmem:[%s1 + $0x78] sm:$0xff]
  %253 = vmatprep.subr.mxu0 0.0
  %254 = vmatpush1.msra.mxu0 %v252
  %255 = vmatprep.subr.mxu0 0.0
  %256 = vmatpush1.msra.mxu0 %v251
  %257 = vmatprep.subr.mxu0 0.0
  %258 = vmatpush1.msra.mxu0 %v250
  %259 = vmatprep.subr.mxu0 0.0
  %260 = vmatpush1.msra.mxu0 %v249
  %261 = vmatprep.subr.mxu0 0.0
  %262 = vmatpush1.msra.mxu0 %v248
  %263 = vmatprep.subr.mxu0 0.0
  %264 = vmatpush1.msra.mxu0 %v247
  %265 = vmatprep.subr.mxu0 0.0
  %266 = vmatpush1.msra.mxu0 %v246
  %267 = vmatprep.subr.mxu0 0.0
  %268 = vmatpush1.msra.mxu0 %v245
  %269 = vmatprep.subr.mxu0 0.0
  %270 = vmatpush1.msra.mxu0 %v244
  %271 = vmatprep.subr.mxu0 0.0
  %272 = vmatpush1.msra.mxu0 %v243
  %273 = vmatprep.subr.mxu0 0.0
  %274 = vmatpush1.msra.mxu0 %v242
  %275 = vmatprep.subr.mxu0 0.0
  %276 = vmatpush1.msra.mxu0 %v241
  %277 = vmatprep.subr.mxu0 0.0
  %278 = vmatpush1.msra.mxu0 %v240
  %279 = vmatprep.subr.mxu0 0.0
  %280 = vmatpush1.msra.mxu0 %v239
  %281 = vmatprep.subr.mxu0 0.0
  %282 = vmatpush1.msra.mxu0 %v238
  %283 = vmatprep.subr.mxu0 0.0
  %284 = vmatpush1.msra.mxu0 %v237
  %285 = vmatprep.subr.mxu0 0.0
  %286 = vmatpush2.msra.mxu0 0.0
  %287 = vmatprep.subr.mxu0 0.0
  %288 = vmatpush2.msra.mxu0 0.0
  %289 = vmatprep.subr.mxu0 0.0
  %290 = vmatpush2.msra.mxu0 0.0
  %291 = vmatprep.subr.mxu0 0.0
  %292 = vmatpush2.msra.mxu0 0.0
  %293 = vmatprep.subr.mxu0 0.0
  %294 = vmatpush2.msra.mxu0 0.0
  %295 = vmatprep.subr.mxu0 0.0
  %296 = vmatpush2.msra.mxu0 0.0
  %297 = vmatprep.subr.mxu0 0.0
  %298 = vmatpush2.msra.mxu0 0.0
  %299 = vmatprep.subr.mxu0 0.0
  %300 = vmatpush2.msra.mxu0 0.0
  %301 = vmatprep.subr.mxu0 0.0
  %302 = vmatpush2.msra.mxu0 0.0
  %303 = vmatprep.subr.mxu0 0.0
  %304 = vmatpush2.msra.mxu0 0.0
  %305 = vmatprep.subr.mxu0 0.0
  %306 = vmatpush2.msra.mxu0 0.0
  %307 = vmatprep.subr.mxu0 0.0
  %308 = vmatpush2.msra.mxu0 0.0
  %309 = vmatprep.subr.mxu0 0.0
  %310 = vmatpush2.msra.mxu0 0.0
  %311 = vmatprep.subr.mxu0 0.0
  %312 = vmatpush2.msra.mxu0 0.0
  %313 = vmatprep.subr.mxu0 0.0
  %314 = vmatpush2.msra.mxu0 0.0
  %315 = vmatprep.subr.mxu0 0.0
  %316 = vmatpush2.msra.mxu0 0.0
  %317 = vmatprep.mubr.f32.mxu0 0.0
  %318 = vmatmul.mubr.f32.gmra.mxu0 %v205
  %v319 = vpop.f32.mrf.mxu0
  %v320 = vadd.f32 0.0, %v319
  %v321 = vpop.f32.mrf.mxu0
  %322 = vmatprep.mubr.f32.mxu0 0.0
  %323 = vmatmul.mubr.f32.gmra.mxu0 %v206
  %v324 = vpop.f32.mrf.mxu0
  %v325 = vadd.f32 0.0, %v324
  %v326 = vpop.f32.mrf.mxu0
  %327 = vmatprep.mubr.f32.mxu0 0.0
  %328 = vmatmul.mubr.f32.gmra.mxu0 %v207
  %v329 = vpop.f32.mrf.mxu0
  %v330 = vadd.f32 0.0, %v329
  %v331 = vpop.f32.mrf.mxu0
  %332 = vmatprep.mubr.f32.mxu0 0.0
  %333 = vmatmul.mubr.f32.gmra.mxu0 %v208
  %v334 = vpop.f32.mrf.mxu0
  %v335 = vadd.f32 0.0, %v334
  %v336 = vpop.f32.mrf.mxu0
  %337 = vmatprep.mubr.f32.mxu0 0.0
  %338 = vmatmul.mubr.f32.gmra.mxu0 %v209
  %v339 = vpop.f32.mrf.mxu0
  %v340 = vadd.f32 0.0, %v339
  %v341 = vpop.f32.mrf.mxu0
  %342 = vmatprep.mubr.f32.mxu0 0.0
  %343 = vmatmul.mubr.f32.gmra.mxu0 %v210
  %v344 = vpop.f32.mrf.mxu0
  %v345 = vadd.f32 0.0, %v344
  %v346 = vpop.f32.mrf.mxu0
  %347 = vmatprep.mubr.f32.mxu0 0.0
  %348 = vmatmul.mubr.f32.gmra.mxu0 %v211
  %v349 = vpop.f32.mrf.mxu0
  %v350 = vadd.f32 0.0, %v349
  %v351 = vpop.f32.mrf.mxu0
  %352 = vmatprep.mubr.f32.mxu0 0.0
  %353 = vmatmul.mubr.f32.gmra.mxu0 %v212
  %v354 = vpop.f32.mrf.mxu0
  %v355 = vadd.f32 0.0, %v354
  %v356 = vpop.f32.mrf.mxu0
  %357 = vmatprep.mubr.f32.mxu0 0.0
  %358 = vmatmul.mubr.f32.gmra.mxu0 %v213
  %v359 = vpop.f32.mrf.mxu0
  %v360 = vadd.f32 0.0, %v359
  %v361 = vpop.f32.mrf.mxu0
  %362 = vmatprep.mubr.f32.mxu0 0.0
  %363 = vmatmul.mubr.f32.gmra.mxu0 %v214
  %v364 = vpop.f32.mrf.mxu0
  %v365 = vadd.f32 0.0, %v364
  %v366 = vpop.f32.mrf.mxu0
  %367 = vmatprep.mubr.f32.mxu0 0.0
  %368 = vmatmul.mubr.f32.gmra.mxu0 %v215
  %v369 = vpop.f32.mrf.mxu0
  %v370 = vadd.f32 0.0, %v369
  %v371 = vpop.f32.mrf.mxu0
  %372 = vmatprep.mubr.f32.mxu0 0.0
  %373 = vmatmul.mubr.f32.gmra.mxu0 %v216
  %v374 = vpop.f32.mrf.mxu0
  %v375 = vadd.f32 0.0, %v374
  %v376 = vpop.f32.mrf.mxu0
  %377 = vmatprep.mubr.f32.mxu0 0.0
  %378 = vmatmul.mubr.f32.gmra.mxu0 %v217
  %v379 = vpop.f32.mrf.mxu0
  %v380 = vadd.f32 0.0, %v379
  %v381 = vpop.f32.mrf.mxu0
  %382 = vmatprep.mubr.f32.mxu0 0.0
  %383 = vmatmul.mubr.f32.gmra.mxu0 %v218
  %v384 = vpop.f32.mrf.mxu0
  %v385 = vadd.f32 0.0, %v384
  %v386 = vpop.f32.mrf.mxu0
  %387 = vmatprep.mubr.f32.mxu0 0.0
  %388 = vmatmul.mubr.f32.gmra.mxu0 %v219
  %v389 = vpop.f32.mrf.mxu0
  %v390 = vadd.f32 0.0, %v389
  %v391 = vpop.f32.mrf.mxu0
  %392 = vmatprep.mubr.f32.mxu0 0.0
  %393 = vmatmul.mubr.f32.gmra.mxu0 %v220
  %v394 = vpop.f32.mrf.mxu0
  %v395 = vadd.f32 0.0, %v394
  %v396 = vpop.f32.mrf.mxu0
  %397 = vmatprep.mubr.f32.mxu0 0.0
  %398 = vmatmul.mubr.f32.gmra.mxu0 %v221
  %v399 = vpop.f32.mrf.mxu0
  %v400 = vadd.f32 0.0, %v399
  %v401 = vpop.f32.mrf.mxu0
  %402 = vmatprep.mubr.f32.mxu0 0.0
  %403 = vmatmul.mubr.f32.gmra.mxu0 %v222
  %v404 = vpop.f32.mrf.mxu0
  %v405 = vadd.f32 0.0, %v404
  %v406 = vpop.f32.mrf.mxu0
  %407 = vmatprep.mubr.f32.mxu0 0.0
  %408 = vmatmul.mubr.f32.gmra.mxu0 %v223
  %v409 = vpop.f32.mrf.mxu0
  %v410 = vadd.f32 0.0, %v409
  %v411 = vpop.f32.mrf.mxu0
  %412 = vmatprep.mubr.f32.mxu0 0.0
  %413 = vmatmul.mubr.f32.gmra.mxu0 %v224
  %v414 = vpop.f32.mrf.mxu0
  %v415 = vadd.f32 0.0, %v414
  %v416 = vpop.f32.mrf.mxu0
  %417 = vmatprep.mubr.f32.mxu0 0.0
  %418 = vmatmul.mubr.f32.gmra.mxu0 %v225
  %v419 = vpop.f32.mrf.mxu0
  %v420 = vadd.f32 0.0, %v419
  %v421 = vpop.f32.mrf.mxu0
  %422 = vmatprep.mubr.f32.mxu0 0.0
  %423 = vmatmul.mubr.f32.gmra.mxu0 %v226
  %v424 = vpop.f32.mrf.mxu0
  %v425 = vadd.f32 0.0, %v424
  %v426 = vpop.f32.mrf.mxu0
  %427 = vmatprep.mubr.f32.mxu0 0.0
  %428 = vmatmul.mubr.f32.gmra.mxu0 %v227
  %v429 = vpop.f32.mrf.mxu0
  %v430 = vadd.f32 0.0, %v429
  %v431 = vpop.f32.mrf.mxu0
  %432 = vmatprep.mubr.f32.mxu0 0.0
  %433 = vmatmul.mubr.f32.gmra.mxu0 %v228
  %v434 = vpop.f32.mrf.mxu0
  %v435 = vadd.f32 0.0, %v434
  %v436 = vpop.f32.mrf.mxu0
  %437 = vmatprep.mubr.f32.mxu0 0.0
  %438 = vmatmul.mubr.f32.gmra.mxu0 %v229
  %v439 = vpop.f32.mrf.mxu0
  %v440 = vadd.f32 0.0, %v439
  %v441 = vpop.f32.mrf.mxu0
  %442 = vmatprep.mubr.f32.mxu0 0.0
  %443 = vmatmul.mubr.f32.gmra.mxu0 %v230
  %v444 = vpop.f32.mrf.mxu0
  %v445 = vadd.f32 0.0, %v444
  %v446 = vpop.f32.mrf.mxu0
  %447 = vmatprep.mubr.f32.mxu0 0.0
  %448 = vmatmul.mubr.f32.gmra.mxu0 %v231
  %v449 = vpop.f32.mrf.mxu0
  %v450 = vadd.f32 0.0, %v449
  %v451 = vpop.f32.mrf.mxu0
  %452 = vmatprep.mubr.f32.mxu0 0.0
  %453 = vmatmul.mubr.f32.gmra.mxu0 %v232
  %v454 = vpop.f32.mrf.mxu0
  %v455 = vadd.f32 0.0, %v454
  %v456 = vpop.f32.mrf.mxu0
  %457 = vmatprep.mubr.f32.mxu0 0.0
  %458 = vmatmul.mubr.f32.gmra.mxu0 %v233
  %v459 = vpop.f32.mrf.mxu0
  %v460 = vadd.f32 0.0, %v459
  %v461 = vpop.f32.mrf.mxu0
  %462 = vmatprep.mubr.f32.mxu0 0.0
  %463 = vmatmul.mubr.f32.gmra.mxu0 %v234
  %v464 = vpop.f32.mrf.mxu0
  %v465 = vadd.f32 0.0, %v464
  %v466 = vpop.f32.mrf.mxu0
  %467 = vmatprep.mubr.f32.mxu0 0.0
  %468 = vmatmul.mubr.f32.gmra.mxu0 %v235
  %v469 = vpop.f32.mrf.mxu0
  %v470 = vadd.f32 0.0, %v469
  %v471 = vpop.f32.mrf.mxu0
  %472 = vmatprep.mubr.f32.mxu0 0.0
  %473 = vmatmul.mubr.f32.gmra.mxu0 %v236
  %v474 = vpop.f32.mrf.mxu0
  %v475 = vadd.f32 0.0, %v474
  %v476 = vpop.f32.mrf.mxu0
  %477 = vdwg.mxu0
  %vm478 = vcmask 523264
  %479 = vst.msk [vmem:[%s2] sm:$0xff] %vm478, %v320
  %480 = vst.msk [vmem:[%s2 + $0x8] sm:$0xff] %vm478, %v325
  %481 = vst.msk [vmem:[%s2 + $0x10] sm:$0xff] %vm478, %v330
  %482 = vst.msk [vmem:[%s2 + $0x18] sm:$0xff] %vm478, %v335
  %483 = vst.msk [vmem:[%s2 + $0x20] sm:$0xff] %vm478, %v340
  %484 = vst.msk [vmem:[%s2 + $0x28] sm:$0xff] %vm478, %v345
  %485 = vst.msk [vmem:[%s2 + $0x30] sm:$0xff] %vm478, %v350
  %486 = vst.msk [vmem:[%s2 + $0x38] sm:$0xff] %vm478, %v355
  %487 = vst.msk [vmem:[%s2 + $0x40] sm:$0xff] %vm478, %v360
  %488 = vst.msk [vmem:[%s2 + $0x48] sm:$0xff] %vm478, %v365
  %489 = vst.msk [vmem:[%s2 + $0x50] sm:$0xff] %vm478, %v370
  %490 = vst.msk [vmem:[%s2 + $0x58] sm:$0xff] %vm478, %v375
  %491 = vst.msk [vmem:[%s2 + $0x60] sm:$0xff] %vm478, %v380
  %492 = vst.msk [vmem:[%s2 + $0x68] sm:$0xff] %vm478, %v385
  %493 = vst.msk [vmem:[%s2 + $0x70] sm:$0xff] %vm478, %v390
  %494 = vst.msk [vmem:[%s2 + $0x78] sm:$0xff] %vm478, %v395
  %495 = vst.msk [vmem:[%s2 + $0x80] sm:$0xff] %vm478, %v400
  %496 = vst.msk [vmem:[%s2 + $0x88] sm:$0xff] %vm478, %v405
  %497 = vst.msk [vmem:[%s2 + $0x90] sm:$0xff] %vm478, %v410
  %498 = vst.msk [vmem:[%s2 + $0x98] sm:$0xff] %vm478, %v415
  %499 = vst.msk [vmem:[%s2 + $0xa0] sm:$0xff] %vm478, %v420
  %500 = vst.msk [vmem:[%s2 + $0xa8] sm:$0xff] %vm478, %v425
  %501 = vst.msk [vmem:[%s2 + $0xb0] sm:$0xff] %vm478, %v430
  %502 = vst.msk [vmem:[%s2 + $0xb8] sm:$0xff] %vm478, %v435
  %503 = vst.msk [vmem:[%s2 + $0xc0] sm:$0xff] %vm478, %v440
  %504 = vst.msk [vmem:[%s2 + $0xc8] sm:$0xff] %vm478, %v445
  %505 = vst.msk [vmem:[%s2 + $0xd0] sm:$0xff] %vm478, %v450
  %506 = vst.msk [vmem:[%s2 + $0xd8] sm:$0xff] %vm478, %v455
  %507 = vst.msk [vmem:[%s2 + $0xe0] sm:$0xff] %vm478, %v460
  %508 = vst.msk [vmem:[%s2 + $0xe8] sm:$0xff] %vm478, %v465
  %509 = vst.msk [vmem:[%s2 + $0xf0] sm:$0xff] %vm478, %v470
  %510 = vst.msk [vmem:[%s2 + $0xf8] sm:$0xff] %vm478, %v475
  // Predicated region
  $region10: #{embedding_forward.5} parent=0 // pred_check
    _
  $region11: #{embedding_forward.5} parent=0 // pred_check_branch
    %512 = sbr.rel (0) target = $region13
  $region12: #{embedding_forward.5} parent=0 // pred_region
    _
  $region13: #{embedding_forward.5} parent=0 // pred_fallthru
    _
  // Predicated region
  $region14: #{embedding_forward.5} parent=0 // pred_check
    _
  $region15: #{embedding_forward.5} parent=0 // pred_check_branch
    %514 = sbr.rel (0) target = $region17
  $region16: #{embedding_forward.5} parent=0 // pred_region
    _
  $region17: #{embedding_forward.5} parent=0 // pred_fallthru
    _

// kernel: embedding_forward.4
$region0: #{embedding_forward.4}
  #allocation0 [shape = 'u32[]', space=smem, size = 0x4, offset = 0x4, fixed_abs, tag = 'smem constant byte address 0x4 - core index']
  #allocation1 [shape = 'u32[144,128]{1,0:T(1,128)}', space=vmem, size = 0x12000, scoped, tag = 'internal scratch']
  %s0 = inlined_call_operand.vmem [shape: s32[16,1], index: 0, kind: input, shape index: {}]
  %s1 = inlined_call_operand.vmem [shape: f32[128,128], index: 1, kind: input, shape index: {}]
  %s2 = inlined_call_operand.vmem [shape: f32[16,128], index: 2, kind: output, shape index: {}]
  %s3 = sld [smem:[#allocation0]]
  $region18: #{embedding_forward.4} parent=0
    _
  %s5 = ssub.s32 1, %s3
  %s6 = scalar_select 0, %s5, %s3
  // Predicated region
  $region2: #{embedding_forward.4} parent=0 // pred_check
    _
  $region3: #{embedding_forward.4} parent=0 // pred_check_branch
    %8 = sbr.rel (0) target = $region5
  $region4: #{embedding_forward.4} parent=0 // pred_region
    _
  $region5: #{embedding_forward.4} parent=0 // pred_fallthru
    _
  // Predicated region
  $region6: #{embedding_forward.4} parent=0 // pred_check
    _
  $region7: #{embedding_forward.4} parent=0 // pred_check_branch
    %10 = sbr.rel (0) target = $region9
  $region8: #{embedding_forward.4} parent=0 // pred_region
    _
  $region9: #{embedding_forward.4} parent=0 // pred_fallthru
    _
  %v11 = vlaneseq
  %v12 = vand.u32 %v11, 127
  %v13 = vld [vmem:[%s0] sm:$0xff]
  %v14 = vld [vmem:[%s0 + $0x8] sm:$0xff]
  %15 = vset.pattern.permute.xlu0 0
  %16 = vperm.xlu0 %15, %v13
  %v17 = vpop.permute.xlu0 %16
  %18 = vset.pattern.permute.xlu0 0
  %19 = vperm.xlu0 %18, %v14
  %v20 = vpop.permute.xlu0 %19
  %vm21 = vcmp.eq.s32.totalorder %v12, %v17
  %vm22 = vcmp.eq.s32.totalorder %v12, %v20
  %v23 = vsel %vm21, 1, 0
  %v24 = vsel %vm22, 1, 0
  %v25 = vcvt.s32.f32 %v23
  %v26 = vcvt.s32.f32 %v24
  %v27 = vld [vmem:[%s1] sm:$0xff]
  %v28 = vld [vmem:[%s1 + $0x8] sm:$0xff]
  %v29 = vld [vmem:[%s1 + $0x10] sm:$0xff]
  %v30 = vld [vmem:[%s1 + $0x18] sm:$0xff]
  %v31 = vld [vmem:[%s1 + $0x20] sm:$0xff]
  %v32 = vld [vmem:[%s1 + $0x28] sm:$0xff]
  %v33 = vld [vmem:[%s1 + $0x30] sm:$0xff]
  %v34 = vld [vmem:[%s1 + $0x38] sm:$0xff]
  %v35 = vld [vmem:[%s1 + $0x40] sm:$0xff]
  %v36 = vld [vmem:[%s1 + $0x48] sm:$0xff]
  %v37 = vld [vmem:[%s1 + $0x50] sm:$0xff]
  %v38 = vld [vmem:[%s1 + $0x58] sm:$0xff]
  %v39 = vld [vmem:[%s1 + $0x60] sm:$0xff]
  %v40 = vld [vmem:[%s1 + $0x68] sm:$0xff]
  %v41 = vld [vmem:[%s1 + $0x70] sm:$0xff]
  %v42 = vld [vmem:[%s1 + $0x78] sm:$0xff]
  %43 = vmatprep.subr.mxu0 0.0
  %44 = vmatpush1.msra.mxu0 %v42
  %45 = vmatprep.subr.mxu0 0.0
  %46 = vmatpush1.msra.mxu0 %v41
  %47 = vmatprep.subr.mxu0 0.0
  %48 = vmatpush1.msra.mxu0 %v40
  %49 = vmatprep.subr.mxu0 0.0
  %50 = vmatpush1.msra.mxu0 %v39
  %51 = vmatprep.subr.mxu0 0.0
  %52 = vmatpush1.msra.mxu0 %v38
  %53 = vmatprep.subr.mxu0 0.0
  %54 = vmatpush1.msra.mxu0 %v37
  %55 = vmatprep.subr.mxu0 0.0
  %56 = vmatpush1.msra.mxu0 %v36
  %57 = vmatprep.subr.mxu0 0.0
  %58 = vmatpush1.msra.mxu0 %v35
  %59 = vmatprep.subr.mxu0 0.0
  %60 = vmatpush1.msra.mxu0 %v34
  %61 = vmatprep.subr.mxu0 0.0
  %62 = vmatpush1.msra.mxu0 %v33
  %63 = vmatprep.subr.mxu0 0.0
  %64 = vmatpush1.msra.mxu0 %v32
  %65 = vmatprep.subr.mxu0 0.0
  %66 = vmatpush1.msra.mxu0 %v31
  %67 = vmatprep.subr.mxu0 0.0
  %68 = vmatpush1.msra.mxu0 %v30
  %69 = vmatprep.subr.mxu0 0.0
  %70 = vmatpush1.msra.mxu0 %v29
  %71 = vmatprep.subr.mxu0 0.0
  %72 = vmatpush1.msra.mxu0 %v28
  %73 = vmatprep.subr.mxu0 0.0
  %74 = vmatpush1.msra.mxu0 %v27
  %75 = vmatprep.subr.mxu0 0.0
  %76 = vmatpush2.msra.mxu0 0.0
  %77 = vmatprep.subr.mxu0 0.0
  %78 = vmatpush2.msra.mxu0 0.0
  %79 = vmatprep.subr.mxu0 0.0
  %80 = vmatpush2.msra.mxu0 0.0
  %81 = vmatprep.subr.mxu0 0.0
  %82 = vmatpush2.msra.mxu0 0.0
  %83 = vmatprep.subr.mxu0 0.0
  %84 = vmatpush2.msra.mxu0 0.0
  %85 = vmatprep.subr.mxu0 0.0
  %86 = vmatpush2.msra.mxu0 0.0
  %87 = vmatprep.subr.mxu0 0.0
  %88 = vmatpush2.msra.mxu0 0.0
  %89 = vmatprep.subr.mxu0 0.0
  %90 = vmatpush2.msra.mxu0 0.0
  %91 = vmatprep.subr.mxu0 0.0
  %92 = vmatpush2.msra.mxu0 0.0
  %93 = vmatprep.subr.mxu0 0.0
  %94 = vmatpush2.msra.mxu0 0.0
  %95 = vmatprep.subr.mxu0 0.0
  %96 = vmatpush2.msra.mxu0 0.0
  %97 = vmatprep.subr.mxu0 0.0
  %98 = vmatpush2.msra.mxu0 0.0
  %99 = vmatprep.subr.mxu0 0.0
  %100 = vmatpush2.msra.mxu0 0.0
  %101 = vmatprep.subr.mxu0 0.0
  %102 = vmatpush2.msra.mxu0 0.0
  %103 = vmatprep.subr.mxu0 0.0
  %104 = vmatpush2.msra.mxu0 0.0
  %105 = vmatprep.subr.mxu0 0.0
  %106 = vmatpush2.msra.mxu0 0.0
  %107 = vmatprep.mubr.f32.mxu0 0.0
  %108 = vmatmul.mubr.f32.gmra.mxu0 %v25
  %v109 = vpop.f32.mrf.mxu0
  %v110 = vadd.f32 0.0, %v109
  %v111 = vpop.f32.mrf.mxu0
  %112 = vmatprep.mubr.f32.mxu0 0.0
  %113 = vmatmul.mubr.f32.gmra.mxu0 %v26
  %v114 = vpop.f32.mrf.mxu0
  %v115 = vadd.f32 0.0, %v114
  %v116 = vpop.f32.mrf.mxu0
  %117 = vdwg.mxu0
  %118 = vst [vmem:[%s2] sm:$0xff] %v110
  %119 = vst [vmem:[%s2 + $0x8] sm:$0xff] %v115
  // Predicated region
  $region10: #{embedding_forward.4} parent=0 // pred_check
    _
  $region11: #{embedding_forward.4} parent=0 // pred_check_branch
    %121 = sbr.rel (0) target = $region13
  $region12: #{embedding_forward.4} parent=0 // pred_region
    _
  $region13: #{embedding_forward.4} parent=0 // pred_fallthru
    _
  // Predicated region
  $region14: #{embedding_forward.4} parent=0 // pred_check
    _
  $region15: #{embedding_forward.4} parent=0 // pred_check_branch
    %123 = sbr.rel (0) target = $region17
  $region16: #{embedding_forward.4} parent=0 // pred_region
    _
  $region17: #{embedding_forward.4} parent=0 // pred_fallthru
    _

// kernel: embedding_forward.6
$region0: #{embedding_forward.6}
  #allocation0 [shape = 'u32[]', space=smem, size = 0x4, offset = 0x4, fixed_abs, tag = 'smem constant byte address 0x4 - core index']
  #allocation1 [shape = 'u32[144,128]{1,0:T(1,128)}', space=vmem, size = 0x12000, scoped, tag = 'internal scratch']
  %s0 = inlined_call_operand.vmem [shape: f32[16,1024], index: 0, kind: input, shape index: {}]
  %s1 = inlined_call_operand.vmem [shape: bf16[64,256], index: 1, kind: input, shape index: {}]
  %s2 = inlined_call_operand.vmem [shape: f32[1,256], index: 2, kind: input, shape index: {}]
  %s3 = inlined_call_operand.vmem [shape: f32[16,256], index: 3, kind: output, shape index: {}]
  %s4 = sld [smem:[#allocation0]]
  $region22: #{embedding_forward.6} parent=0
    _
  %s6 = ssub.s32 1, %s4
  %s7 = scalar_select 0, %s6, %s4
  // Predicated region
  $region2: #{embedding_forward.6} parent=0 // pred_check
    _
  $region3: #{embedding_forward.6} parent=0 // pred_check_branch
    %9 = sbr.rel (0) target = $region5
  $region4: #{embedding_forward.6} parent=0 // pred_region
    _
  $region5: #{embedding_forward.6} parent=0 // pred_fallthru
    _
  // Predicated region
  $region6: #{embedding_forward.6} parent=0 // pred_check
    _
  $region7: #{embedding_forward.6} parent=0 // pred_check_branch
    %11 = sbr.rel (0) target = $region9
  $region8: #{embedding_forward.6} parent=0 // pred_region
    _
  $region9: #{embedding_forward.6} parent=0 // pred_fallthru
    _
  // Predicated region
  $region10: #{embedding_forward.6} parent=0 // pred_check
    _
  $region11: #{embedding_forward.6} parent=0 // pred_check_branch
    %13 = sbr.rel (0) target = $region13
  $region12: #{embedding_forward.6} parent=0 // pred_region
    _
  $region13: #{embedding_forward.6} parent=0 // pred_fallthru
    _
  %v15 = vld [vmem:[%s1] sm:$0xff]
  %v16 = vld [vmem:[%s1 + $0x8] sm:$0xff]
  %v17 = vld [vmem:[%s1 + $0x10] sm:$0xff]
  %v18 = vld [vmem:[%s1 + $0x18] sm:$0xff]
  %v19 = vld [vmem:[%s1 + $0x20] sm:$0xff]
  %v20 = vld [vmem:[%s1 + $0x28] sm:$0xff]
  %v21 = vld [vmem:[%s1 + $0x30] sm:$0xff]
  %v22 = vld [vmem:[%s1 + $0x38] sm:$0xff]
  %v23 = vld [vmem:[%s0] sm:$0xff]
  %v24 = vld [vmem:[%s0 + $0x40] sm:$0xff]
  %v25 = vpack.c.bf16 %v24, %v23
  %v34 = vunpack.c.l.b16 %v15
  %v35 = vunpack.c.h.b16 %v15
  %v36 = vunpack.c.l.b16 %v16
  %v37 = vunpack.c.h.b16 %v16
  %v38 = vunpack.c.l.b16 %v17
  %v39 = vunpack.c.h.b16 %v17
  %v40 = vunpack.c.l.b16 %v18
  %v41 = vunpack.c.h.b16 %v18
  %v42 = vunpack.c.l.b16 %v19
  %v43 = vunpack.c.h.b16 %v19
  %v44 = vunpack.c.l.b16 %v20
  %v45 = vunpack.c.h.b16 %v20
  %v46 = vunpack.c.l.b16 %v21
  %v47 = vunpack.c.h.b16 %v21
  %v48 = vunpack.c.l.b16 %v22
  %v49 = vunpack.c.h.b16 %v22
  %v50 = vpack.c.b16 %v36, %v34
  %v51 = vpack.c.b16 %v37, %v35
  %v52 = vpack.c.b16 %v40, %v38
  %v53 = vpack.c.b16 %v41, %v39
  %v54 = vpack.c.b16 %v44, %v42
  %v55 = vpack.c.b16 %v45, %v43
  %v56 = vpack.c.b16 %v48, %v46
  %v57 = vpack.c.b16 %v49, %v47
  %vm66 = vcmask 523264
  %v68 = vsel %vm66, %v25, 0
  %70 = vmatprep.subr.bf16.mxu0 0
  %71 = vmatpush1.bf16.msra.mxu0 0
  %72 = vmatprep.subr.bf16.mxu0 0
  %73 = vmatpush1.bf16.msra.mxu0 0
  %74 = vmatprep.subr.bf16.mxu0 0
  %75 = vmatpush1.bf16.msra.mxu0 0
  %76 = vmatprep.subr.bf16.mxu0 0
  %77 = vmatpush1.bf16.msra.mxu0 0
  %78 = vmatprep.subr.bf16.mxu0 %v57
  %79 = vmatpush1.bf16.msra.mxu0 %v56
  %80 = vmatprep.subr.bf16.mxu0 %v55
  %81 = vmatpush1.bf16.msra.mxu0 %v54
  %82 = vmatprep.subr.bf16.mxu0 %v53
  %83 = vmatpush1.bf16.msra.mxu0 %v52
  %84 = vmatprep.subr.bf16.mxu0 %v51
  %85 = vmatpush1.bf16.msra.mxu0 %v50
  %86 = vmatprep.subr.bf16.mxu0 0
  %87 = vmatpush2.bf16.msra.mxu0 0
  %88 = vmatprep.subr.bf16.mxu0 0
  %89 = vmatpush2.bf16.msra.mxu0 0
  %90 = vmatprep.subr.bf16.mxu0 0
  %91 = vmatpush2.bf16.msra.mxu0 0
  %92 = vmatprep.subr.bf16.mxu0 0
  %93 = vmatpush2.bf16.msra.mxu0 0
  %94 = vmatprep.subr.bf16.mxu0 0
  %95 = vmatpush2.bf16.msra.mxu0 0
  %96 = vmatprep.subr.bf16.mxu0 0
  %97 = vmatpush2.bf16.msra.mxu0 0
  %98 = vmatprep.subr.bf16.mxu0 0
  %99 = vmatpush2.bf16.msra.mxu0 0
  %100 = vmatprep.subr.bf16.mxu0 0
  %101 = vmatpush2.bf16.msra.mxu0 0
  %102 = vmatprep.mubr.bf16.mxu0 0
  %103 = vmatmul.mubr.bf16.gmra.mxu0 %v68
  %v104 = vpop.f32.mrf.mxu0
  %v105 = vadd.f32 0.0, %v104
  %v106 = vpop.f32.mrf.mxu0
  %v107 = vadd.f32 0.0, %v106
  %v108 = vpop.f32.mrf.mxu0
  %v109 = vadd.f32 0.0, %v108
  %v110 = vpop.f32.mrf.mxu0
  %v111 = vadd.f32 0.0, %v110
  %112 = vdwg.mxu0
  %114 = vrot.lane.b32.xlu0 %v25, 64
  %v115 = vpop.permute.xlu0 %114
  %v117 = vsel %vm66, %v115, 0
  %119 = vmatprep.subr.bf16.mxu0 0
  %120 = vmatpush1.bf16.msra.mxu0 0
  %121 = vmatprep.subr.bf16.mxu0 0
  %122 = vmatpush1.bf16.msra.mxu0 0
  %123 = vmatprep.subr.bf16.mxu0 0
  %124 = vmatpush1.bf16.msra.mxu0 0
  %125 = vmatprep.subr.bf16.mxu0 0
  %126 = vmatpush1.bf16.msra.mxu0 0
  %127 = vmatprep.subr.bf16.mxu0 %v57
  %128 = vmatpush1.bf16.msra.mxu0 %v56
  %129 = vmatprep.subr.bf16.mxu0 %v55
  %130 = vmatpush1.bf16.msra.mxu0 %v54
  %131 = vmatprep.subr.bf16.mxu0 %v53
  %132 = vmatpush1.bf16.msra.mxu0 %v52
  %133 = vmatprep.subr.bf16.mxu0 %v51
  %134 = vmatpush1.bf16.msra.mxu0 %v50
  %135 = vmatprep.subr.bf16.mxu0 0
  %136 = vmatpush2.bf16.msra.mxu0 0
  %137 = vmatprep.subr.bf16.mxu0 0
  %138 = vmatpush2.bf16.msra.mxu0 0
  %139 = vmatprep.subr.bf16.mxu0 0
  %140 = vmatpush2.bf16.msra.mxu0 0
  %141 = vmatprep.subr.bf16.mxu0 0
  %142 = vmatpush2.bf16.msra.mxu0 0
  %143 = vmatprep.subr.bf16.mxu0 0
  %144 = vmatpush2.bf16.msra.mxu0 0
  %145 = vmatprep.subr.bf16.mxu0 0
  %146 = vmatpush2.bf16.msra.mxu0 0
  %147 = vmatprep.subr.bf16.mxu0 0
  %148 = vmatpush2.bf16.msra.mxu0 0
  %149 = vmatprep.subr.bf16.mxu0 0
  %150 = vmatpush2.bf16.msra.mxu0 0
  %151 = vmatprep.mubr.bf16.mxu0 0
  %152 = vmatmul.mubr.bf16.gmra.mxu0 %v117
  %v153 = vpop.f32.mrf.mxu0
  %v154 = vadd.f32 0.0, %v153
  %v155 = vpop.f32.mrf.mxu0
  %v156 = vadd.f32 0.0, %v155
  %v157 = vpop.f32.mrf.mxu0
  %v158 = vadd.f32 0.0, %v157
  %v159 = vpop.f32.mrf.mxu0
  %v160 = vadd.f32 0.0, %v159
  %161 = vdwg.mxu0
  %v162 = vmax.f32 %v105, %v154
  %v163 = vmax.f32 %v107, %v156
  %v164 = vmax.f32 %v109, %v158
  %v165 = vmax.f32 %v111, %v160
  %v166 = vld [vmem:[%s0 + $0x8] sm:$0xff]
  %v167 = vld [vmem:[%s0 + $0x48] sm:$0xff]
  %v168 = vpack.c.bf16 %v167, %v166
  %v170 = vsel %vm66, %v168, 0
  %172 = vmatprep.subr.bf16.mxu0 0
  %173 = vmatpush1.bf16.msra.mxu0 0
  %174 = vmatprep.subr.bf16.mxu0 0
  %175 = vmatpush1.bf16.msra.mxu0 0
  %176 = vmatprep.subr.bf16.mxu0 0
  %177 = vmatpush1.bf16.msra.mxu0 0
  %178 = vmatprep.subr.bf16.mxu0 0
  %179 = vmatpush1.bf16.msra.mxu0 0
  %180 = vmatprep.subr.bf16.mxu0 %v57
  %181 = vmatpush1.bf16.msra.mxu0 %v56
  %182 = vmatprep.subr.bf16.mxu0 %v55
  %183 = vmatpush1.bf16.msra.mxu0 %v54
  %184 = vmatprep.subr.bf16.mxu0 %v53
  %185 = vmatpush1.bf16.msra.mxu0 %v52
  %186 = vmatprep.subr.bf16.mxu0 %v51
  %187 = vmatpush1.bf16.msra.mxu0 %v50
  %188 = vmatprep.subr.bf16.mxu0 0
  %189 = vmatpush2.bf16.msra.mxu0 0
  %190 = vmatprep.subr.bf16.mxu0 0
  %191 = vmatpush2.bf16.msra.mxu0 0
  %192 = vmatprep.subr.bf16.mxu0 0
  %193 = vmatpush2.bf16.msra.mxu0 0
  %194 = vmatprep.subr.bf16.mxu0 0
  %195 = vmatpush2.bf16.msra.mxu0 0
  %196 = vmatprep.subr.bf16.mxu0 0
  %197 = vmatpush2.bf16.msra.mxu0 0
  %198 = vmatprep.subr.bf16.mxu0 0
  %199 = vmatpush2.bf16.msra.mxu0 0
  %200 = vmatprep.subr.bf16.mxu0 0
  %201 = vmatpush2.bf16.msra.mxu0 0
  %202 = vmatprep.subr.bf16.mxu0 0
  %203 = vmatpush2.bf16.msra.mxu0 0
  %204 = vmatprep.mubr.bf16.mxu0 0
  %205 = vmatmul.mubr.bf16.gmra.mxu0 %v170
  %v206 = vpop.f32.mrf.mxu0
  %v207 = vadd.f32 0.0, %v206
  %v208 = vpop.f32.mrf.mxu0
  %v209 = vadd.f32 0.0, %v208
  %v210 = vpop.f32.mrf.mxu0
  %v211 = vadd.f32 0.0, %v210
  %v212 = vpop.f32.mrf.mxu0
  %v213 = vadd.f32 0.0, %v212
  %214 = vdwg.mxu0
  %v215 = vmax.f32 %v162, %v207
  %v216 = vmax.f32 %v163, %v209
  %v217 = vmax.f32 %v164, %v211
  %v218 = vmax.f32 %v165, %v213
  %220 = vrot.lane.b32.xlu0 %v168, 64
  %v221 = vpop.permute.xlu0 %220
  %v223 = vsel %vm66, %v221, 0
  %225 = vmatprep.subr.bf16.mxu0 0
  %226 = vmatpush1.bf16.msra.mxu0 0
  %227 = vmatprep.subr.bf16.mxu0 0
  %228 = vmatpush1.bf16.msra.mxu0 0
  %229 = vmatprep.subr.bf16.mxu0 0
  %230 = vmatpush1.bf16.msra.mxu0 0
  %231 = vmatprep.subr.bf16.mxu0 0
  %232 = vmatpush1.bf16.msra.mxu0 0
  %233 = vmatprep.subr.bf16.mxu0 %v57
  %234 = vmatpush1.bf16.msra.mxu0 %v56
  %235 = vmatprep.subr.bf16.mxu0 %v55
  %236 = vmatpush1.bf16.msra.mxu0 %v54
  %237 = vmatprep.subr.bf16.mxu0 %v53
  %238 = vmatpush1.bf16.msra.mxu0 %v52
  %239 = vmatprep.subr.bf16.mxu0 %v51
  %240 = vmatpush1.bf16.msra.mxu0 %v50
  %241 = vmatprep.subr.bf16.mxu0 0
  %242 = vmatpush2.bf16.msra.mxu0 0
  %243 = vmatprep.subr.bf16.mxu0 0
  %244 = vmatpush2.bf16.msra.mxu0 0
  %245 = vmatprep.subr.bf16.mxu0 0
  %246 = vmatpush2.bf16.msra.mxu0 0
  %247 = vmatprep.subr.bf16.mxu0 0
  %248 = vmatpush2.bf16.msra.mxu0 0
  %249 = vmatprep.subr.bf16.mxu0 0
  %250 = vmatpush2.bf16.msra.mxu0 0
  %251 = vmatprep.subr.bf16.mxu0 0
  %252 = vmatpush2.bf16.msra.mxu0 0
  %253 = vmatprep.subr.bf16.mxu0 0
  %254 = vmatpush2.bf16.msra.mxu0 0
  %255 = vmatprep.subr.bf16.mxu0 0
  %256 = vmatpush2.bf16.msra.mxu0 0
  %257 = vmatprep.mubr.bf16.mxu0 0
  %258 = vmatmul.mubr.bf16.gmra.mxu0 %v223
  %v259 = vpop.f32.mrf.mxu0
  %v260 = vadd.f32 0.0, %v259
  %v261 = vpop.f32.mrf.mxu0
  %v262 = vadd.f32 0.0, %v261
  %v263 = vpop.f32.mrf.mxu0
  %v264 = vadd.f32 0.0, %v263
  %v265 = vpop.f32.mrf.mxu0
  %v266 = vadd.f32 0.0, %v265
  %267 = vdwg.mxu0
  %v268 = vmax.f32 %v215, %v260
  %v269 = vmax.f32 %v216, %v262
  %v270 = vmax.f32 %v217, %v264
  %v271 = vmax.f32 %v218, %v266
  %v272 = vld [vmem:[%s0 + $0x10] sm:$0xff]
  %v273 = vld [vmem:[%s0 + $0x50] sm:$0xff]
  %v274 = vpack.c.bf16 %v273, %v272
  %v276 = vsel %vm66, %v274, 0
  %278 = vmatprep.subr.bf16.mxu0 0
  %279 = vmatpush1.bf16.msra.mxu0 0
  %280 = vmatprep.subr.bf16.mxu0 0
  %281 = vmatpush1.bf16.msra.mxu0 0
  %282 = vmatprep.subr.bf16.mxu0 0
  %283 = vmatpush1.bf16.msra.mxu0 0
  %284 = vmatprep.subr.bf16.mxu0 0
  %285 = vmatpush1.bf16.msra.mxu0 0
  %286 = vmatprep.subr.bf16.mxu0 %v57
  %287 = vmatpush1.bf16.msra.mxu0 %v56
  %288 = vmatprep.subr.bf16.mxu0 %v55
  %289 = vmatpush1.bf16.msra.mxu0 %v54
  %290 = vmatprep.subr.bf16.mxu0 %v53
  %291 = vmatpush1.bf16.msra.mxu0 %v52
  %292 = vmatprep.subr.bf16.mxu0 %v51
  %293 = vmatpush1.bf16.msra.mxu0 %v50
  %294 = vmatprep.subr.bf16.mxu0 0
  %295 = vmatpush2.bf16.msra.mxu0 0
  %296 = vmatprep.subr.bf16.mxu0 0
  %297 = vmatpush2.bf16.msra.mxu0 0
  %298 = vmatprep.subr.bf16.mxu0 0
  %299 = vmatpush2.bf16.msra.mxu0 0
  %300 = vmatprep.subr.bf16.mxu0 0
  %301 = vmatpush2.bf16.msra.mxu0 0
  %302 = vmatprep.subr.bf16.mxu0 0
  %303 = vmatpush2.bf16.msra.mxu0 0
  %304 = vmatprep.subr.bf16.mxu0 0
  %305 = vmatpush2.bf16.msra.mxu0 0
  %306 = vmatprep.subr.bf16.mxu0 0
  %307 = vmatpush2.bf16.msra.mxu0 0
  %308 = vmatprep.subr.bf16.mxu0 0
  %309 = vmatpush2.bf16.msra.mxu0 0
  %310 = vmatprep.mubr.bf16.mxu0 0
  %311 = vmatmul.mubr.bf16.gmra.mxu0 %v276
  %v312 = vpop.f32.mrf.mxu0
  %v313 = vadd.f32 0.0, %v312
  %v314 = vpop.f32.mrf.mxu0
  %v315 = vadd.f32 0.0, %v314
  %v316 = vpop.f32.mrf.mxu0
  %v317 = vadd.f32 0.0, %v316
  %v318 = vpop.f32.mrf.mxu0
  %v319 = vadd.f32 0.0, %v318
  %320 = vdwg.mxu0
  %v321 = vmax.f32 %v268, %v313
  %v322 = vmax.f32 %v269, %v315
  %v323 = vmax.f32 %v270, %v317
  %v324 = vmax.f32 %v271, %v319
  %326 = vrot.lane.b32.xlu0 %v274, 64
  %v327 = vpop.permute.xlu0 %326
  %v329 = vsel %vm66, %v327, 0
  %331 = vmatprep.subr.bf16.mxu0 0
  %332 = vmatpush1.bf16.msra.mxu0 0
  %333 = vmatprep.subr.bf16.mxu0 0
  %334 = vmatpush1.bf16.msra.mxu0 0
  %335 = vmatprep.subr.bf16.mxu0 0
  %336 = vmatpush1.bf16.msra.mxu0 0
  %337 = vmatprep.subr.bf16.mxu0 0
  %338 = vmatpush1.bf16.msra.mxu0 0
  %339 = vmatprep.subr.bf16.mxu0 %v57
  %340 = vmatpush1.bf16.msra.mxu0 %v56
  %341 = vmatprep.subr.bf16.mxu0 %v55
  %342 = vmatpush1.bf16.msra.mxu0 %v54
  %343 = vmatprep.subr.bf16.mxu0 %v53
  %344 = vmatpush1.bf16.msra.mxu0 %v52
  %345 = vmatprep.subr.bf16.mxu0 %v51
  %346 = vmatpush1.bf16.msra.mxu0 %v50
  %347 = vmatprep.subr.bf16.mxu0 0
  %348 = vmatpush2.bf16.msra.mxu0 0
  %349 = vmatprep.subr.bf16.mxu0 0
  %350 = vmatpush2.bf16.msra.mxu0 0
  %351 = vmatprep.subr.bf16.mxu0 0
  %352 = vmatpush2.bf16.msra.mxu0 0
  %353 = vmatprep.subr.bf16.mxu0 0
  %354 = vmatpush2.bf16.msra.mxu0 0
  %355 = vmatprep.subr.bf16.mxu0 0
  %356 = vmatpush2.bf16.msra.mxu0 0
  %357 = vmatprep.subr.bf16.mxu0 0
  %358 = vmatpush2.bf16.msra.mxu0 0
  %359 = vmatprep.subr.bf16.mxu0 0
  %360 = vmatpush2.bf16.msra.mxu0 0
  %361 = vmatprep.subr.bf16.mxu0 0
  %362 = vmatpush2.bf16.msra.mxu0 0
  %363 = vmatprep.mubr.bf16.mxu0 0
  %364 = vmatmul.mubr.bf16.gmra.mxu0 %v329
  %v365 = vpop.f32.mrf.mxu0
  %v366 = vadd.f32 0.0, %v365
  %v367 = vpop.f32.mrf.mxu0
  %v368 = vadd.f32 0.0, %v367
  %v369 = vpop.f32.mrf.mxu0
  %v370 = vadd.f32 0.0, %v369
  %v371 = vpop.f32.mrf.mxu0
  %v372 = vadd.f32 0.0, %v371
  %373 = vdwg.mxu0
  %v374 = vmax.f32 %v321, %v366
  %v375 = vmax.f32 %v322, %v368
  %v376 = vmax.f32 %v323, %v370
  %v377 = vmax.f32 %v324, %v372
  %v378 = vld [vmem:[%s0 + $0x18] sm:$0xff]
  %v379 = vld [vmem:[%s0 + $0x58] sm:$0xff]
  %v380 = vpack.c.bf16 %v379, %v378
  %v382 = vsel %vm66, %v380, 0
  %384 = vmatprep.subr.bf16.mxu0 0
  %385 = vmatpush1.bf16.msra.mxu0 0
  %386 = vmatprep.subr.bf16.mxu0 0
  %387 = vmatpush1.bf16.msra.mxu0 0
  %388 = vmatprep.subr.bf16.mxu0 0
  %389 = vmatpush1.bf16.msra.mxu0 0
  %390 = vmatprep.subr.bf16.mxu0 0
  %391 = vmatpush1.bf16.msra.mxu0 0
  %392 = vmatprep.subr.bf16.mxu0 %v57
  %393 = vmatpush1.bf16.msra.mxu0 %v56
  %394 = vmatprep.subr.bf16.mxu0 %v55
  %395 = vmatpush1.bf16.msra.mxu0 %v54
  %396 = vmatprep.subr.bf16.mxu0 %v53
  %397 = vmatpush1.bf16.msra.mxu0 %v52
  %398 = vmatprep.subr.bf16.mxu0 %v51
  %399 = vmatpush1.bf16.msra.mxu0 %v50
  %400 = vmatprep.subr.bf16.mxu0 0
  %401 = vmatpush2.bf16.msra.mxu0 0
  %402 = vmatprep.subr.bf16.mxu0 0
  %403 = vmatpush2.bf16.msra.mxu0 0
  %404 = vmatprep.subr.bf16.mxu0 0
  %405 = vmatpush2.bf16.msra.mxu0 0
  %406 = vmatprep.subr.bf16.mxu0 0
  %407 = vmatpush2.bf16.msra.mxu0 0
  %408 = vmatprep.subr.bf16.mxu0 0
  %409 = vmatpush2.bf16.msra.mxu0 0
  %410 = vmatprep.subr.bf16.mxu0 0
  %411 = vmatpush2.bf16.msra.mxu0 0
  %412 = vmatprep.subr.bf16.mxu0 0
  %413 = vmatpush2.bf16.msra.mxu0 0
  %414 = vmatprep.subr.bf16.mxu0 0
  %415 = vmatpush2.bf16.msra.mxu0 0
  %416 = vmatprep.mubr.bf16.mxu0 0
  %417 = vmatmul.mubr.bf16.gmra.mxu0 %v382
  %v418 = vpop.f32.mrf.mxu0
  %v419 = vadd.f32 0.0, %v418
  %v420 = vpop.f32.mrf.mxu0
  %v421 = vadd.f32 0.0, %v420
  %v422 = vpop.f32.mrf.mxu0
  %v423 = vadd.f32 0.0, %v422
  %v424 = vpop.f32.mrf.mxu0
  %v425 = vadd.f32 0.0, %v424
  %426 = vdwg.mxu0
  %v427 = vmax.f32 %v374, %v419
  %v428 = vmax.f32 %v375, %v421
  %v429 = vmax.f32 %v376, %v423
  %v430 = vmax.f32 %v377, %v425
  %432 = vrot.lane.b32.xlu0 %v380, 64
  %v433 = vpop.permute.xlu0 %432
  %v435 = vsel %vm66, %v433, 0
  %437 = vmatprep.subr.bf16.mxu0 0
  %438 = vmatpush1.bf16.msra.mxu0 0
  %439 = vmatprep.subr.bf16.mxu0 0
  %440 = vmatpush1.bf16.msra.mxu0 0
  %441 = vmatprep.subr.bf16.mxu0 0
  %442 = vmatpush1.bf16.msra.mxu0 0
  %443 = vmatprep.subr.bf16.mxu0 0
  %444 = vmatpush1.bf16.msra.mxu0 0
  %445 = vmatprep.subr.bf16.mxu0 %v57
  %446 = vmatpush1.bf16.msra.mxu0 %v56
  %447 = vmatprep.subr.bf16.mxu0 %v55
  %448 = vmatpush1.bf16.msra.mxu0 %v54
  %449 = vmatprep.subr.bf16.mxu0 %v53
  %450 = vmatpush1.bf16.msra.mxu0 %v52
  %451 = vmatprep.subr.bf16.mxu0 %v51
  %452 = vmatpush1.bf16.msra.mxu0 %v50
  %453 = vmatprep.subr.bf16.mxu0 0
  %454 = vmatpush2.bf16.msra.mxu0 0
  %455 = vmatprep.subr.bf16.mxu0 0
  %456 = vmatpush2.bf16.msra.mxu0 0
  %457 = vmatprep.subr.bf16.mxu0 0
  %458 = vmatpush2.bf16.msra.mxu0 0
  %459 = vmatprep.subr.bf16.mxu0 0
  %460 = vmatpush2.bf16.msra.mxu0 0
  %461 = vmatprep.subr.bf16.mxu0 0
  %462 = vmatpush2.bf16.msra.mxu0 0
  %463 = vmatprep.subr.bf16.mxu0 0
  %464 = vmatpush2.bf16.msra.mxu0 0
  %465 = vmatprep.subr.bf16.mxu0 0
  %466 = vmatpush2.bf16.msra.mxu0 0
  %467 = vmatprep.subr.bf16.mxu0 0
  %468 = vmatpush2.bf16.msra.mxu0 0
  %469 = vmatprep.mubr.bf16.mxu0 0
  %470 = vmatmul.mubr.bf16.gmra.mxu0 %v435
  %v471 = vpop.f32.mrf.mxu0
  %v472 = vadd.f32 0.0, %v471
  %v473 = vpop.f32.mrf.mxu0
  %v474 = vadd.f32 0.0, %v473
  %v475 = vpop.f32.mrf.mxu0
  %v476 = vadd.f32 0.0, %v475
  %v477 = vpop.f32.mrf.mxu0
  %v478 = vadd.f32 0.0, %v477
  %479 = vdwg.mxu0
  %v480 = vmax.f32 %v427, %v472
  %v481 = vmax.f32 %v428, %v474
  %v482 = vmax.f32 %v429, %v476
  %v483 = vmax.f32 %v430, %v478
  %v484 = vld [vmem:[%s0 + $0x20] sm:$0xff]
  %v485 = vld [vmem:[%s0 + $0x60] sm:$0xff]
  %v486 = vpack.c.bf16 %v485, %v484
  %v488 = vsel %vm66, %v486, 0
  %490 = vmatprep.subr.bf16.mxu0 0
  %491 = vmatpush1.bf16.msra.mxu0 0
  %492 = vmatprep.subr.bf16.mxu0 0
  %493 = vmatpush1.bf16.msra.mxu0 0
  %494 = vmatprep.subr.bf16.mxu0 0
  %495 = vmatpush1.bf16.msra.mxu0 0
  %496 = vmatprep.subr.bf16.mxu0 0
  %497 = vmatpush1.bf16.msra.mxu0 0
  %498 = vmatprep.subr.bf16.mxu0 %v57
  %499 = vmatpush1.bf16.msra.mxu0 %v56
  %500 = vmatprep.subr.bf16.mxu0 %v55
  %501 = vmatpush1.bf16.msra.mxu0 %v54
  %502 = vmatprep.subr.bf16.mxu0 %v53
  %503 = vmatpush1.bf16.msra.mxu0 %v52
  %504 = vmatprep.subr.bf16.mxu0 %v51
  %505 = vmatpush1.bf16.msra.mxu0 %v50
  %506 = vmatprep.subr.bf16.mxu0 0
  %507 = vmatpush2.bf16.msra.mxu0 0
  %508 = vmatprep.subr.bf16.mxu0 0
  %509 = vmatpush2.bf16.msra.mxu0 0
  %510 = vmatprep.subr.bf16.mxu0 0
  %511 = vmatpush2.bf16.msra.mxu0 0
  %512 = vmatprep.subr.bf16.mxu0 0
  %513 = vmatpush2.bf16.msra.mxu0 0
  %514 = vmatprep.subr.bf16.mxu0 0
  %515 = vmatpush2.bf16.msra.mxu0 0
  %516 = vmatprep.subr.bf16.mxu0 0
  %517 = vmatpush2.bf16.msra.mxu0 0
  %518 = vmatprep.subr.bf16.mxu0 0
  %519 = vmatpush2.bf16.msra.mxu0 0
  %520 = vmatprep.subr.bf16.mxu0 0
  %521 = vmatpush2.bf16.msra.mxu0 0
  %522 = vmatprep.mubr.bf16.mxu0 0
  %523 = vmatmul.mubr.bf16.gmra.mxu0 %v488
  %v524 = vpop.f32.mrf.mxu0
  %v525 = vadd.f32 0.0, %v524
  %v526 = vpop.f32.mrf.mxu0
  %v527 = vadd.f32 0.0, %v526
  %v528 = vpop.f32.mrf.mxu0
  %v529 = vadd.f32 0.0, %v528
  %v530 = vpop.f32.mrf.mxu0
  %v531 = vadd.f32 0.0, %v530
  %532 = vdwg.mxu0
  %v533 = vmax.f32 %v480, %v525
  %v534 = vmax.f32 %v481, %v527
  %v535 = vmax.f32 %v482, %v529
  %v536 = vmax.f32 %v483, %v531
  %538 = vrot.lane.b32.xlu0 %v486, 64
  %v539 = vpop.permute.xlu0 %538
  %v541 = vsel %vm66, %v539, 0
  %543 = vmatprep.subr.bf16.mxu0 0
  %544 = vmatpush1.bf16.msra.mxu0 0
  %545 = vmatprep.subr.bf16.mxu0 0
  %546 = vmatpush1.bf16.msra.mxu0 0
  %547 = vmatprep.subr.bf16.mxu0 0
  %548 = vmatpush1.bf16.msra.mxu0 0
  %549 = vmatprep.subr.bf16.mxu0 0
  %550 = vmatpush1.bf16.msra.mxu0 0
  %551 = vmatprep.subr.bf16.mxu0 %v57
  %552 = vmatpush1.bf16.msra.mxu0 %v56
  %553 = vmatprep.subr.bf16.mxu0 %v55
  %554 = vmatpush1.bf16.msra.mxu0 %v54
  %555 = vmatprep.subr.bf16.mxu0 %v53
  %556 = vmatpush1.bf16.msra.mxu0 %v52
  %557 = vmatprep.subr.bf16.mxu0 %v51
  %558 = vmatpush1.bf16.msra.mxu0 %v50
  %559 = vmatprep.subr.bf16.mxu0 0
  %560 = vmatpush2.bf16.msra.mxu0 0
  %561 = vmatprep.subr.bf16.mxu0 0
  %562 = vmatpush2.bf16.msra.mxu0 0
  %563 = vmatprep.subr.bf16.mxu0 0
  %564 = vmatpush2.bf16.msra.mxu0 0
  %565 = vmatprep.subr.bf16.mxu0 0
  %566 = vmatpush2.bf16.msra.mxu0 0
  %567 = vmatprep.subr.bf16.mxu0 0
  %568 = vmatpush2.bf16.msra.mxu0 0
  %569 = vmatprep.subr.bf16.mxu0 0
  %570 = vmatpush2.bf16.msra.mxu0 0
  %571 = vmatprep.subr.bf16.mxu0 0
  %572 = vmatpush2.bf16.msra.mxu0 0
  %573 = vmatprep.subr.bf16.mxu0 0
  %574 = vmatpush2.bf16.msra.mxu0 0
  %575 = vmatprep.mubr.bf16.mxu0 0
  %576 = vmatmul.mubr.bf16.gmra.mxu0 %v541
  %v577 = vpop.f32.mrf.mxu0
  %v578 = vadd.f32 0.0, %v577
  %v579 = vpop.f32.mrf.mxu0
  %v580 = vadd.f32 0.0, %v579
  %v581 = vpop.f32.mrf.mxu0
  %v582 = vadd.f32 0.0, %v581
  %v583 = vpop.f32.mrf.mxu0
  %v584 = vadd.f32 0.0, %v583
  %585 = vdwg.mxu0
  %v586 = vmax.f32 %v533, %v578
  %v587 = vmax.f32 %v534, %v580
  %v588 = vmax.f32 %v535, %v582
  %v589 = vmax.f32 %v536, %v584
  %v590 = vld [vmem:[%s0 + $0x28] sm:$0xff]
  %v591 = vld [vmem:[%s0 + $0x68] sm:$0xff]
  %v592 = vpack.c.bf16 %v591, %v590
  %v594 = vsel %vm66, %v592, 0
  %596 = vmatprep.subr.bf16.mxu0 0
  %597 = vmatpush1.bf16.msra.mxu0 0
  %598 = vmatprep.subr.bf16.mxu0 0
  %599 = vmatpush1.bf16.msra.mxu0 0
  %600 = vmatprep.subr.bf16.mxu0 0
  %601 = vmatpush1.bf16.msra.mxu0 0
  %602 = vmatprep.subr.bf16.mxu0 0
  %603 = vmatpush1.bf16.msra.mxu0 0
  %604 = vmatprep.subr.bf16.mxu0 %v57
  %605 = vmatpush1.bf16.msra.mxu0 %v56
  %606 = vmatprep.subr.bf16.mxu0 %v55
  %607 = vmatpush1.bf16.msra.mxu0 %v54
  %608 = vmatprep.subr.bf16.mxu0 %v53
  %609 = vmatpush1.bf16.msra.mxu0 %v52
  %610 = vmatprep.subr.bf16.mxu0 %v51
  %611 = vmatpush1.bf16.msra.mxu0 %v50
  %612 = vmatprep.subr.bf16.mxu0 0
  %613 = vmatpush2.bf16.msra.mxu0 0
  %614 = vmatprep.subr.bf16.mxu0 0
  %615 = vmatpush2.bf16.msra.mxu0 0
  %616 = vmatprep.subr.bf16.mxu0 0
  %617 = vmatpush2.bf16.msra.mxu0 0
  %618 = vmatprep.subr.bf16.mxu0 0
  %619 = vmatpush2.bf16.msra.mxu0 0
  %620 = vmatprep.subr.bf16.mxu0 0
  %621 = vmatpush2.bf16.msra.mxu0 0
  %622 = vmatprep.subr.bf16.mxu0 0
  %623 = vmatpush2.bf16.msra.mxu0 0
  %624 = vmatprep.subr.bf16.mxu0 0
  %625 = vmatpush2.bf16.msra.mxu0 0
  %626 = vmatprep.subr.bf16.mxu0 0
  %627 = vmatpush2.bf16.msra.mxu0 0
  %628 = vmatprep.mubr.bf16.mxu0 0
  %629 = vmatmul.mubr.bf16.gmra.mxu0 %v594
  %v630 = vpop.f32.mrf.mxu0
  %v631 = vadd.f32 0.0, %v630
  %v632 = vpop.f32.mrf.mxu0
  %v633 = vadd.f32 0.0, %v632
  %v634 = vpop.f32.mrf.mxu0
  %v635 = vadd.f32 0.0, %v634
  %v636 = vpop.f32.mrf.mxu0
  %v637 = vadd.f32 0.0, %v636
  %638 = vdwg.mxu0
  %v639 = vmax.f32 %v586, %v631
  %v640 = vmax.f32 %v587, %v633
  %v641 = vmax.f32 %v588, %v635
  %v642 = vmax.f32 %v589, %v637
  %644 = vrot.lane.b32.xlu0 %v592, 64
  %v645 = vpop.permute.xlu0 %644
  %v647 = vsel %vm66, %v645, 0
  %649 = vmatprep.subr.bf16.mxu0 0
  %650 = vmatpush1.bf16.msra.mxu0 0
  %651 = vmatprep.subr.bf16.mxu0 0
  %652 = vmatpush1.bf16.msra.mxu0 0
  %653 = vmatprep.subr.bf16.mxu0 0
  %654 = vmatpush1.bf16.msra.mxu0 0
  %655 = vmatprep.subr.bf16.mxu0 0
  %656 = vmatpush1.bf16.msra.mxu0 0
  %657 = vmatprep.subr.bf16.mxu0 %v57
  %658 = vmatpush1.bf16.msra.mxu0 %v56
  %659 = vmatprep.subr.bf16.mxu0 %v55
  %660 = vmatpush1.bf16.msra.mxu0 %v54
  %661 = vmatprep.subr.bf16.mxu0 %v53
  %662 = vmatpush1.bf16.msra.mxu0 %v52
  %663 = vmatprep.subr.bf16.mxu0 %v51
  %664 = vmatpush1.bf16.msra.mxu0 %v50
  %665 = vmatprep.subr.bf16.mxu0 0
  %666 = vmatpush2.bf16.msra.mxu0 0
  %667 = vmatprep.subr.bf16.mxu0 0
  %668 = vmatpush2.bf16.msra.mxu0 0
  %669 = vmatprep.subr.bf16.mxu0 0
  %670 = vmatpush2.bf16.msra.mxu0 0
  %671 = vmatprep.subr.bf16.mxu0 0
  %672 = vmatpush2.bf16.msra.mxu0 0
  %673 = vmatprep.subr.bf16.mxu0 0
  %674 = vmatpush2.bf16.msra.mxu0 0
  %675 = vmatprep.subr.bf16.mxu0 0
  %676 = vmatpush2.bf16.msra.mxu0 0
  %677 = vmatprep.subr.bf16.mxu0 0
  %678 = vmatpush2.bf16.msra.mxu0 0
  %679 = vmatprep.subr.bf16.mxu0 0
  %680 = vmatpush2.bf16.msra.mxu0 0
  %681 = vmatprep.mubr.bf16.mxu0 0
  %682 = vmatmul.mubr.bf16.gmra.mxu0 %v647
  %v683 = vpop.f32.mrf.mxu0
  %v684 = vadd.f32 0.0, %v683
  %v685 = vpop.f32.mrf.mxu0
  %v686 = vadd.f32 0.0, %v685
  %v687 = vpop.f32.mrf.mxu0
  %v688 = vadd.f32 0.0, %v687
  %v689 = vpop.f32.mrf.mxu0
  %v690 = vadd.f32 0.0, %v689
  %691 = vdwg.mxu0
  %v692 = vmax.f32 %v639, %v684
  %v693 = vmax.f32 %v640, %v686
  %v694 = vmax.f32 %v641, %v688
  %v695 = vmax.f32 %v642, %v690
  %v696 = vld [vmem:[%s0 + $0x30] sm:$0xff]
  %v697 = vld [vmem:[%s0 + $0x70] sm:$0xff]
  %v698 = vpack.c.bf16 %v697, %v696
  %v700 = vsel %vm66, %v698, 0
  %702 = vmatprep.subr.bf16.mxu0 0
  %703 = vmatpush1.bf16.msra.mxu0 0
  %704 = vmatprep.subr.bf16.mxu0 0
  %705 = vmatpush1.bf16.msra.mxu0 0
  %706 = vmatprep.subr.bf16.mxu0 0
  %707 = vmatpush1.bf16.msra.mxu0 0
  %708 = vmatprep.subr.bf16.mxu0 0
  %709 = vmatpush1.bf16.msra.mxu0 0
  %710 = vmatprep.subr.bf16.mxu0 %v57
  %711 = vmatpush1.bf16.msra.mxu0 %v56
  %712 = vmatprep.subr.bf16.mxu0 %v55
  %713 = vmatpush1.bf16.msra.mxu0 %v54
  %714 = vmatprep.subr.bf16.mxu0 %v53
  %715 = vmatpush1.bf16.msra.mxu0 %v52
  %716 = vmatprep.subr.bf16.mxu0 %v51
  %717 = vmatpush1.bf16.msra.mxu0 %v50
  %718 = vmatprep.subr.bf16.mxu0 0
  %719 = vmatpush2.bf16.msra.mxu0 0
  %720 = vmatprep.subr.bf16.mxu0 0
  %721 = vmatpush2.bf16.msra.mxu0 0
  %722 = vmatprep.subr.bf16.mxu0 0
  %723 = vmatpush2.bf16.msra.mxu0 0
  %724 = vmatprep.subr.bf16.mxu0 0
  %725 = vmatpush2.bf16.msra.mxu0 0
  %726 = vmatprep.subr.bf16.mxu0 0
  %727 = vmatpush2.bf16.msra.mxu0 0
  %728 = vmatprep.subr.bf16.mxu0 0
  %729 = vmatpush2.bf16.msra.mxu0 0
  %730 = vmatprep.subr.bf16.mxu0 0
  %731 = vmatpush2.bf16.msra.mxu0 0
  %732 = vmatprep.subr.bf16.mxu0 0
  %733 = vmatpush2.bf16.msra.mxu0 0
  %734 = vmatprep.mubr.bf16.mxu0 0
  %735 = vmatmul.mubr.bf16.gmra.mxu0 %v700
  %v736 = vpop.f32.mrf.mxu0
  %v737 = vadd.f32 0.0, %v736
  %v738 = vpop.f32.mrf.mxu0
  %v739 = vadd.f32 0.0, %v738
  %v740 = vpop.f32.mrf.mxu0
  %v741 = vadd.f32 0.0, %v740
  %v742 = vpop.f32.mrf.mxu0
  %v743 = vadd.f32 0.0, %v742
  %744 = vdwg.mxu0
  %v745 = vmax.f32 %v692, %v737
  %v746 = vmax.f32 %v693, %v739
  %v747 = vmax.f32 %v694, %v741
  %v748 = vmax.f32 %v695, %v743
  %750 = vrot.lane.b32.xlu0 %v698, 64
  %v751 = vpop.permute.xlu0 %750
  %v753 = vsel %vm66, %v751, 0
  %755 = vmatprep.subr.bf16.mxu0 0
  %756 = vmatpush1.bf16.msra.mxu0 0
  %757 = vmatprep.subr.bf16.mxu0 0
  %758 = vmatpush1.bf16.msra.mxu0 0
  %759 = vmatprep.subr.bf16.mxu0 0
  %760 = vmatpush1.bf16.msra.mxu0 0
  %761 = vmatprep.subr.bf16.mxu0 0
  %762 = vmatpush1.bf16.msra.mxu0 0
  %763 = vmatprep.subr.bf16.mxu0 %v57
  %764 = vmatpush1.bf16.msra.mxu0 %v56
  %765 = vmatprep.subr.bf16.mxu0 %v55
  %766 = vmatpush1.bf16.msra.mxu0 %v54
  %767 = vmatprep.subr.bf16.mxu0 %v53
  %768 = vmatpush1.bf16.msra.mxu0 %v52
  %769 = vmatprep.subr.bf16.mxu0 %v51
  %770 = vmatpush1.bf16.msra.mxu0 %v50
  %771 = vmatprep.subr.bf16.mxu0 0
  %772 = vmatpush2.bf16.msra.mxu0 0
  %773 = vmatprep.subr.bf16.mxu0 0
  %774 = vmatpush2.bf16.msra.mxu0 0
  %775 = vmatprep.subr.bf16.mxu0 0
  %776 = vmatpush2.bf16.msra.mxu0 0
  %777 = vmatprep.subr.bf16.mxu0 0
  %778 = vmatpush2.bf16.msra.mxu0 0
  %779 = vmatprep.subr.bf16.mxu0 0
  %780 = vmatpush2.bf16.msra.mxu0 0
  %781 = vmatprep.subr.bf16.mxu0 0
  %782 = vmatpush2.bf16.msra.mxu0 0
  %783 = vmatprep.subr.bf16.mxu0 0
  %784 = vmatpush2.bf16.msra.mxu0 0
  %785 = vmatprep.subr.bf16.mxu0 0
  %786 = vmatpush2.bf16.msra.mxu0 0
  %787 = vmatprep.mubr.bf16.mxu0 0
  %788 = vmatmul.mubr.bf16.gmra.mxu0 %v753
  %v789 = vpop.f32.mrf.mxu0
  %v790 = vadd.f32 0.0, %v789
  %v791 = vpop.f32.mrf.mxu0
  %v792 = vadd.f32 0.0, %v791
  %v793 = vpop.f32.mrf.mxu0
  %v794 = vadd.f32 0.0, %v793
  %v795 = vpop.f32.mrf.mxu0
  %v796 = vadd.f32 0.0, %v795
  %797 = vdwg.mxu0
  %v798 = vmax.f32 %v745, %v790
  %v799 = vmax.f32 %v746, %v792
  %v800 = vmax.f32 %v747, %v794
  %v801 = vmax.f32 %v748, %v796
  %v802 = vld [vmem:[%s0 + $0x38] sm:$0xff]
  %v803 = vld [vmem:[%s0 + $0x78] sm:$0xff]
  %v804 = vpack.c.bf16 %v803, %v802
  %v806 = vsel %vm66, %v804, 0
  %808 = vmatprep.subr.bf16.mxu0 0
  %809 = vmatpush1.bf16.msra.mxu0 0
  %810 = vmatprep.subr.bf16.mxu0 0
  %811 = vmatpush1.bf16.msra.mxu0 0
  %812 = vmatprep.subr.bf16.mxu0 0
  %813 = vmatpush1.bf16.msra.mxu0 0
  %814 = vmatprep.subr.bf16.mxu0 0
  %815 = vmatpush1.bf16.msra.mxu0 0
  %816 = vmatprep.subr.bf16.mxu0 %v57
  %817 = vmatpush1.bf16.msra.mxu0 %v56
  %818 = vmatprep.subr.bf16.mxu0 %v55
  %819 = vmatpush1.bf16.msra.mxu0 %v54
  %820 = vmatprep.subr.bf16.mxu0 %v53
  %821 = vmatpush1.bf16.msra.mxu0 %v52
  %822 = vmatprep.subr.bf16.mxu0 %v51
  %823 = vmatpush1.bf16.msra.mxu0 %v50
  %824 = vmatprep.subr.bf16.mxu0 0
  %825 = vmatpush2.bf16.msra.mxu0 0
  %826 = vmatprep.subr.bf16.mxu0 0
  %827 = vmatpush2.bf16.msra.mxu0 0
  %828 = vmatprep.subr.bf16.mxu0 0
  %829 = vmatpush2.bf16.msra.mxu0 0
  %830 = vmatprep.subr.bf16.mxu0 0
  %831 = vmatpush2.bf16.msra.mxu0 0
  %832 = vmatprep.subr.bf16.mxu0 0
  %833 = vmatpush2.bf16.msra.mxu0 0
  %834 = vmatprep.subr.bf16.mxu0 0
  %835 = vmatpush2.bf16.msra.mxu0 0
  %836 = vmatprep.subr.bf16.mxu0 0
  %837 = vmatpush2.bf16.msra.mxu0 0
  %838 = vmatprep.subr.bf16.mxu0 0
  %839 = vmatpush2.bf16.msra.mxu0 0
  %840 = vmatprep.mubr.bf16.mxu0 0
  %841 = vmatmul.mubr.bf16.gmra.mxu0 %v806
  %v842 = vpop.f32.mrf.mxu0
  %v843 = vadd.f32 0.0, %v842
  %v844 = vpop.f32.mrf.mxu0
  %v845 = vadd.f32 0.0, %v844
  %v846 = vpop.f32.mrf.mxu0
  %v847 = vadd.f32 0.0, %v846
  %v848 = vpop.f32.mrf.mxu0
  %v849 = vadd.f32 0.0, %v848
  %850 = vdwg.mxu0
  %v851 = vmax.f32 %v798, %v843
  %v852 = vmax.f32 %v799, %v845
  %v853 = vmax.f32 %v800, %v847
  %v854 = vmax.f32 %v801, %v849
  %856 = vrot.lane.b32.xlu0 %v804, 64
  %v857 = vpop.permute.xlu0 %856
  %v859 = vsel %vm66, %v857, 0
  %861 = vmatprep.subr.bf16.mxu0 0
  %862 = vmatpush1.bf16.msra.mxu0 0
  %863 = vmatprep.subr.bf16.mxu0 0
  %864 = vmatpush1.bf16.msra.mxu0 0
  %865 = vmatprep.subr.bf16.mxu0 0
  %866 = vmatpush1.bf16.msra.mxu0 0
  %867 = vmatprep.subr.bf16.mxu0 0
  %868 = vmatpush1.bf16.msra.mxu0 0
  %869 = vmatprep.subr.bf16.mxu0 %v57
  %870 = vmatpush1.bf16.msra.mxu0 %v56
  %871 = vmatprep.subr.bf16.mxu0 %v55
  %872 = vmatpush1.bf16.msra.mxu0 %v54
  %873 = vmatprep.subr.bf16.mxu0 %v53
  %874 = vmatpush1.bf16.msra.mxu0 %v52
  %875 = vmatprep.subr.bf16.mxu0 %v51
  %876 = vmatpush1.bf16.msra.mxu0 %v50
  %877 = vmatprep.subr.bf16.mxu0 0
  %878 = vmatpush2.bf16.msra.mxu0 0
  %879 = vmatprep.subr.bf16.mxu0 0
  %880 = vmatpush2.bf16.msra.mxu0 0
  %881 = vmatprep.subr.bf16.mxu0 0
  %882 = vmatpush2.bf16.msra.mxu0 0
  %883 = vmatprep.subr.bf16.mxu0 0
  %884 = vmatpush2.bf16.msra.mxu0 0
  %885 = vmatprep.subr.bf16.mxu0 0
  %886 = vmatpush2.bf16.msra.mxu0 0
  %887 = vmatprep.subr.bf16.mxu0 0
  %888 = vmatpush2.bf16.msra.mxu0 0
  %889 = vmatprep.subr.bf16.mxu0 0
  %890 = vmatpush2.bf16.msra.mxu0 0
  %891 = vmatprep.subr.bf16.mxu0 0
  %892 = vmatpush2.bf16.msra.mxu0 0
  %893 = vmatprep.mubr.bf16.mxu0 0
  %894 = vmatmul.mubr.bf16.gmra.mxu0 %v859
  %v895 = vpop.f32.mrf.mxu0
  %v896 = vadd.f32 0.0, %v895
  %v897 = vpop.f32.mrf.mxu0
  %v898 = vadd.f32 0.0, %v897
  %v899 = vpop.f32.mrf.mxu0
  %v900 = vadd.f32 0.0, %v899
  %v901 = vpop.f32.mrf.mxu0
  %v902 = vadd.f32 0.0, %v901
  %903 = vdwg.mxu0
  %v904 = vmax.f32 %v851, %v896
  %v905 = vmax.f32 %v852, %v898
  %v906 = vmax.f32 %v853, %v900
  %v907 = vmax.f32 %v854, %v902
  %v908 = vld [vmem:[%s2] sm:$0x3]
  %v910 = vlaneseq
  %v911 = vshrl.u32 %v910, 7
  %v912 = vsub.s32 0, %v911
  %v913 = vrot.slane %v908, %v912
  %v914 = vlaneseq
  %v915 = vshrl.u32 %v914, 7
  %v916 = vsub.s32 1, %v915
  %v917 = vrot.slane %v908, %v916
  %v920 = vadd.f32 %v904, %v913
  %v921 = vadd.f32 %v905, %v917
  %v922 = vadd.f32 %v906, %v913
  %v923 = vadd.f32 %v907, %v917
  %v924 = vmax.f32 %v920, 0.0
  %v925 = vmax.f32 %v921, 0.0
  %v926 = vmax.f32 %v922, 0.0
  %v927 = vmax.f32 %v923, 0.0
  %928 = vst [vmem:[%s3] sm:$0xff] %v924
  %929 = vst [vmem:[%s3 + $0x8] sm:$0xff] %v925
  %930 = vst [vmem:[%s3 + $0x10] sm:$0xff] %v926
  %931 = vst [vmem:[%s3 + $0x18] sm:$0xff] %v927
  // Predicated region
  $region14: #{embedding_forward.6} parent=0 // pred_check
    _
  $region15: #{embedding_forward.6} parent=0 // pred_check_branch
    %933 = sbr.rel (0) target = $region17
  $region16: #{embedding_forward.6} parent=0 // pred_region
    _
  $region17: #{embedding_forward.6} parent=0 // pred_fallthru
    _
  // Predicated region
  $region18: #{embedding_forward.6} parent=0 // pred_check
    _
  $region19: #{embedding_forward.6} parent=0 // pred_check_branch
    %935 = sbr.rel (0) target = $region21
  $region20: #{embedding_forward.6} parent=0 // pred_region
    _
  $region21: #{embedding_forward.6} parent=0 // pred_fallthru
    _

// kernel: embedding_forward.7
$region0: #{embedding_forward.7}
  #allocation0 [shape = 'u32[]', space=smem, size = 0x4, offset = 0x4, fixed_abs, tag = 'smem constant byte address 0x4 - core index']
  #allocation1 [shape = 'u32[144,128]{1,0:T(1,128)}', space=vmem, size = 0x12000, scoped, tag = 'internal scratch']
  %s0 = inlined_call_operand.vmem [shape: f32[16,384], index: 0, kind: input, shape index: {}]
  %s1 = inlined_call_operand.vmem [shape: bf16[2,384,768], index: 1, kind: input, shape index: {}]
  %s2 = inlined_call_operand.vmem [shape: f32[2,768], index: 2, kind: input, shape index: {}]
  %s3 = inlined_call_operand.vmem [shape: f32[16,384], index: 3, kind: output, shape index: {}]
  %s4 = sld [smem:[#allocation0]]
  $region22: #{embedding_forward.7} parent=0
    _
  %s6 = ssub.s32 1, %s4
  %s7 = scalar_select 0, %s6, %s4
  // Predicated region
  $region2: #{embedding_forward.7} parent=0 // pred_check
    _
  $region3: #{embedding_forward.7} parent=0 // pred_check_branch
    %9 = sbr.rel (0) target = $region5
  $region4: #{embedding_forward.7} parent=0 // pred_region
    _
  $region5: #{embedding_forward.7} parent=0 // pred_fallthru
    _
  // Predicated region
  $region6: #{embedding_forward.7} parent=0 // pred_check
    _
  $region7: #{embedding_forward.7} parent=0 // pred_check_branch
    %11 = sbr.rel (0) target = $region9
  $region8: #{embedding_forward.7} parent=0 // pred_region
    _
  $region9: #{embedding_forward.7} parent=0 // pred_fallthru
    _
  // Predicated region
  $region10: #{embedding_forward.7} parent=0 // pred_check
    _
  $region11: #{embedding_forward.7} parent=0 // pred_check_branch
    %13 = sbr.rel (0) target = $region13
  $region12: #{embedding_forward.7} parent=0 // pred_region
    _
  $region13: #{embedding_forward.7} parent=0 // pred_fallthru
    _
  %v15 = vld [vmem:[%s0] sm:$0xff]
  %v16 = vld [vmem:[%s0 + $0x8] sm:$0xff]
  %v17 = vld [vmem:[%s0 + $0x10] sm:$0xff]
  %v18 = vld [vmem:[%s0 + $0x18] sm:$0xff]
  %v19 = vld [vmem:[%s0 + $0x20] sm:$0xff]
  %v20 = vld [vmem:[%s0 + $0x28] sm:$0xff]
  %v21 = vpack.c.bf16 %v18, %v15
  %v22 = vpack.c.bf16 %v19, %v16
  %v23 = vpack.c.bf16 %v20, %v17
  %v24 = vld [vmem:[%s1] sm:$0xff]
  %v25 = vld [vmem:[%s1 + $0x8] sm:$0xff]
  %v26 = vld [vmem:[%s1 + $0x10] sm:$0xff]
  %v27 = vld [vmem:[%s1 + $0x18] sm:$0xff]
  %v28 = vld [vmem:[%s1 + $0x20] sm:$0xff]
  %v29 = vld [vmem:[%s1 + $0x28] sm:$0xff]
  %v30 = vld [vmem:[%s1 + $0x30] sm:$0xff]
  %v31 = vld [vmem:[%s1 + $0x38] sm:$0xff]
  %v32 = vld [vmem:[%s1 + $0x40] sm:$0xff]
  %v33 = vld [vmem:[%s1 + $0x48] sm:$0xff]
  %v34 = vld [vmem:[%s1 + $0x50] sm:$0xff]
  %v35 = vld [vmem:[%s1 + $0x58] sm:$0xff]
  %v36 = vld [vmem:[%s1 + $0x60] sm:$0xff]
  %v37 = vld [vmem:[%s1 + $0x68] sm:$0xff]
  %v38 = vld [vmem:[%s1 + $0x70] sm:$0xff]
  %v39 = vld [vmem:[%s1 + $0x78] sm:$0xff]
  %v40 = vld [vmem:[%s1 + $0x80] sm:$0xff]
  %v41 = vld [vmem:[%s1 + $0x88] sm:$0xff]
  %v42 = vld [vmem:[%s1 + $0x90] sm:$0xff]
  %v43 = vld [vmem:[%s1 + $0x98] sm:$0xff]
  %v44 = vld [vmem:[%s1 + $0xa0] sm:$0xff]
  %v45 = vld [vmem:[%s1 + $0xa8] sm:$0xff]
  %v46 = vld [vmem:[%s1 + $0xb0] sm:$0xff]
  %v47 = vld [vmem:[%s1 + $0xb8] sm:$0xff]
  %v48 = vld [vmem:[%s1 + $0xc0] sm:$0xff]
  %v49 = vld [vmem:[%s1 + $0xc8] sm:$0xff]
  %v50 = vld [vmem:[%s1 + $0xd0] sm:$0xff]
  %v51 = vld [vmem:[%s1 + $0xd8] sm:$0xff]
  %v52 = vld [vmem:[%s1 + $0xe0] sm:$0xff]
  %v53 = vld [vmem:[%s1 + $0xe8] sm:$0xff]
  %v54 = vld [vmem:[%s1 + $0xf0] sm:$0xff]
  %v55 = vld [vmem:[%s1 + $0xf8] sm:$0xff]
  %v56 = vld [vmem:[%s1 + $0x100] sm:$0xff]
  %v57 = vld [vmem:[%s1 + $0x108] sm:$0xff]
  %v58 = vld [vmem:[%s1 + $0x110] sm:$0xff]
  %v59 = vld [vmem:[%s1 + $0x118] sm:$0xff]
  %v60 = vld [vmem:[%s1 + $0x120] sm:$0xff]
  %v61 = vld [vmem:[%s1 + $0x128] sm:$0xff]
  %v62 = vld [vmem:[%s1 + $0x130] sm:$0xff]
  %v63 = vld [vmem:[%s1 + $0x138] sm:$0xff]
  %v64 = vld [vmem:[%s1 + $0x140] sm:$0xff]
  %v65 = vld [vmem:[%s1 + $0x148] sm:$0xff]
  %v66 = vld [vmem:[%s1 + $0x150] sm:$0xff]
  %v67 = vld [vmem:[%s1 + $0x158] sm:$0xff]
  %v68 = vld [vmem:[%s1 + $0x160] sm:$0xff]
  %v69 = vld [vmem:[%s1 + $0x168] sm:$0xff]
  %v70 = vld [vmem:[%s1 + $0x170] sm:$0xff]
  %v71 = vld [vmem:[%s1 + $0x178] sm:$0xff]
  %v72 = vld [vmem:[%s1 + $0x180] sm:$0xff]
  %v73 = vld [vmem:[%s1 + $0x188] sm:$0xff]
  %v74 = vld [vmem:[%s1 + $0x190] sm:$0xff]
  %v75 = vld [vmem:[%s1 + $0x198] sm:$0xff]
  %v76 = vld [vmem:[%s1 + $0x1a0] sm:$0xff]
  %v77 = vld [vmem:[%s1 + $0x1a8] sm:$0xff]
  %v78 = vld [vmem:[%s1 + $0x1b0] sm:$0xff]
  %v79 = vld [vmem:[%s1 + $0x1b8] sm:$0xff]
  %v80 = vld [vmem:[%s1 + $0x1c0] sm:$0xff]
  %v81 = vld [vmem:[%s1 + $0x1c8] sm:$0xff]
  %v82 = vld [vmem:[%s1 + $0x1d0] sm:$0xff]
  %v83 = vld [vmem:[%s1 + $0x1d8] sm:$0xff]
  %v84 = vld [vmem:[%s1 + $0x1e0] sm:$0xff]
  %v85 = vld [vmem:[%s1 + $0x1e8] sm:$0xff]
  %v86 = vld [vmem:[%s1 + $0x1f0] sm:$0xff]
  %v87 = vld [vmem:[%s1 + $0x1f8] sm:$0xff]
  %v88 = vld [vmem:[%s1 + $0x200] sm:$0xff]
  %v89 = vld [vmem:[%s1 + $0x208] sm:$0xff]
  %v90 = vld [vmem:[%s1 + $0x210] sm:$0xff]
  %v91 = vld [vmem:[%s1 + $0x218] sm:$0xff]
  %v92 = vld [vmem:[%s1 + $0x220] sm:$0xff]
  %v93 = vld [vmem:[%s1 + $0x228] sm:$0xff]
  %v94 = vld [vmem:[%s1 + $0x230] sm:$0xff]
  %v95 = vld [vmem:[%s1 + $0x238] sm:$0xff]
  %v96 = vld [vmem:[%s1 + $0x240] sm:$0xff]
  %v97 = vld [vmem:[%s1 + $0x248] sm:$0xff]
  %v98 = vld [vmem:[%s1 + $0x250] sm:$0xff]
  %v99 = vld [vmem:[%s1 + $0x258] sm:$0xff]
  %v100 = vld [vmem:[%s1 + $0x260] sm:$0xff]
  %v101 = vld [vmem:[%s1 + $0x268] sm:$0xff]
  %v102 = vld [vmem:[%s1 + $0x270] sm:$0xff]
  %v103 = vld [vmem:[%s1 + $0x278] sm:$0xff]
  %v104 = vld [vmem:[%s1 + $0x280] sm:$0xff]
  %v105 = vld [vmem:[%s1 + $0x288] sm:$0xff]
  %v106 = vld [vmem:[%s1 + $0x290] sm:$0xff]
  %v107 = vld [vmem:[%s1 + $0x298] sm:$0xff]
  %v108 = vld [vmem:[%s1 + $0x2a0] sm:$0xff]
  %v109 = vld [vmem:[%s1 + $0x2a8] sm:$0xff]
  %v110 = vld [vmem:[%s1 + $0x2b0] sm:$0xff]
  %v111 = vld [vmem:[%s1 + $0x2b8] sm:$0xff]
  %v112 = vld [vmem:[%s1 + $0x2c0] sm:$0xff]
  %v113 = vld [vmem:[%s1 + $0x2c8] sm:$0xff]
  %v114 = vld [vmem:[%s1 + $0x2d0] sm:$0xff]
  %v115 = vld [vmem:[%s1 + $0x2d8] sm:$0xff]
  %v116 = vld [vmem:[%s1 + $0x2e0] sm:$0xff]
  %v117 = vld [vmem:[%s1 + $0x2e8] sm:$0xff]
  %v118 = vld [vmem:[%s1 + $0x2f0] sm:$0xff]
  %v119 = vld [vmem:[%s1 + $0x2f8] sm:$0xff]
  %v120 = vld [vmem:[%s1 + $0x300] sm:$0xff]
  %v121 = vld [vmem:[%s1 + $0x308] sm:$0xff]
  %v122 = vld [vmem:[%s1 + $0x310] sm:$0xff]
  %v123 = vld [vmem:[%s1 + $0x318] sm:$0xff]
  %v124 = vld [vmem:[%s1 + $0x320] sm:$0xff]
  %v125 = vld [vmem:[%s1 + $0x328] sm:$0xff]
  %v126 = vld [vmem:[%s1 + $0x330] sm:$0xff]
  %v127 = vld [vmem:[%s1 + $0x338] sm:$0xff]
  %v128 = vld [vmem:[%s1 + $0x340] sm:$0xff]
  %v129 = vld [vmem:[%s1 + $0x348] sm:$0xff]
  %v130 = vld [vmem:[%s1 + $0x350] sm:$0xff]
  %v131 = vld [vmem:[%s1 + $0x358] sm:$0xff]
  %v132 = vld [vmem:[%s1 + $0x360] sm:$0xff]
  %v133 = vld [vmem:[%s1 + $0x368] sm:$0xff]
  %v134 = vld [vmem:[%s1 + $0x370] sm:$0xff]
  %v135 = vld [vmem:[%s1 + $0x378] sm:$0xff]
  %v136 = vld [vmem:[%s1 + $0x380] sm:$0xff]
  %v137 = vld [vmem:[%s1 + $0x388] sm:$0xff]
  %v138 = vld [vmem:[%s1 + $0x390] sm:$0xff]
  %v139 = vld [vmem:[%s1 + $0x398] sm:$0xff]
  %v140 = vld [vmem:[%s1 + $0x3a0] sm:$0xff]
  %v141 = vld [vmem:[%s1 + $0x3a8] sm:$0xff]
  %v142 = vld [vmem:[%s1 + $0x3b0] sm:$0xff]
  %v143 = vld [vmem:[%s1 + $0x3b8] sm:$0xff]
  %v144 = vld [vmem:[%s1 + $0x3c0] sm:$0xff]
  %v145 = vld [vmem:[%s1 + $0x3c8] sm:$0xff]
  %v146 = vld [vmem:[%s1 + $0x3d0] sm:$0xff]
  %v147 = vld [vmem:[%s1 + $0x3d8] sm:$0xff]
  %v148 = vld [vmem:[%s1 + $0x3e0] sm:$0xff]
  %v149 = vld [vmem:[%s1 + $0x3e8] sm:$0xff]
  %v150 = vld [vmem:[%s1 + $0x3f0] sm:$0xff]
  %v151 = vld [vmem:[%s1 + $0x3f8] sm:$0xff]
  %v152 = vld [vmem:[%s1 + $0x400] sm:$0xff]
  %v153 = vld [vmem:[%s1 + $0x408] sm:$0xff]
  %v154 = vld [vmem:[%s1 + $0x410] sm:$0xff]
  %v155 = vld [vmem:[%s1 + $0x418] sm:$0xff]
  %v156 = vld [vmem:[%s1 + $0x420] sm:$0xff]
  %v157 = vld [vmem:[%s1 + $0x428] sm:$0xff]
  %v158 = vld [vmem:[%s1 + $0x430] sm:$0xff]
  %v159 = vld [vmem:[%s1 + $0x438] sm:$0xff]
  %v160 = vld [vmem:[%s1 + $0x440] sm:$0xff]
  %v161 = vld [vmem:[%s1 + $0x448] sm:$0xff]
  %v162 = vld [vmem:[%s1 + $0x450] sm:$0xff]
  %v163 = vld [vmem:[%s1 + $0x458] sm:$0xff]
  %v164 = vld [vmem:[%s1 + $0x460] sm:$0xff]
  %v165 = vld [vmem:[%s1 + $0x468] sm:$0xff]
  %v166 = vld [vmem:[%s1 + $0x470] sm:$0xff]
  %v167 = vld [vmem:[%s1 + $0x478] sm:$0xff]
  %v168 = vld [vmem:[%s2] ss:$2 sm:$0x3f]
  %v170 = vlaneseq
  %v171 = vshrl.u32 %v170, 7
  %v172 = vsub.s32 0, %v171
  %v173 = vrot.slane %v168, %v172
  %v174 = vlaneseq
  %v175 = vshrl.u32 %v174, 7
  %v176 = vsub.s32 1, %v175
  %v177 = vrot.slane %v168, %v176
  %v178 = vlaneseq
  %v179 = vshrl.u32 %v178, 7
  %v180 = vsub.s32 2, %v179
  %v181 = vrot.slane %v168, %v180
  %v182 = vlaneseq
  %v183 = vshrl.u32 %v182, 7
  %v184 = vsub.s32 3, %v183
  %v185 = vrot.slane %v168, %v184
  %v186 = vlaneseq
  %v187 = vshrl.u32 %v186, 7
  %v188 = vsub.s32 4, %v187
  %v189 = vrot.slane %v168, %v188
  %v190 = vlaneseq
  %v191 = vshrl.u32 %v190, 7
  %v192 = vsub.s32 5, %v191
  %v193 = vrot.slane %v168, %v192
  %v344 = vunpack.c.l.b16 %v24
  %v345 = vunpack.c.h.b16 %v24
  %v346 = vunpack.c.l.b16 %v25
  %v347 = vunpack.c.h.b16 %v25
  %v348 = vunpack.c.l.b16 %v26
  %v349 = vunpack.c.h.b16 %v26
  %v350 = vunpack.c.l.b16 %v27
  %v351 = vunpack.c.h.b16 %v27
  %v352 = vunpack.c.l.b16 %v28
  %v353 = vunpack.c.h.b16 %v28
  %v354 = vunpack.c.l.b16 %v29
  %v355 = vunpack.c.h.b16 %v29
  %v356 = vunpack.c.l.b16 %v30
  %v357 = vunpack.c.h.b16 %v30
  %v358 = vunpack.c.l.b16 %v31
  %v359 = vunpack.c.h.b16 %v31
  %v360 = vunpack.c.l.b16 %v32
  %v361 = vunpack.c.h.b16 %v32
  %v362 = vunpack.c.l.b16 %v33
  %v363 = vunpack.c.h.b16 %v33
  %v364 = vunpack.c.l.b16 %v34
  %v365 = vunpack.c.h.b16 %v34
  %v366 = vunpack.c.l.b16 %v35
  %v367 = vunpack.c.h.b16 %v35
  %v368 = vunpack.c.l.b16 %v36
  %v369 = vunpack.c.h.b16 %v36
  %v370 = vunpack.c.l.b16 %v37
  %v371 = vunpack.c.h.b16 %v37
  %v372 = vunpack.c.l.b16 %v38
  %v373 = vunpack.c.h.b16 %v38
  %v374 = vunpack.c.l.b16 %v39
  %v375 = vunpack.c.h.b16 %v39
  %v376 = vunpack.c.l.b16 %v40
  %v377 = vunpack.c.h.b16 %v40
  %v378 = vunpack.c.l.b16 %v41
  %v379 = vunpack.c.h.b16 %v41
  %v380 = vunpack.c.l.b16 %v42
  %v381 = vunpack.c.h.b16 %v42
  %v382 = vunpack.c.l.b16 %v43
  %v383 = vunpack.c.h.b16 %v43
  %v384 = vunpack.c.l.b16 %v44
  %v385 = vunpack.c.h.b16 %v44
  %v386 = vunpack.c.l.b16 %v45
  %v387 = vunpack.c.h.b16 %v45
  %v388 = vunpack.c.l.b16 %v46
  %v389 = vunpack.c.h.b16 %v46
  %v390 = vunpack.c.l.b16 %v47
  %v391 = vunpack.c.h.b16 %v47
  %v392 = vunpack.c.l.b16 %v48
  %v393 = vunpack.c.h.b16 %v48
  %v394 = vunpack.c.l.b16 %v49
  %v395 = vunpack.c.h.b16 %v49
  %v396 = vunpack.c.l.b16 %v50
  %v397 = vunpack.c.h.b16 %v50
  %v398 = vunpack.c.l.b16 %v51
  %v399 = vunpack.c.h.b16 %v51
  %v400 = vunpack.c.l.b16 %v52
  %v401 = vunpack.c.h.b16 %v52
  %v402 = vunpack.c.l.b16 %v53
  %v403 = vunpack.c.h.b16 %v53
  %v404 = vunpack.c.l.b16 %v54
  %v405 = vunpack.c.h.b16 %v54
  %v406 = vunpack.c.l.b16 %v55
  %v407 = vunpack.c.h.b16 %v55
  %v408 = vunpack.c.l.b16 %v56
  %v409 = vunpack.c.h.b16 %v56
  %v410 = vunpack.c.l.b16 %v57
  %v411 = vunpack.c.h.b16 %v57
  %v412 = vunpack.c.l.b16 %v58
  %v413 = vunpack.c.h.b16 %v58
  %v414 = vunpack.c.l.b16 %v59
  %v415 = vunpack.c.h.b16 %v59
  %v416 = vunpack.c.l.b16 %v60
  %v417 = vunpack.c.h.b16 %v60
  %v418 = vunpack.c.l.b16 %v61
  %v419 = vunpack.c.h.b16 %v61
  %v420 = vunpack.c.l.b16 %v62
  %v421 = vunpack.c.h.b16 %v62
  %v422 = vunpack.c.l.b16 %v63
  %v423 = vunpack.c.h.b16 %v63
  %v424 = vunpack.c.l.b16 %v64
  %v425 = vunpack.c.h.b16 %v64
  %v426 = vunpack.c.l.b16 %v65
  %v427 = vunpack.c.h.b16 %v65
  %v428 = vunpack.c.l.b16 %v66
  %v429 = vunpack.c.h.b16 %v66
  %v430 = vunpack.c.l.b16 %v67
  %v431 = vunpack.c.h.b16 %v67
  %v432 = vunpack.c.l.b16 %v68
  %v433 = vunpack.c.h.b16 %v68
  %v434 = vunpack.c.l.b16 %v69
  %v435 = vunpack.c.h.b16 %v69
  %v436 = vunpack.c.l.b16 %v70
  %v437 = vunpack.c.h.b16 %v70
  %v438 = vunpack.c.l.b16 %v71
  %v439 = vunpack.c.h.b16 %v71
  %v440 = vunpack.c.l.b16 %v72
  %v441 = vunpack.c.h.b16 %v72
  %v442 = vunpack.c.l.b16 %v73
  %v443 = vunpack.c.h.b16 %v73
  %v444 = vunpack.c.l.b16 %v74
  %v445 = vunpack.c.h.b16 %v74
  %v446 = vunpack.c.l.b16 %v75
  %v447 = vunpack.c.h.b16 %v75
  %v448 = vunpack.c.l.b16 %v76
  %v449 = vunpack.c.h.b16 %v76
  %v450 = vunpack.c.l.b16 %v77
  %v451 = vunpack.c.h.b16 %v77
  %v452 = vunpack.c.l.b16 %v78
  %v453 = vunpack.c.h.b16 %v78
  %v454 = vunpack.c.l.b16 %v79
  %v455 = vunpack.c.h.b16 %v79
  %v456 = vunpack.c.l.b16 %v80
  %v457 = vunpack.c.h.b16 %v80
  %v458 = vunpack.c.l.b16 %v81
  %v459 = vunpack.c.h.b16 %v81
  %v460 = vunpack.c.l.b16 %v82
  %v461 = vunpack.c.h.b16 %v82
  %v462 = vunpack.c.l.b16 %v83
  %v463 = vunpack.c.h.b16 %v83
  %v464 = vunpack.c.l.b16 %v84
  %v465 = vunpack.c.h.b16 %v84
  %v466 = vunpack.c.l.b16 %v85
  %v467 = vunpack.c.h.b16 %v85
  %v468 = vunpack.c.l.b16 %v86
  %v469 = vunpack.c.h.b16 %v86
  %v470 = vunpack.c.l.b16 %v87
  %v471 = vunpack.c.h.b16 %v87
  %v472 = vunpack.c.l.b16 %v88
  %v473 = vunpack.c.h.b16 %v88
  %v474 = vunpack.c.l.b16 %v89
  %v475 = vunpack.c.h.b16 %v89
  %v476 = vunpack.c.l.b16 %v90
  %v477 = vunpack.c.h.b16 %v90
  %v478 = vunpack.c.l.b16 %v91
  %v479 = vunpack.c.h.b16 %v91
  %v480 = vunpack.c.l.b16 %v92
  %v481 = vunpack.c.h.b16 %v92
  %v482 = vunpack.c.l.b16 %v93
  %v483 = vunpack.c.h.b16 %v93
  %v484 = vunpack.c.l.b16 %v94
  %v485 = vunpack.c.h.b16 %v94
  %v486 = vunpack.c.l.b16 %v95
  %v487 = vunpack.c.h.b16 %v95
  %v488 = vunpack.c.l.b16 %v96
  %v489 = vunpack.c.h.b16 %v96
  %v490 = vunpack.c.l.b16 %v97
  %v491 = vunpack.c.h.b16 %v97
  %v492 = vunpack.c.l.b16 %v98
  %v493 = vunpack.c.h.b16 %v98
  %v494 = vunpack.c.l.b16 %v99
  %v495 = vunpack.c.h.b16 %v99
  %v496 = vunpack.c.l.b16 %v100
  %v497 = vunpack.c.h.b16 %v100
  %v498 = vunpack.c.l.b16 %v101
  %v499 = vunpack.c.h.b16 %v101
  %v500 = vunpack.c.l.b16 %v102
  %v501 = vunpack.c.h.b16 %v102
  %v502 = vunpack.c.l.b16 %v103
  %v503 = vunpack.c.h.b16 %v103
  %v504 = vunpack.c.l.b16 %v104
  %v505 = vunpack.c.h.b16 %v104
  %v506 = vunpack.c.l.b16 %v105
  %v507 = vunpack.c.h.b16 %v105
  %v508 = vunpack.c.l.b16 %v106
  %v509 = vunpack.c.h.b16 %v106
  %v510 = vunpack.c.l.b16 %v107
  %v511 = vunpack.c.h.b16 %v107
  %v512 = vunpack.c.l.b16 %v108
  %v513 = vunpack.c.h.b16 %v108
  %v514 = vunpack.c.l.b16 %v109
  %v515 = vunpack.c.h.b16 %v109
  %v516 = vunpack.c.l.b16 %v110
  %v517 = vunpack.c.h.b16 %v110
  %v518 = vunpack.c.l.b16 %v111
  %v519 = vunpack.c.h.b16 %v111
  %v520 = vunpack.c.l.b16 %v112
  %v521 = vunpack.c.h.b16 %v112
  %v522 = vunpack.c.l.b16 %v113
  %v523 = vunpack.c.h.b16 %v113
  %v524 = vunpack.c.l.b16 %v114
  %v525 = vunpack.c.h.b16 %v114
  %v526 = vunpack.c.l.b16 %v115
  %v527 = vunpack.c.h.b16 %v115
  %v528 = vunpack.c.l.b16 %v116
  %v529 = vunpack.c.h.b16 %v116
  %v530 = vunpack.c.l.b16 %v117
  %v531 = vunpack.c.h.b16 %v117
  %v532 = vunpack.c.l.b16 %v118
  %v533 = vunpack.c.h.b16 %v118
  %v534 = vunpack.c.l.b16 %v119
  %v535 = vunpack.c.h.b16 %v119
  %v536 = vunpack.c.l.b16 %v120
  %v537 = vunpack.c.h.b16 %v120
  %v538 = vunpack.c.l.b16 %v121
  %v539 = vunpack.c.h.b16 %v121
  %v540 = vunpack.c.l.b16 %v122
  %v541 = vunpack.c.h.b16 %v122
  %v542 = vunpack.c.l.b16 %v123
  %v543 = vunpack.c.h.b16 %v123
  %v544 = vunpack.c.l.b16 %v124
  %v545 = vunpack.c.h.b16 %v124
  %v546 = vunpack.c.l.b16 %v125
  %v547 = vunpack.c.h.b16 %v125
  %v548 = vunpack.c.l.b16 %v126
  %v549 = vunpack.c.h.b16 %v126
  %v550 = vunpack.c.l.b16 %v127
  %v551 = vunpack.c.h.b16 %v127
  %v552 = vunpack.c.l.b16 %v128
  %v553 = vunpack.c.h.b16 %v128
  %v554 = vunpack.c.l.b16 %v129
  %v555 = vunpack.c.h.b16 %v129
  %v556 = vunpack.c.l.b16 %v130
  %v557 = vunpack.c.h.b16 %v130
  %v558 = vunpack.c.l.b16 %v131
  %v559 = vunpack.c.h.b16 %v131
  %v560 = vunpack.c.l.b16 %v132
  %v561 = vunpack.c.h.b16 %v132
  %v562 = vunpack.c.l.b16 %v133
  %v563 = vunpack.c.h.b16 %v133
  %v564 = vunpack.c.l.b16 %v134
  %v565 = vunpack.c.h.b16 %v134
  %v566 = vunpack.c.l.b16 %v135
  %v567 = vunpack.c.h.b16 %v135
  %v568 = vunpack.c.l.b16 %v136
  %v569 = vunpack.c.h.b16 %v136
  %v570 = vunpack.c.l.b16 %v137
  %v571 = vunpack.c.h.b16 %v137
  %v572 = vunpack.c.l.b16 %v138
  %v573 = vunpack.c.h.b16 %v138
  %v574 = vunpack.c.l.b16 %v139
  %v575 = vunpack.c.h.b16 %v139
  %v576 = vunpack.c.l.b16 %v140
  %v577 = vunpack.c.h.b16 %v140
  %v578 = vunpack.c.l.b16 %v141
  %v579 = vunpack.c.h.b16 %v141
  %v580 = vunpack.c.l.b16 %v142
  %v581 = vunpack.c.h.b16 %v142
  %v582 = vunpack.c.l.b16 %v143
  %v583 = vunpack.c.h.b16 %v143
  %v584 = vunpack.c.l.b16 %v144
  %v585 = vunpack.c.h.b16 %v144
  %v586 = vunpack.c.l.b16 %v145
  %v587 = vunpack.c.h.b16 %v145
  %v588 = vunpack.c.l.b16 %v146
  %v589 = vunpack.c.h.b16 %v146
  %v590 = vunpack.c.l.b16 %v147
  %v591 = vunpack.c.h.b16 %v147
  %v592 = vunpack.c.l.b16 %v148
  %v593 = vunpack.c.h.b16 %v148
  %v594 = vunpack.c.l.b16 %v149
  %v595 = vunpack.c.h.b16 %v149
  %v596 = vunpack.c.l.b16 %v150
  %v597 = vunpack.c.h.b16 %v150
  %v598 = vunpack.c.l.b16 %v151
  %v599 = vunpack.c.h.b16 %v151
  %v600 = vunpack.c.l.b16 %v152
  %v601 = vunpack.c.h.b16 %v152
  %v602 = vunpack.c.l.b16 %v153
  %v603 = vunpack.c.h.b16 %v153
  %v604 = vunpack.c.l.b16 %v154
  %v605 = vunpack.c.h.b16 %v154
  %v606 = vunpack.c.l.b16 %v155
  %v607 = vunpack.c.h.b16 %v155
  %v608 = vunpack.c.l.b16 %v156
  %v609 = vunpack.c.h.b16 %v156
  %v610 = vunpack.c.l.b16 %v157
  %v611 = vunpack.c.h.b16 %v157
  %v612 = vunpack.c.l.b16 %v158
  %v613 = vunpack.c.h.b16 %v158
  %v614 = vunpack.c.l.b16 %v159
  %v615 = vunpack.c.h.b16 %v159
  %v616 = vunpack.c.l.b16 %v160
  %v617 = vunpack.c.h.b16 %v160
  %v618 = vunpack.c.l.b16 %v161
  %v619 = vunpack.c.h.b16 %v161
  %v620 = vunpack.c.l.b16 %v162
  %v621 = vunpack.c.h.b16 %v162
  %v622 = vunpack.c.l.b16 %v163
  %v623 = vunpack.c.h.b16 %v163
  %v624 = vunpack.c.l.b16 %v164
  %v625 = vunpack.c.h.b16 %v164
  %v626 = vunpack.c.l.b16 %v165
  %v627 = vunpack.c.h.b16 %v165
  %v628 = vunpack.c.l.b16 %v166
  %v629 = vunpack.c.h.b16 %v166
  %v630 = vunpack.c.l.b16 %v167
  %v631 = vunpack.c.h.b16 %v167
  %v632 = vpack.c.b16 %v350, %v344
  %v633 = vpack.c.b16 %v351, %v345
  %v634 = vpack.c.b16 %v352, %v346
  %v635 = vpack.c.b16 %v353, %v347
  %v636 = vpack.c.b16 %v354, %v348
  %v637 = vpack.c.b16 %v355, %v349
  %v638 = vpack.c.b16 %v362, %v356
  %v639 = vpack.c.b16 %v363, %v357
  %v640 = vpack.c.b16 %v364, %v358
  %v641 = vpack.c.b16 %v365, %v359
  %v642 = vpack.c.b16 %v366, %v360
  %v643 = vpack.c.b16 %v367, %v361
  %v644 = vpack.c.b16 %v374, %v368
  %v645 = vpack.c.b16 %v375, %v369
  %v646 = vpack.c.b16 %v376, %v370
  %v647 = vpack.c.b16 %v377, %v371
  %v648 = vpack.c.b16 %v378, %v372
  %v649 = vpack.c.b16 %v379, %v373
  %v650 = vpack.c.b16 %v386, %v380
  %v651 = vpack.c.b16 %v387, %v381
  %v652 = vpack.c.b16 %v388, %v382
  %v653 = vpack.c.b16 %v389, %v383
  %v654 = vpack.c.b16 %v390, %v384
  %v655 = vpack.c.b16 %v391, %v385
  %v656 = vpack.c.b16 %v398, %v392
  %v657 = vpack.c.b16 %v399, %v393
  %v658 = vpack.c.b16 %v400, %v394
  %v659 = vpack.c.b16 %v401, %v395
  %v660 = vpack.c.b16 %v402, %v396
  %v661 = vpack.c.b16 %v403, %v397
  %v662 = vpack.c.b16 %v410, %v404
  %v663 = vpack.c.b16 %v411, %v405
  %v664 = vpack.c.b16 %v412, %v406
  %v665 = vpack.c.b16 %v413, %v407
  %v666 = vpack.c.b16 %v414, %v408
  %v667 = vpack.c.b16 %v415, %v409
  %v668 = vpack.c.b16 %v422, %v416
  %v669 = vpack.c.b16 %v423, %v417
  %v670 = vpack.c.b16 %v424, %v418
  %v671 = vpack.c.b16 %v425, %v419
  %v672 = vpack.c.b16 %v426, %v420
  %v673 = vpack.c.b16 %v427, %v421
  %v674 = vpack.c.b16 %v434, %v428
  %v675 = vpack.c.b16 %v435, %v429
  %v676 = vpack.c.b16 %v436, %v430
  %v677 = vpack.c.b16 %v437, %v431
  %v678 = vpack.c.b16 %v438, %v432
  %v679 = vpack.c.b16 %v439, %v433
  %v680 = vpack.c.b16 %v446, %v440
  %v681 = vpack.c.b16 %v447, %v441
  %v682 = vpack.c.b16 %v448, %v442
  %v683 = vpack.c.b16 %v449, %v443
  %v684 = vpack.c.b16 %v450, %v444
  %v685 = vpack.c.b16 %v451, %v445
  %v686 = vpack.c.b16 %v458, %v452
  %v687 = vpack.c.b16 %v459, %v453
  %v688 = vpack.c.b16 %v460, %v454
  %v689 = vpack.c.b16 %v461, %v455
  %v690 = vpack.c.b16 %v462, %v456
  %v691 = vpack.c.b16 %v463, %v457
  %v692 = vpack.c.b16 %v470, %v464
  %v693 = vpack.c.b16 %v471, %v465
  %v694 = vpack.c.b16 %v472, %v466
  %v695 = vpack.c.b16 %v473, %v467
  %v696 = vpack.c.b16 %v474, %v468
  %v697 = vpack.c.b16 %v475, %v469
  %v698 = vpack.c.b16 %v482, %v476
  %v699 = vpack.c.b16 %v483, %v477
  %v700 = vpack.c.b16 %v484, %v478
  %v701 = vpack.c.b16 %v485, %v479
  %v702 = vpack.c.b16 %v486, %v480
  %v703 = vpack.c.b16 %v487, %v481
  %v704 = vpack.c.b16 %v494, %v488
  %v705 = vpack.c.b16 %v495, %v489
  %v706 = vpack.c.b16 %v496, %v490
  %v707 = vpack.c.b16 %v497, %v491
  %v708 = vpack.c.b16 %v498, %v492
  %v709 = vpack.c.b16 %v499, %v493
  %v710 = vpack.c.b16 %v506, %v500
  %v711 = vpack.c.b16 %v507, %v501
  %v712 = vpack.c.b16 %v508, %v502
  %v713 = vpack.c.b16 %v509, %v503
  %v714 = vpack.c.b16 %v510, %v504
  %v715 = vpack.c.b16 %v511, %v505
  %v716 = vpack.c.b16 %v518, %v512
  %v717 = vpack.c.b16 %v519, %v513
  %v718 = vpack.c.b16 %v520, %v514
  %v719 = vpack.c.b16 %v521, %v515
  %v720 = vpack.c.b16 %v522, %v516
  %v721 = vpack.c.b16 %v523, %v517
  %v722 = vpack.c.b16 %v530, %v524
  %v723 = vpack.c.b16 %v531, %v525
  %v724 = vpack.c.b16 %v532, %v526
  %v725 = vpack.c.b16 %v533, %v527
  %v726 = vpack.c.b16 %v534, %v528
  %v727 = vpack.c.b16 %v535, %v529
  %v728 = vpack.c.b16 %v542, %v536
  %v729 = vpack.c.b16 %v543, %v537
  %v730 = vpack.c.b16 %v544, %v538
  %v731 = vpack.c.b16 %v545, %v539
  %v732 = vpack.c.b16 %v546, %v540
  %v733 = vpack.c.b16 %v547, %v541
  %v734 = vpack.c.b16 %v554, %v548
  %v735 = vpack.c.b16 %v555, %v549
  %v736 = vpack.c.b16 %v556, %v550
  %v737 = vpack.c.b16 %v557, %v551
  %v738 = vpack.c.b16 %v558, %v552
  %v739 = vpack.c.b16 %v559, %v553
  %v740 = vpack.c.b16 %v566, %v560
  %v741 = vpack.c.b16 %v567, %v561
  %v742 = vpack.c.b16 %v568, %v562
  %v743 = vpack.c.b16 %v569, %v563
  %v744 = vpack.c.b16 %v570, %v564
  %v745 = vpack.c.b16 %v571, %v565
  %v746 = vpack.c.b16 %v578, %v572
  %v747 = vpack.c.b16 %v579, %v573
  %v748 = vpack.c.b16 %v580, %v574
  %v749 = vpack.c.b16 %v581, %v575
  %v750 = vpack.c.b16 %v582, %v576
  %v751 = vpack.c.b16 %v583, %v577
  %v752 = vpack.c.b16 %v590, %v584
  %v753 = vpack.c.b16 %v591, %v585
  %v754 = vpack.c.b16 %v592, %v586
  %v755 = vpack.c.b16 %v593, %v587
  %v756 = vpack.c.b16 %v594, %v588
  %v757 = vpack.c.b16 %v595, %v589
  %v758 = vpack.c.b16 %v602, %v596
  %v759 = vpack.c.b16 %v603, %v597
  %v760 = vpack.c.b16 %v604, %v598
  %v761 = vpack.c.b16 %v605, %v599
  %v762 = vpack.c.b16 %v606, %v600
  %v763 = vpack.c.b16 %v607, %v601
  %v764 = vpack.c.b16 %v614, %v608
  %v765 = vpack.c.b16 %v615, %v609
  %v766 = vpack.c.b16 %v616, %v610
  %v767 = vpack.c.b16 %v617, %v611
  %v768 = vpack.c.b16 %v618, %v612
  %v769 = vpack.c.b16 %v619, %v613
  %v770 = vpack.c.b16 %v626, %v620
  %v771 = vpack.c.b16 %v627, %v621
  %v772 = vpack.c.b16 %v628, %v622
  %v773 = vpack.c.b16 %v629, %v623
  %v774 = vpack.c.b16 %v630, %v624
  %v775 = vpack.c.b16 %v631, %v625
  %920 = vmatprep.subr.bf16.mxu0 %v675
  %921 = vmatpush1.bf16.msra.mxu0 %v674
  %922 = vmatprep.subr.bf16.mxu0 %v669
  %923 = vmatpush1.bf16.msra.mxu0 %v668
  %924 = vmatprep.subr.bf16.mxu0 %v663
  %925 = vmatpush1.bf16.msra.mxu0 %v662
  %926 = vmatprep.subr.bf16.mxu0 %v657
  %927 = vmatpush1.bf16.msra.mxu0 %v656
  %928 = vmatprep.subr.bf16.mxu0 %v651
  %929 = vmatpush1.bf16.msra.mxu0 %v650
  %930 = vmatprep.subr.bf16.mxu0 %v645
  %931 = vmatpush1.bf16.msra.mxu0 %v644
  %932 = vmatprep.subr.bf16.mxu0 %v639
  %933 = vmatpush1.bf16.msra.mxu0 %v638
  %934 = vmatprep.subr.bf16.mxu0 %v633
  %935 = vmatpush1.bf16.msra.mxu0 %v632
  %936 = vmatprep.subr.bf16.mxu0 %v723
  %937 = vmatpush2.bf16.msra.mxu0 %v722
  %938 = vmatprep.subr.bf16.mxu0 %v717
  %939 = vmatpush2.bf16.msra.mxu0 %v716
  %940 = vmatprep.subr.bf16.mxu0 %v711
  %941 = vmatpush2.bf16.msra.mxu0 %v710
  %942 = vmatprep.subr.bf16.mxu0 %v705
  %943 = vmatpush2.bf16.msra.mxu0 %v704
  %944 = vmatprep.subr.bf16.mxu0 %v699
  %945 = vmatpush2.bf16.msra.mxu0 %v698
  %946 = vmatprep.subr.bf16.mxu0 %v693
  %947 = vmatpush2.bf16.msra.mxu0 %v692
  %948 = vmatprep.subr.bf16.mxu0 %v687
  %949 = vmatpush2.bf16.msra.mxu0 %v686
  %950 = vmatprep.subr.bf16.mxu0 %v681
  %951 = vmatpush2.bf16.msra.mxu0 %v680
  %952 = vmatprep.mubr.bf16.mxu0 %v22
  %953 = vmatmul.mubr.bf16.gmra.mxu0 %v21
  %v954 = vpop.f32.mrf.mxu0
  %v955 = vadd.f32 %v173, %v954
  %v956 = vpop.f32.mrf.mxu0
  %v957 = vadd.f32 %v177, %v956
  %v958 = vpop.f32.mrf.mxu0
  %v959 = vadd.f32 %v173, %v958
  %v960 = vpop.f32.mrf.mxu0
  %v961 = vadd.f32 %v177, %v960
  %962 = vdwg.mxu0
  %963 = vmatprep.subr.bf16.mxu0 %v771
  %964 = vmatpush1.bf16.msra.mxu0 %v770
  %965 = vmatprep.subr.bf16.mxu0 %v765
  %966 = vmatpush1.bf16.msra.mxu0 %v764
  %967 = vmatprep.subr.bf16.mxu0 %v759
  %968 = vmatpush1.bf16.msra.mxu0 %v758
  %969 = vmatprep.subr.bf16.mxu0 %v753
  %970 = vmatpush1.bf16.msra.mxu0 %v752
  %971 = vmatprep.subr.bf16.mxu0 %v747
  %972 = vmatpush1.bf16.msra.mxu0 %v746
  %973 = vmatprep.subr.bf16.mxu0 %v741
  %974 = vmatpush1.bf16.msra.mxu0 %v740
  %975 = vmatprep.subr.bf16.mxu0 %v735
  %976 = vmatpush1.bf16.msra.mxu0 %v734
  %977 = vmatprep.subr.bf16.mxu0 %v729
  %978 = vmatpush1.bf16.msra.mxu0 %v728
  %979 = vmatprep.subr.bf16.mxu0 0
  %980 = vmatpush2.bf16.msra.mxu0 0
  %981 = vmatprep.subr.bf16.mxu0 0
  %982 = vmatpush2.bf16.msra.mxu0 0
  %983 = vmatprep.subr.bf16.mxu0 0
  %984 = vmatpush2.bf16.msra.mxu0 0
  %985 = vmatprep.subr.bf16.mxu0 0
  %986 = vmatpush2.bf16.msra.mxu0 0
  %987 = vmatprep.subr.bf16.mxu0 0
  %988 = vmatpush2.bf16.msra.mxu0 0
  %989 = vmatprep.subr.bf16.mxu0 0
  %990 = vmatpush2.bf16.msra.mxu0 0
  %991 = vmatprep.subr.bf16.mxu0 0
  %992 = vmatpush2.bf16.msra.mxu0 0
  %993 = vmatprep.subr.bf16.mxu0 0
  %994 = vmatpush2.bf16.msra.mxu0 0
  %995 = vmatprep.mubr.bf16.mxu0 0
  %996 = vmatmul.mubr.bf16.gmra.mxu0 %v23
  %v997 = vpop.f32.mrf.mxu0
  %v998 = vadd.f32 %v955, %v997
  %v999 = vpop.f32.mrf.mxu0
  %v1000 = vadd.f32 %v957, %v999
  %v1001 = vpop.f32.mrf.mxu0
  %v1002 = vadd.f32 %v959, %v1001
  %v1003 = vpop.f32.mrf.mxu0
  %v1004 = vadd.f32 %v961, %v1003
  %1005 = vdwg.mxu0
  %1006 = vmatprep.subr.bf16.mxu0 %v677
  %1007 = vmatpush1.bf16.msra.mxu0 %v676
  %1008 = vmatprep.subr.bf16.mxu0 %v671
  %1009 = vmatpush1.bf16.msra.mxu0 %v670
  %1010 = vmatprep.subr.bf16.mxu0 %v665
  %1011 = vmatpush1.bf16.msra.mxu0 %v664
  %1012 = vmatprep.subr.bf16.mxu0 %v659
  %1013 = vmatpush1.bf16.msra.mxu0 %v658
  %1014 = vmatprep.subr.bf16.mxu0 %v653
  %1015 = vmatpush1.bf16.msra.mxu0 %v652
  %1016 = vmatprep.subr.bf16.mxu0 %v647
  %1017 = vmatpush1.bf16.msra.mxu0 %v646
  %1018 = vmatprep.subr.bf16.mxu0 %v641
  %1019 = vmatpush1.bf16.msra.mxu0 %v640
  %1020 = vmatprep.subr.bf16.mxu0 %v635
  %1021 = vmatpush1.bf16.msra.mxu0 %v634
  %1022 = vmatprep.subr.bf16.mxu0 %v725
  %1023 = vmatpush2.bf16.msra.mxu0 %v724
  %1024 = vmatprep.subr.bf16.mxu0 %v719
  %1025 = vmatpush2.bf16.msra.mxu0 %v718
  %1026 = vmatprep.subr.bf16.mxu0 %v713
  %1027 = vmatpush2.bf16.msra.mxu0 %v712
  %1028 = vmatprep.subr.bf16.mxu0 %v707
  %1029 = vmatpush2.bf16.msra.mxu0 %v706
  %1030 = vmatprep.subr.bf16.mxu0 %v701
  %1031 = vmatpush2.bf16.msra.mxu0 %v700
  %1032 = vmatprep.subr.bf16.mxu0 %v695
  %1033 = vmatpush2.bf16.msra.mxu0 %v694
  %1034 = vmatprep.subr.bf16.mxu0 %v689
  %1035 = vmatpush2.bf16.msra.mxu0 %v688
  %1036 = vmatprep.subr.bf16.mxu0 %v683
  %1037 = vmatpush2.bf16.msra.mxu0 %v682
  %1038 = vmatprep.mubr.bf16.mxu0 %v22
  %1039 = vmatmul.mubr.bf16.gmra.mxu0 %v21
  %v1040 = vpop.f32.mrf.mxu0
  %v1041 = vadd.f32 %v181, %v1040
  %v1042 = vpop.f32.mrf.mxu0
  %v1043 = vadd.f32 %v185, %v1042
  %v1044 = vpop.f32.mrf.mxu0
  %v1045 = vadd.f32 %v181, %v1044
  %v1046 = vpop.f32.mrf.mxu0
  %v1047 = vadd.f32 %v185, %v1046
  %1048 = vdwg.mxu0
  %1049 = vmatprep.subr.bf16.mxu0 %v773
  %1050 = vmatpush1.bf16.msra.mxu0 %v772
  %1051 = vmatprep.subr.bf16.mxu0 %v767
  %1052 = vmatpush1.bf16.msra.mxu0 %v766
  %1053 = vmatprep.subr.bf16.mxu0 %v761
  %1054 = vmatpush1.bf16.msra.mxu0 %v760
  %1055 = vmatprep.subr.bf16.mxu0 %v755
  %1056 = vmatpush1.bf16.msra.mxu0 %v754
  %1057 = vmatprep.subr.bf16.mxu0 %v749
  %1058 = vmatpush1.bf16.msra.mxu0 %v748
  %1059 = vmatprep.subr.bf16.mxu0 %v743
  %1060 = vmatpush1.bf16.msra.mxu0 %v742
  %1061 = vmatprep.subr.bf16.mxu0 %v737
  %1062 = vmatpush1.bf16.msra.mxu0 %v736
  %1063 = vmatprep.subr.bf16.mxu0 %v731
  %1064 = vmatpush1.bf16.msra.mxu0 %v730
  %1065 = vmatprep.subr.bf16.mxu0 0
  %1066 = vmatpush2.bf16.msra.mxu0 0
  %1067 = vmatprep.subr.bf16.mxu0 0
  %1068 = vmatpush2.bf16.msra.mxu0 0
  %1069 = vmatprep.subr.bf16.mxu0 0
  %1070 = vmatpush2.bf16.msra.mxu0 0
  %1071 = vmatprep.subr.bf16.mxu0 0
  %1072 = vmatpush2.bf16.msra.mxu0 0
  %1073 = vmatprep.subr.bf16.mxu0 0
  %1074 = vmatpush2.bf16.msra.mxu0 0
  %1075 = vmatprep.subr.bf16.mxu0 0
  %1076 = vmatpush2.bf16.msra.mxu0 0
  %1077 = vmatprep.subr.bf16.mxu0 0
  %1078 = vmatpush2.bf16.msra.mxu0 0
  %1079 = vmatprep.subr.bf16.mxu0 0
  %1080 = vmatpush2.bf16.msra.mxu0 0
  %1081 = vmatprep.mubr.bf16.mxu0 0
  %1082 = vmatmul.mubr.bf16.gmra.mxu0 %v23
  %v1083 = vpop.f32.mrf.mxu0
  %v1084 = vadd.f32 %v1041, %v1083
  %v1085 = vpop.f32.mrf.mxu0
  %v1086 = vadd.f32 %v1043, %v1085
  %v1087 = vpop.f32.mrf.mxu0
  %v1088 = vadd.f32 %v1045, %v1087
  %v1089 = vpop.f32.mrf.mxu0
  %v1090 = vadd.f32 %v1047, %v1089
  %1091 = vdwg.mxu0
  %1092 = vmatprep.subr.bf16.mxu0 %v679
  %1093 = vmatpush1.bf16.msra.mxu0 %v678
  %1094 = vmatprep.subr.bf16.mxu0 %v673
  %1095 = vmatpush1.bf16.msra.mxu0 %v672
  %1096 = vmatprep.subr.bf16.mxu0 %v667
  %1097 = vmatpush1.bf16.msra.mxu0 %v666
  %1098 = vmatprep.subr.bf16.mxu0 %v661
  %1099 = vmatpush1.bf16.msra.mxu0 %v660
  %1100 = vmatprep.subr.bf16.mxu0 %v655
  %1101 = vmatpush1.bf16.msra.mxu0 %v654
  %1102 = vmatprep.subr.bf16.mxu0 %v649
  %1103 = vmatpush1.bf16.msra.mxu0 %v648
  %1104 = vmatprep.subr.bf16.mxu0 %v643
  %1105 = vmatpush1.bf16.msra.mxu0 %v642
  %1106 = vmatprep.subr.bf16.mxu0 %v637
  %1107 = vmatpush1.bf16.msra.mxu0 %v636
  %1108 = vmatprep.subr.bf16.mxu0 %v727
  %1109 = vmatpush2.bf16.msra.mxu0 %v726
  %1110 = vmatprep.subr.bf16.mxu0 %v721
  %1111 = vmatpush2.bf16.msra.mxu0 %v720
  %1112 = vmatprep.subr.bf16.mxu0 %v715
  %1113 = vmatpush2.bf16.msra.mxu0 %v714
  %1114 = vmatprep.subr.bf16.mxu0 %v709
  %1115 = vmatpush2.bf16.msra.mxu0 %v708
  %1116 = vmatprep.subr.bf16.mxu0 %v703
  %1117 = vmatpush2.bf16.msra.mxu0 %v702
  %1118 = vmatprep.subr.bf16.mxu0 %v697
  %1119 = vmatpush2.bf16.msra.mxu0 %v696
  %1120 = vmatprep.subr.bf16.mxu0 %v691
  %1121 = vmatpush2.bf16.msra.mxu0 %v690
  %1122 = vmatprep.subr.bf16.mxu0 %v685
  %1123 = vmatpush2.bf16.msra.mxu0 %v684
  %1124 = vmatprep.mubr.bf16.mxu0 %v22
  %1125 = vmatmul.mubr.bf16.gmra.mxu0 %v21
  %v1126 = vpop.f32.mrf.mxu0
  %v1127 = vadd.f32 %v189, %v1126
  %v1128 = vpop.f32.mrf.mxu0
  %v1129 = vadd.f32 %v193, %v1128
  %v1130 = vpop.f32.mrf.mxu0
  %v1131 = vadd.f32 %v189, %v1130
  %v1132 = vpop.f32.mrf.mxu0
  %v1133 = vadd.f32 %v193, %v1132
  %1134 = vdwg.mxu0
  %1135 = vmatprep.subr.bf16.mxu0 %v775
  %1136 = vmatpush1.bf16.msra.mxu0 %v774
  %1137 = vmatprep.subr.bf16.mxu0 %v769
  %1138 = vmatpush1.bf16.msra.mxu0 %v768
  %1139 = vmatprep.subr.bf16.mxu0 %v763
  %1140 = vmatpush1.bf16.msra.mxu0 %v762
  %1141 = vmatprep.subr.bf16.mxu0 %v757
  %1142 = vmatpush1.bf16.msra.mxu0 %v756
  %1143 = vmatprep.subr.bf16.mxu0 %v751
  %1144 = vmatpush1.bf16.msra.mxu0 %v750
  %1145 = vmatprep.subr.bf16.mxu0 %v745
  %1146 = vmatpush1.bf16.msra.mxu0 %v744
  %1147 = vmatprep.subr.bf16.mxu0 %v739
  %1148 = vmatpush1.bf16.msra.mxu0 %v738
  %1149 = vmatprep.subr.bf16.mxu0 %v733
  %1150 = vmatpush1.bf16.msra.mxu0 %v732
  %1151 = vmatprep.subr.bf16.mxu0 0
  %1152 = vmatpush2.bf16.msra.mxu0 0
  %1153 = vmatprep.subr.bf16.mxu0 0
  %1154 = vmatpush2.bf16.msra.mxu0 0
  %1155 = vmatprep.subr.bf16.mxu0 0
  %1156 = vmatpush2.bf16.msra.mxu0 0
  %1157 = vmatprep.subr.bf16.mxu0 0
  %1158 = vmatpush2.bf16.msra.mxu0 0
  %1159 = vmatprep.subr.bf16.mxu0 0
  %1160 = vmatpush2.bf16.msra.mxu0 0
  %1161 = vmatprep.subr.bf16.mxu0 0
  %1162 = vmatpush2.bf16.msra.mxu0 0
  %1163 = vmatprep.subr.bf16.mxu0 0
  %1164 = vmatpush2.bf16.msra.mxu0 0
  %1165 = vmatprep.subr.bf16.mxu0 0
  %1166 = vmatpush2.bf16.msra.mxu0 0
  %1167 = vmatprep.mubr.bf16.mxu0 0
  %1168 = vmatmul.mubr.bf16.gmra.mxu0 %v23
  %v1169 = vpop.f32.mrf.mxu0
  %v1170 = vadd.f32 %v1127, %v1169
  %v1171 = vpop.f32.mrf.mxu0
  %v1172 = vadd.f32 %v1129, %v1171
  %v1173 = vpop.f32.mrf.mxu0
  %v1174 = vadd.f32 %v1131, %v1173
  %v1175 = vpop.f32.mrf.mxu0
  %v1176 = vadd.f32 %v1133, %v1175
  %1177 = vdwg.mxu0
  %v1178 = vxor.u32 %v998, 2147483648
  %v1179 = vxor.u32 %v1000, 2147483648
  %v1180 = vxor.u32 %v1084, 2147483648
  %v1181 = vxor.u32 %v1002, 2147483648
  %v1182 = vxor.u32 %v1004, 2147483648
  %v1183 = vxor.u32 %v1088, 2147483648
  %v1184 = vmul.f32 %v1178, 1.442695
  %v1185 = vpow.pop %v1184
  %v1186 = vmul.f32 %v1179, 1.442695
  %v1187 = vpow.pop %v1186
  %v1188 = vmul.f32 %v1180, 1.442695
  %v1189 = vpow.pop %v1188
  %v1190 = vmul.f32 %v1181, 1.442695
  %v1191 = vpow.pop %v1190
  %v1192 = vmul.f32 %v1182, 1.442695
  %v1193 = vpow.pop %v1192
  %v1194 = vmul.f32 %v1183, 1.442695
  %v1195 = vpow.pop %v1194
  %v1196 = vadd.f32 %v1185, 1.0
  %v1197 = vadd.f32 %v1187, 1.0
  %v1198 = vadd.f32 %v1189, 1.0
  %v1199 = vadd.f32 %v1191, 1.0
  %v1200 = vadd.f32 %v1193, 1.0
  %v1201 = vadd.f32 %v1195, 1.0
  %v1202 = vrcp.pop %v1196
  %v1203 = vmul.f32 1.0, %v1202
  %v1204 = vrcp.pop %v1197
  %v1205 = vmul.f32 1.0, %v1204
  %v1206 = vrcp.pop %v1198
  %v1207 = vmul.f32 1.0, %v1206
  %v1208 = vrcp.pop %v1199
  %v1209 = vmul.f32 1.0, %v1208
  %v1210 = vrcp.pop %v1200
  %v1211 = vmul.f32 1.0, %v1210
  %v1212 = vrcp.pop %v1201
  %v1213 = vmul.f32 1.0, %v1212
  %v1214 = vmax.f32 %v1086, 0.0
  %v1215 = vmax.f32 %v1170, 0.0
  %v1216 = vmax.f32 %v1172, 0.0
  %v1217 = vmax.f32 %v1090, 0.0
  %v1218 = vmax.f32 %v1174, 0.0
  %v1219 = vmax.f32 %v1176, 0.0
  %v1220 = vsub.f32 %v1214, %v15
  %v1221 = vsub.f32 %v1215, %v16
  %v1222 = vsub.f32 %v1216, %v17
  %v1223 = vsub.f32 %v1217, %v18
  %v1224 = vsub.f32 %v1218, %v19
  %v1225 = vsub.f32 %v1219, %v20
  %v1226 = vmul.f32 %v1203, %v1220
  %v1227 = vmul.f32 %v1205, %v1221
  %v1228 = vmul.f32 %v1207, %v1222
  %v1229 = vmul.f32 %v1209, %v1223
  %v1230 = vmul.f32 %v1211, %v1224
  %v1231 = vmul.f32 %v1213, %v1225
  %v1232 = vadd.f32 %v15, %v1226
  %v1233 = vadd.f32 %v16, %v1227
  %v1234 = vadd.f32 %v17, %v1228
  %v1235 = vadd.f32 %v18, %v1229
  %v1236 = vadd.f32 %v19, %v1230
  %v1237 = vadd.f32 %v20, %v1231
  %v1238 = vpack.c.bf16 %v1235, %v1232
  %v1239 = vpack.c.bf16 %v1236, %v1233
  %v1240 = vpack.c.bf16 %v1237, %v1234
  %s1241 = scalar_lea.vmem %s1, 1152
  %v1242 = vld [vmem:[%s1241] sm:$0xff]
  %v1243 = vld [vmem:[%s1241 + $0x8] sm:$0xff]
  %v1244 = vld [vmem:[%s1241 + $0x10] sm:$0xff]
  %v1245 = vld [vmem:[%s1241 + $0x18] sm:$0xff]
  %v1246 = vld [vmem:[%s1241 + $0x20] sm:$0xff]
  %v1247 = vld [vmem:[%s1241 + $0x28] sm:$0xff]
  %v1248 = vld [vmem:[%s1241 + $0x30] sm:$0xff]
  %v1249 = vld [vmem:[%s1241 + $0x38] sm:$0xff]
  %v1250 = vld [vmem:[%s1241 + $0x40] sm:$0xff]
  %v1251 = vld [vmem:[%s1241 + $0x48] sm:$0xff]
  %v1252 = vld [vmem:[%s1241 + $0x50] sm:$0xff]
  %v1253 = vld [vmem:[%s1241 + $0x58] sm:$0xff]
  %v1254 = vld [vmem:[%s1241 + $0x60] sm:$0xff]
  %v1255 = vld [vmem:[%s1241 + $0x68] sm:$0xff]
  %v1256 = vld [vmem:[%s1241 + $0x70] sm:$0xff]
  %v1257 = vld [vmem:[%s1241 + $0x78] sm:$0xff]
  %v1258 = vld [vmem:[%s1241 + $0x80] sm:$0xff]
  %v1259 = vld [vmem:[%s1241 + $0x88] sm:$0xff]
  %v1260 = vld [vmem:[%s1241 + $0x90] sm:$0xff]
  %v1261 = vld [vmem:[%s1241 + $0x98] sm:$0xff]
  %v1262 = vld [vmem:[%s1241 + $0xa0] sm:$0xff]
  %v1263 = vld [vmem:[%s1241 + $0xa8] sm:$0xff]
  %v1264 = vld [vmem:[%s1241 + $0xb0] sm:$0xff]
  %v1265 = vld [vmem:[%s1241 + $0xb8] sm:$0xff]
  %v1266 = vld [vmem:[%s1241 + $0xc0] sm:$0xff]
  %v1267 = vld [vmem:[%s1241 + $0xc8] sm:$0xff]
  %v1268 = vld [vmem:[%s1241 + $0xd0] sm:$0xff]
  %v1269 = vld [vmem:[%s1241 + $0xd8] sm:$0xff]
  %v1270 = vld [vmem:[%s1241 + $0xe0] sm:$0xff]
  %v1271 = vld [vmem:[%s1241 + $0xe8] sm:$0xff]
  %v1272 = vld [vmem:[%s1241 + $0xf0] sm:$0xff]
  %v1273 = vld [vmem:[%s1241 + $0xf8] sm:$0xff]
  %v1274 = vld [vmem:[%s1241 + $0x100] sm:$0xff]
  %v1275 = vld [vmem:[%s1241 + $0x108] sm:$0xff]
  %v1276 = vld [vmem:[%s1241 + $0x110] sm:$0xff]
  %v1277 = vld [vmem:[%s1241 + $0x118] sm:$0xff]
  %v1278 = vld [vmem:[%s1241 + $0x120] sm:$0xff]
  %v1279 = vld [vmem:[%s1241 + $0x128] sm:$0xff]
  %v1280 = vld [vmem:[%s1241 + $0x130] sm:$0xff]
  %v1281 = vld [vmem:[%s1241 + $0x138] sm:$0xff]
  %v1282 = vld [vmem:[%s1241 + $0x140] sm:$0xff]
  %v1283 = vld [vmem:[%s1241 + $0x148] sm:$0xff]
  %v1284 = vld [vmem:[%s1241 + $0x150] sm:$0xff]
  %v1285 = vld [vmem:[%s1241 + $0x158] sm:$0xff]
  %v1286 = vld [vmem:[%s1241 + $0x160] sm:$0xff]
  %v1287 = vld [vmem:[%s1241 + $0x168] sm:$0xff]
  %v1288 = vld [vmem:[%s1241 + $0x170] sm:$0xff]
  %v1289 = vld [vmem:[%s1241 + $0x178] sm:$0xff]
  %v1290 = vld [vmem:[%s1241 + $0x180] sm:$0xff]
  %v1291 = vld [vmem:[%s1241 + $0x188] sm:$0xff]
  %v1292 = vld [vmem:[%s1241 + $0x190] sm:$0xff]
  %v1293 = vld [vmem:[%s1241 + $0x198] sm:$0xff]
  %v1294 = vld [vmem:[%s1241 + $0x1a0] sm:$0xff]
  %v1295 = vld [vmem:[%s1241 + $0x1a8] sm:$0xff]
  %v1296 = vld [vmem:[%s1241 + $0x1b0] sm:$0xff]
  %v1297 = vld [vmem:[%s1241 + $0x1b8] sm:$0xff]
  %v1298 = vld [vmem:[%s1241 + $0x1c0] sm:$0xff]
  %v1299 = vld [vmem:[%s1241 + $0x1c8] sm:$0xff]
  %v1300 = vld [vmem:[%s1241 + $0x1d0] sm:$0xff]
  %v1301 = vld [vmem:[%s1241 + $0x1d8] sm:$0xff]
  %v1302 = vld [vmem:[%s1241 + $0x1e0] sm:$0xff]
  %v1303 = vld [vmem:[%s1241 + $0x1e8] sm:$0xff]
  %v1304 = vld [vmem:[%s1241 + $0x1f0] sm:$0xff]
  %v1305 = vld [vmem:[%s1241 + $0x1f8] sm:$0xff]
  %v1306 = vld [vmem:[%s1241 + $0x200] sm:$0xff]
  %v1307 = vld [vmem:[%s1241 + $0x208] sm:$0xff]
  %v1308 = vld [vmem:[%s1241 + $0x210] sm:$0xff]
  %v1309 = vld [vmem:[%s1241 + $0x218] sm:$0xff]
  %v1310 = vld [vmem:[%s1241 + $0x220] sm:$0xff]
  %v1311 = vld [vmem:[%s1241 + $0x228] sm:$0xff]
  %v1312 = vld [vmem:[%s1241 + $0x230] sm:$0xff]
  %v1313 = vld [vmem:[%s1241 + $0x238] sm:$0xff]
  %v1314 = vld [vmem:[%s1241 + $0x240] sm:$0xff]
  %v1315 = vld [vmem:[%s1241 + $0x248] sm:$0xff]
  %v1316 = vld [vmem:[%s1241 + $0x250] sm:$0xff]
  %v1317 = vld [vmem:[%s1241 + $0x258] sm:$0xff]
  %v1318 = vld [vmem:[%s1241 + $0x260] sm:$0xff]
  %v1319 = vld [vmem:[%s1241 + $0x268] sm:$0xff]
  %v1320 = vld [vmem:[%s1241 + $0x270] sm:$0xff]
  %v1321 = vld [vmem:[%s1241 + $0x278] sm:$0xff]
  %v1322 = vld [vmem:[%s1241 + $0x280] sm:$0xff]
  %v1323 = vld [vmem:[%s1241 + $0x288] sm:$0xff]
  %v1324 = vld [vmem:[%s1241 + $0x290] sm:$0xff]
  %v1325 = vld [vmem:[%s1241 + $0x298] sm:$0xff]
  %v1326 = vld [vmem:[%s1241 + $0x2a0] sm:$0xff]
  %v1327 = vld [vmem:[%s1241 + $0x2a8] sm:$0xff]
  %v1328 = vld [vmem:[%s1241 + $0x2b0] sm:$0xff]
  %v1329 = vld [vmem:[%s1241 + $0x2b8] sm:$0xff]
  %v1330 = vld [vmem:[%s1241 + $0x2c0] sm:$0xff]
  %v1331 = vld [vmem:[%s1241 + $0x2c8] sm:$0xff]
  %v1332 = vld [vmem:[%s1241 + $0x2d0] sm:$0xff]
  %v1333 = vld [vmem:[%s1241 + $0x2d8] sm:$0xff]
  %v1334 = vld [vmem:[%s1241 + $0x2e0] sm:$0xff]
  %v1335 = vld [vmem:[%s1241 + $0x2e8] sm:$0xff]
  %v1336 = vld [vmem:[%s1241 + $0x2f0] sm:$0xff]
  %v1337 = vld [vmem:[%s1241 + $0x2f8] sm:$0xff]
  %v1338 = vld [vmem:[%s1241 + $0x300] sm:$0xff]
  %v1339 = vld [vmem:[%s1241 + $0x308] sm:$0xff]
  %v1340 = vld [vmem:[%s1241 + $0x310] sm:$0xff]
  %v1341 = vld [vmem:[%s1241 + $0x318] sm:$0xff]
  %v1342 = vld [vmem:[%s1241 + $0x320] sm:$0xff]
  %v1343 = vld [vmem:[%s1241 + $0x328] sm:$0xff]
  %v1344 = vld [vmem:[%s1241 + $0x330] sm:$0xff]
  %v1345 = vld [vmem:[%s1241 + $0x338] sm:$0xff]
  %v1346 = vld [vmem:[%s1241 + $0x340] sm:$0xff]
  %v1347 = vld [vmem:[%s1241 + $0x348] sm:$0xff]
  %v1348 = vld [vmem:[%s1241 + $0x350] sm:$0xff]
  %v1349 = vld [vmem:[%s1241 + $0x358] sm:$0xff]
  %v1350 = vld [vmem:[%s1241 + $0x360] sm:$0xff]
  %v1351 = vld [vmem:[%s1241 + $0x368] sm:$0xff]
  %v1352 = vld [vmem:[%s1241 + $0x370] sm:$0xff]
  %v1353 = vld [vmem:[%s1241 + $0x378] sm:$0xff]
  %v1354 = vld [vmem:[%s1241 + $0x380] sm:$0xff]
  %v1355 = vld [vmem:[%s1241 + $0x388] sm:$0xff]
  %v1356 = vld [vmem:[%s1241 + $0x390] sm:$0xff]
  %v1357 = vld [vmem:[%s1241 + $0x398] sm:$0xff]
  %v1358 = vld [vmem:[%s1241 + $0x3a0] sm:$0xff]
  %v1359 = vld [vmem:[%s1241 + $0x3a8] sm:$0xff]
  %v1360 = vld [vmem:[%s1241 + $0x3b0] sm:$0xff]
  %v1361 = vld [vmem:[%s1241 + $0x3b8] sm:$0xff]
  %v1362 = vld [vmem:[%s1241 + $0x3c0] sm:$0xff]
  %v1363 = vld [vmem:[%s1241 + $0x3c8] sm:$0xff]
  %v1364 = vld [vmem:[%s1241 + $0x3d0] sm:$0xff]
  %v1365 = vld [vmem:[%s1241 + $0x3d8] sm:$0xff]
  %v1366 = vld [vmem:[%s1241 + $0x3e0] sm:$0xff]
  %v1367 = vld [vmem:[%s1241 + $0x3e8] sm:$0xff]
  %v1368 = vld [vmem:[%s1241 + $0x3f0] sm:$0xff]
  %v1369 = vld [vmem:[%s1241 + $0x3f8] sm:$0xff]
  %v1370 = vld [vmem:[%s1241 + $0x400] sm:$0xff]
  %v1371 = vld [vmem:[%s1241 + $0x408] sm:$0xff]
  %v1372 = vld [vmem:[%s1241 + $0x410] sm:$0xff]
  %v1373 = vld [vmem:[%s1241 + $0x418] sm:$0xff]
  %v1374 = vld [vmem:[%s1241 + $0x420] sm:$0xff]
  %v1375 = vld [vmem:[%s1241 + $0x428] sm:$0xff]
  %v1376 = vld [vmem:[%s1241 + $0x430] sm:$0xff]
  %v1377 = vld [vmem:[%s1241 + $0x438] sm:$0xff]
  %v1378 = vld [vmem:[%s1241 + $0x440] sm:$0xff]
  %v1379 = vld [vmem:[%s1241 + $0x448] sm:$0xff]
  %v1380 = vld [vmem:[%s1241 + $0x450] sm:$0xff]
  %v1381 = vld [vmem:[%s1241 + $0x458] sm:$0xff]
  %v1382 = vld [vmem:[%s1241 + $0x460] sm:$0xff]
  %v1383 = vld [vmem:[%s1241 + $0x468] sm:$0xff]
  %v1384 = vld [vmem:[%s1241 + $0x470] sm:$0xff]
  %v1385 = vld [vmem:[%s1241 + $0x478] sm:$0xff]
  %s1386 = scalar_lea.vmem %s2, 1
  %v1387 = vld [vmem:[%s1386] ss:$2 sm:$0x3f]
  %v1389 = vlaneseq
  %v1390 = vshrl.u32 %v1389, 7
  %v1391 = vsub.s32 0, %v1390
  %v1392 = vrot.slane %v1387, %v1391
  %v1393 = vlaneseq
  %v1394 = vshrl.u32 %v1393, 7
  %v1395 = vsub.s32 1, %v1394
  %v1396 = vrot.slane %v1387, %v1395
  %v1397 = vlaneseq
  %v1398 = vshrl.u32 %v1397, 7
  %v1399 = vsub.s32 2, %v1398
  %v1400 = vrot.slane %v1387, %v1399
  %v1401 = vlaneseq
  %v1402 = vshrl.u32 %v1401, 7
  %v1403 = vsub.s32 3, %v1402
  %v1404 = vrot.slane %v1387, %v1403
  %v1405 = vlaneseq
  %v1406 = vshrl.u32 %v1405, 7
  %v1407 = vsub.s32 4, %v1406
  %v1408 = vrot.slane %v1387, %v1407
  %v1409 = vlaneseq
  %v1410 = vshrl.u32 %v1409, 7
  %v1411 = vsub.s32 5, %v1410
  %v1412 = vrot.slane %v1387, %v1411
  %v1563 = vunpack.c.l.b16 %v1242
  %v1564 = vunpack.c.h.b16 %v1242
  %v1565 = vunpack.c.l.b16 %v1243
  %v1566 = vunpack.c.h.b16 %v1243
  %v1567 = vunpack.c.l.b16 %v1244
  %v1568 = vunpack.c.h.b16 %v1244
  %v1569 = vunpack.c.l.b16 %v1245
  %v1570 = vunpack.c.h.b16 %v1245
  %v1571 = vunpack.c.l.b16 %v1246
  %v1572 = vunpack.c.h.b16 %v1246
  %v1573 = vunpack.c.l.b16 %v1247
  %v1574 = vunpack.c.h.b16 %v1247
  %v1575 = vunpack.c.l.b16 %v1248
  %v1576 = vunpack.c.h.b16 %v1248
  %v1577 = vunpack.c.l.b16 %v1249
  %v1578 = vunpack.c.h.b16 %v1249
  %v1579 = vunpack.c.l.b16 %v1250
  %v1580 = vunpack.c.h.b16 %v1250
  %v1581 = vunpack.c.l.b16 %v1251
  %v1582 = vunpack.c.h.b16 %v1251
  %v1583 = vunpack.c.l.b16 %v1252
  %v1584 = vunpack.c.h.b16 %v1252
  %v1585 = vunpack.c.l.b16 %v1253
  %v1586 = vunpack.c.h.b16 %v1253
  %v1587 = vunpack.c.l.b16 %v1254
  %v1588 = vunpack.c.h.b16 %v1254
  %v1589 = vunpack.c.l.b16 %v1255
  %v1590 = vunpack.c.h.b16 %v1255
  %v1591 = vunpack.c.l.b16 %v1256
  %v1592 = vunpack.c.h.b16 %v1256
  %v1593 = vunpack.c.l.b16 %v1257
  %v1594 = vunpack.c.h.b16 %v1257
  %v1595 = vunpack.c.l.b16 %v1258
  %v1596 = vunpack.c.h.b16 %v1258
  %v1597 = vunpack.c.l.b16 %v1259
  %v1598 = vunpack.c.h.b16 %v1259
  %v1599 = vunpack.c.l.b16 %v1260
  %v1600 = vunpack.c.h.b16 %v1260
  %v1601 = vunpack.c.l.b16 %v1261
  %v1602 = vunpack.c.h.b16 %v1261
  %v1603 = vunpack.c.l.b16 %v1262
  %v1604 = vunpack.c.h.b16 %v1262
  %v1605 = vunpack.c.l.b16 %v1263
  %v1606 = vunpack.c.h.b16 %v1263
  %v1607 = vunpack.c.l.b16 %v1264
  %v1608 = vunpack.c.h.b16 %v1264
  %v1609 = vunpack.c.l.b16 %v1265
  %v1610 = vunpack.c.h.b16 %v1265
  %v1611 = vunpack.c.l.b16 %v1266
  %v1612 = vunpack.c.h.b16 %v1266
  %v1613 = vunpack.c.l.b16 %v1267
  %v1614 = vunpack.c.h.b16 %v1267
  %v1615 = vunpack.c.l.b16 %v1268
  %v1616 = vunpack.c.h.b16 %v1268
  %v1617 = vunpack.c.l.b16 %v1269
  %v1618 = vunpack.c.h.b16 %v1269
  %v1619 = vunpack.c.l.b16 %v1270
  %v1620 = vunpack.c.h.b16 %v1270
  %v1621 = vunpack.c.l.b16 %v1271
  %v1622 = vunpack.c.h.b16 %v1271
  %v1623 = vunpack.c.l.b16 %v1272
  %v1624 = vunpack.c.h.b16 %v1272
  %v1625 = vunpack.c.l.b16 %v1273
  %v1626 = vunpack.c.h.b16 %v1273
  %v1627 = vunpack.c.l.b16 %v1274
  %v1628 = vunpack.c.h.b16 %v1274
  %v1629 = vunpack.c.l.b16 %v1275
  %v1630 = vunpack.c.h.b16 %v1275
  %v1631 = vunpack.c.l.b16 %v1276
  %v1632 = vunpack.c.h.b16 %v1276
  %v1633 = vunpack.c.l.b16 %v1277
  %v1634 = vunpack.c.h.b16 %v1277
  %v1635 = vunpack.c.l.b16 %v1278
  %v1636 = vunpack.c.h.b16 %v1278
  %v1637 = vunpack.c.l.b16 %v1279
  %v1638 = vunpack.c.h.b16 %v1279
  %v1639 = vunpack.c.l.b16 %v1280
  %v1640 = vunpack.c.h.b16 %v1280
  %v1641 = vunpack.c.l.b16 %v1281
  %v1642 = vunpack.c.h.b16 %v1281
  %v1643 = vunpack.c.l.b16 %v1282
  %v1644 = vunpack.c.h.b16 %v1282
  %v1645 = vunpack.c.l.b16 %v1283
  %v1646 = vunpack.c.h.b16 %v1283
  %v1647 = vunpack.c.l.b16 %v1284
  %v1648 = vunpack.c.h.b16 %v1284
  %v1649 = vunpack.c.l.b16 %v1285
  %v1650 = vunpack.c.h.b16 %v1285
  %v1651 = vunpack.c.l.b16 %v1286
  %v1652 = vunpack.c.h.b16 %v1286
  %v1653 = vunpack.c.l.b16 %v1287
  %v1654 = vunpack.c.h.b16 %v1287
  %v1655 = vunpack.c.l.b16 %v1288
  %v1656 = vunpack.c.h.b16 %v1288
  %v1657 = vunpack.c.l.b16 %v1289
  %v1658 = vunpack.c.h.b16 %v1289
  %v1659 = vunpack.c.l.b16 %v1290
  %v1660 = vunpack.c.h.b16 %v1290
  %v1661 = vunpack.c.l.b16 %v1291
  %v1662 = vunpack.c.h.b16 %v1291
  %v1663 = vunpack.c.l.b16 %v1292
  %v1664 = vunpack.c.h.b16 %v1292
  %v1665 = vunpack.c.l.b16 %v1293
  %v1666 = vunpack.c.h.b16 %v1293
  %v1667 = vunpack.c.l.b16 %v1294
  %v1668 = vunpack.c.h.b16 %v1294
  %v1669 = vunpack.c.l.b16 %v1295
  %v1670 = vunpack.c.h.b16 %v1295
  %v1671 = vunpack.c.l.b16 %v1296
  %v1672 = vunpack.c.h.b16 %v1296
  %v1673 = vunpack.c.l.b16 %v1297
  %v1674 = vunpack.c.h.b16 %v1297
  %v1675 = vunpack.c.l.b16 %v1298
  %v1676 = vunpack.c.h.b16 %v1298
  %v1677 = vunpack.c.l.b16 %v1299
  %v1678 = vunpack.c.h.b16 %v1299
  %v1679 = vunpack.c.l.b16 %v1300
  %v1680 = vunpack.c.h.b16 %v1300
  %v1681 = vunpack.c.l.b16 %v1301
  %v1682 = vunpack.c.h.b16 %v1301
  %v1683 = vunpack.c.l.b16 %v1302
  %v1684 = vunpack.c.h.b16 %v1302
  %v1685 = vunpack.c.l.b16 %v1303
  %v1686 = vunpack.c.h.b16 %v1303
  %v1687 = vunpack.c.l.b16 %v1304
  %v1688 = vunpack.c.h.b16 %v1304
  %v1689 = vunpack.c.l.b16 %v1305
  %v1690 = vunpack.c.h.b16 %v1305
  %v1691 = vunpack.c.l.b16 %v1306
  %v1692 = vunpack.c.h.b16 %v1306
  %v1693 = vunpack.c.l.b16 %v1307
  %v1694 = vunpack.c.h.b16 %v1307
  %v1695 = vunpack.c.l.b16 %v1308
  %v1696 = vunpack.c.h.b16 %v1308
  %v1697 = vunpack.c.l.b16 %v1309
  %v1698 = vunpack.c.h.b16 %v1309
  %v1699 = vunpack.c.l.b16 %v1310
  %v1700 = vunpack.c.h.b16 %v1310
  %v1701 = vunpack.c.l.b16 %v1311
  %v1702 = vunpack.c.h.b16 %v1311
  %v1703 = vunpack.c.l.b16 %v1312
  %v1704 = vunpack.c.h.b16 %v1312
  %v1705 = vunpack.c.l.b16 %v1313
  %v1706 = vunpack.c.h.b16 %v1313
  %v1707 = vunpack.c.l.b16 %v1314
  %v1708 = vunpack.c.h.b16 %v1314
  %v1709 = vunpack.c.l.b16 %v1315
  %v1710 = vunpack.c.h.b16 %v1315
  %v1711 = vunpack.c.l.b16 %v1316
  %v1712 = vunpack.c.h.b16 %v1316
  %v1713 = vunpack.c.l.b16 %v1317
  %v1714 = vunpack.c.h.b16 %v1317
  %v1715 = vunpack.c.l.b16 %v1318
  %v1716 = vunpack.c.h.b16 %v1318
  %v1717 = vunpack.c.l.b16 %v1319
  %v1718 = vunpack.c.h.b16 %v1319
  %v1719 = vunpack.c.l.b16 %v1320
  %v1720 = vunpack.c.h.b16 %v1320
  %v1721 = vunpack.c.l.b16 %v1321
  %v1722 = vunpack.c.h.b16 %v1321
  %v1723 = vunpack.c.l.b16 %v1322
  %v1724 = vunpack.c.h.b16 %v1322
  %v1725 = vunpack.c.l.b16 %v1323
  %v1726 = vunpack.c.h.b16 %v1323
  %v1727 = vunpack.c.l.b16 %v1324
  %v1728 = vunpack.c.h.b16 %v1324
  %v1729 = vunpack.c.l.b16 %v1325
  %v1730 = vunpack.c.h.b16 %v1325
  %v1731 = vunpack.c.l.b16 %v1326
  %v1732 = vunpack.c.h.b16 %v1326
  %v1733 = vunpack.c.l.b16 %v1327
  %v1734 = vunpack.c.h.b16 %v1327
  %v1735 = vunpack.c.l.b16 %v1328
  %v1736 = vunpack.c.h.b16 %v1328
  %v1737 = vunpack.c.l.b16 %v1329
  %v1738 = vunpack.c.h.b16 %v1329
  %v1739 = vunpack.c.l.b16 %v1330
  %v1740 = vunpack.c.h.b16 %v1330
  %v1741 = vunpack.c.l.b16 %v1331
  %v1742 = vunpack.c.h.b16 %v1331
  %v1743 = vunpack.c.l.b16 %v1332
  %v1744 = vunpack.c.h.b16 %v1332
  %v1745 = vunpack.c.l.b16 %v1333
  %v1746 = vunpack.c.h.b16 %v1333
  %v1747 = vunpack.c.l.b16 %v1334
  %v1748 = vunpack.c.h.b16 %v1334
  %v1749 = vunpack.c.l.b16 %v1335
  %v1750 = vunpack.c.h.b16 %v1335
  %v1751 = vunpack.c.l.b16 %v1336
  %v1752 = vunpack.c.h.b16 %v1336
  %v1753 = vunpack.c.l.b16 %v1337
  %v1754 = vunpack.c.h.b16 %v1337
  %v1755 = vunpack.c.l.b16 %v1338
  %v1756 = vunpack.c.h.b16 %v1338
  %v1757 = vunpack.c.l.b16 %v1339
  %v1758 = vunpack.c.h.b16 %v1339
  %v1759 = vunpack.c.l.b16 %v1340
  %v1760 = vunpack.c.h.b16 %v1340
  %v1761 = vunpack.c.l.b16 %v1341
  %v1762 = vunpack.c.h.b16 %v1341
  %v1763 = vunpack.c.l.b16 %v1342
  %v1764 = vunpack.c.h.b16 %v1342
  %v1765 = vunpack.c.l.b16 %v1343
  %v1766 = vunpack.c.h.b16 %v1343
  %v1767 = vunpack.c.l.b16 %v1344
  %v1768 = vunpack.c.h.b16 %v1344
  %v1769 = vunpack.c.l.b16 %v1345
  %v1770 = vunpack.c.h.b16 %v1345
  %v1771 = vunpack.c.l.b16 %v1346
  %v1772 = vunpack.c.h.b16 %v1346
  %v1773 = vunpack.c.l.b16 %v1347
  %v1774 = vunpack.c.h.b16 %v1347
  %v1775 = vunpack.c.l.b16 %v1348
  %v1776 = vunpack.c.h.b16 %v1348
  %v1777 = vunpack.c.l.b16 %v1349
  %v1778 = vunpack.c.h.b16 %v1349
  %v1779 = vunpack.c.l.b16 %v1350
  %v1780 = vunpack.c.h.b16 %v1350
  %v1781 = vunpack.c.l.b16 %v1351
  %v1782 = vunpack.c.h.b16 %v1351
  %v1783 = vunpack.c.l.b16 %v1352
  %v1784 = vunpack.c.h.b16 %v1352
  %v1785 = vunpack.c.l.b16 %v1353
  %v1786 = vunpack.c.h.b16 %v1353
  %v1787 = vunpack.c.l.b16 %v1354
  %v1788 = vunpack.c.h.b16 %v1354
  %v1789 = vunpack.c.l.b16 %v1355
  %v1790 = vunpack.c.h.b16 %v1355
  %v1791 = vunpack.c.l.b16 %v1356
  %v1792 = vunpack.c.h.b16 %v1356
  %v1793 = vunpack.c.l.b16 %v1357
  %v1794 = vunpack.c.h.b16 %v1357
  %v1795 = vunpack.c.l.b16 %v1358
  %v1796 = vunpack.c.h.b16 %v1358
  %v1797 = vunpack.c.l.b16 %v1359
  %v1798 = vunpack.c.h.b16 %v1359
  %v1799 = vunpack.c.l.b16 %v1360
  %v1800 = vunpack.c.h.b16 %v1360
  %v1801 = vunpack.c.l.b16 %v1361
  %v1802 = vunpack.c.h.b16 %v1361
  %v1803 = vunpack.c.l.b16 %v1362
  %v1804 = vunpack.c.h.b16 %v1362
  %v1805 = vunpack.c.l.b16 %v1363
  %v1806 = vunpack.c.h.b16 %v1363
  %v1807 = vunpack.c.l.b16 %v1364
  %v1808 = vunpack.c.h.b16 %v1364
  %v1809 = vunpack.c.l.b16 %v1365
  %v1810 = vunpack.c.h.b16 %v1365
  %v1811 = vunpack.c.l.b16 %v1366
  %v1812 = vunpack.c.h.b16 %v1366
  %v1813 = vunpack.c.l.b16 %v1367
  %v1814 = vunpack.c.h.b16 %v1367
  %v1815 = vunpack.c.l.b16 %v1368
  %v1816 = vunpack.c.h.b16 %v1368
  %v1817 = vunpack.c.l.b16 %v1369
  %v1818 = vunpack.c.h.b16 %v1369
  %v1819 = vunpack.c.l.b16 %v1370
  %v1820 = vunpack.c.h.b16 %v1370
  %v1821 = vunpack.c.l.b16 %v1371
  %v1822 = vunpack.c.h.b16 %v1371
  %v1823 = vunpack.c.l.b16 %v1372
  %v1824 = vunpack.c.h.b16 %v1372
  %v1825 = vunpack.c.l.b16 %v1373
  %v1826 = vunpack.c.h.b16 %v1373
  %v1827 = vunpack.c.l.b16 %v1374
  %v1828 = vunpack.c.h.b16 %v1374
  %v1829 = vunpack.c.l.b16 %v1375
  %v1830 = vunpack.c.h.b16 %v1375
  %v1831 = vunpack.c.l.b16 %v1376
  %v1832 = vunpack.c.h.b16 %v1376
  %v1833 = vunpack.c.l.b16 %v1377
  %v1834 = vunpack.c.h.b16 %v1377
  %v1835 = vunpack.c.l.b16 %v1378
  %v1836 = vunpack.c.h.b16 %v1378
  %v1837 = vunpack.c.l.b16 %v1379
  %v1838 = vunpack.c.h.b16 %v1379
  %v1839 = vunpack.c.l.b16 %v1380
  %v1840 = vunpack.c.h.b16 %v1380
  %v1841 = vunpack.c.l.b16 %v1381
  %v1842 = vunpack.c.h.b16 %v1381
  %v1843 = vunpack.c.l.b16 %v1382
  %v1844 = vunpack.c.h.b16 %v1382
  %v1845 = vunpack.c.l.b16 %v1383
  %v1846 = vunpack.c.h.b16 %v1383
  %v1847 = vunpack.c.l.b16 %v1384
  %v1848 = vunpack.c.h.b16 %v1384
  %v1849 = vunpack.c.l.b16 %v1385
  %v1850 = vunpack.c.h.b16 %v1385
  %v1851 = vpack.c.b16 %v1569, %v1563
  %v1852 = vpack.c.b16 %v1570, %v1564
  %v1853 = vpack.c.b16 %v1571, %v1565
  %v1854 = vpack.c.b16 %v1572, %v1566
  %v1855 = vpack.c.b16 %v1573, %v1567
  %v1856 = vpack.c.b16 %v1574, %v1568
  %v1857 = vpack.c.b16 %v1581, %v1575
  %v1858 = vpack.c.b16 %v1582, %v1576
  %v1859 = vpack.c.b16 %v1583, %v1577
  %v1860 = vpack.c.b16 %v1584, %v1578
  %v1861 = vpack.c.b16 %v1585, %v1579
  %v1862 = vpack.c.b16 %v1586, %v1580
  %v1863 = vpack.c.b16 %v1593, %v1587
  %v1864 = vpack.c.b16 %v1594, %v1588
  %v1865 = vpack.c.b16 %v1595, %v1589
  %v1866 = vpack.c.b16 %v1596, %v1590
  %v1867 = vpack.c.b16 %v1597, %v1591
  %v1868 = vpack.c.b16 %v1598, %v1592
  %v1869 = vpack.c.b16 %v1605, %v1599
  %v1870 = vpack.c.b16 %v1606, %v1600
  %v1871 = vpack.c.b16 %v1607, %v1601
  %v1872 = vpack.c.b16 %v1608, %v1602
  %v1873 = vpack.c.b16 %v1609, %v1603
  %v1874 = vpack.c.b16 %v1610, %v1604
  %v1875 = vpack.c.b16 %v1617, %v1611
  %v1876 = vpack.c.b16 %v1618, %v1612
  %v1877 = vpack.c.b16 %v1619, %v1613
  %v1878 = vpack.c.b16 %v1620, %v1614
  %v1879 = vpack.c.b16 %v1621, %v1615
  %v1880 = vpack.c.b16 %v1622, %v1616
  %v1881 = vpack.c.b16 %v1629, %v1623
  %v1882 = vpack.c.b16 %v1630, %v1624
  %v1883 = vpack.c.b16 %v1631, %v1625
  %v1884 = vpack.c.b16 %v1632, %v1626
  %v1885 = vpack.c.b16 %v1633, %v1627
  %v1886 = vpack.c.b16 %v1634, %v1628
  %v1887 = vpack.c.b16 %v1641, %v1635
  %v1888 = vpack.c.b16 %v1642, %v1636
  %v1889 = vpack.c.b16 %v1643, %v1637
  %v1890 = vpack.c.b16 %v1644, %v1638
  %v1891 = vpack.c.b16 %v1645, %v1639
  %v1892 = vpack.c.b16 %v1646, %v1640
  %v1893 = vpack.c.b16 %v1653, %v1647
  %v1894 = vpack.c.b16 %v1654, %v1648
  %v1895 = vpack.c.b16 %v1655, %v1649
  %v1896 = vpack.c.b16 %v1656, %v1650
  %v1897 = vpack.c.b16 %v1657, %v1651
  %v1898 = vpack.c.b16 %v1658, %v1652
  %v1899 = vpack.c.b16 %v1665, %v1659
  %v1900 = vpack.c.b16 %v1666, %v1660
  %v1901 = vpack.c.b16 %v1667, %v1661
  %v1902 = vpack.c.b16 %v1668, %v1662
  %v1903 = vpack.c.b16 %v1669, %v1663
  %v1904 = vpack.c.b16 %v1670, %v1664
  %v1905 = vpack.c.b16 %v1677, %v1671
  %v1906 = vpack.c.b16 %v1678, %v1672
  %v1907 = vpack.c.b16 %v1679, %v1673
  %v1908 = vpack.c.b16 %v1680, %v1674
  %v1909 = vpack.c.b16 %v1681, %v1675
  %v1910 = vpack.c.b16 %v1682, %v1676
  %v1911 = vpack.c.b16 %v1689, %v1683
  %v1912 = vpack.c.b16 %v1690, %v1684
  %v1913 = vpack.c.b16 %v1691, %v1685
  %v1914 = vpack.c.b16 %v1692, %v1686
  %v1915 = vpack.c.b16 %v1693, %v1687
  %v1916 = vpack.c.b16 %v1694, %v1688
  %v1917 = vpack.c.b16 %v1701, %v1695
  %v1918 = vpack.c.b16 %v1702, %v1696
  %v1919 = vpack.c.b16 %v1703, %v1697
  %v1920 = vpack.c.b16 %v1704, %v1698
  %v1921 = vpack.c.b16 %v1705, %v1699
  %v1922 = vpack.c.b16 %v1706, %v1700
  %v1923 = vpack.c.b16 %v1713, %v1707
  %v1924 = vpack.c.b16 %v1714, %v1708
  %v1925 = vpack.c.b16 %v1715, %v1709
  %v1926 = vpack.c.b16 %v1716, %v1710
  %v1927 = vpack.c.b16 %v1717, %v1711
  %v1928 = vpack.c.b16 %v1718, %v1712
  %v1929 = vpack.c.b16 %v1725, %v1719
  %v1930 = vpack.c.b16 %v1726, %v1720
  %v1931 = vpack.c.b16 %v1727, %v1721
  %v1932 = vpack.c.b16 %v1728, %v1722
  %v1933 = vpack.c.b16 %v1729, %v1723
  %v1934 = vpack.c.b16 %v1730, %v1724
  %v1935 = vpack.c.b16 %v1737, %v1731
  %v1936 = vpack.c.b16 %v1738, %v1732
  %v1937 = vpack.c.b16 %v1739, %v1733
  %v1938 = vpack.c.b16 %v1740, %v1734
  %v1939 = vpack.c.b16 %v1741, %v1735
  %v1940 = vpack.c.b16 %v1742, %v1736
  %v1941 = vpack.c.b16 %v1749, %v1743
  %v1942 = vpack.c.b16 %v1750, %v1744
  %v1943 = vpack.c.b16 %v1751, %v1745
  %v1944 = vpack.c.b16 %v1752, %v1746
  %v1945 = vpack.c.b16 %v1753, %v1747
  %v1946 = vpack.c.b16 %v1754, %v1748
  %v1947 = vpack.c.b16 %v1761, %v1755
  %v1948 = vpack.c.b16 %v1762, %v1756
  %v1949 = vpack.c.b16 %v1763, %v1757
  %v1950 = vpack.c.b16 %v1764, %v1758
  %v1951 = vpack.c.b16 %v1765, %v1759
  %v1952 = vpack.c.b16 %v1766, %v1760
  %v1953 = vpack.c.b16 %v1773, %v1767
  %v1954 = vpack.c.b16 %v1774, %v1768
  %v1955 = vpack.c.b16 %v1775, %v1769
  %v1956 = vpack.c.b16 %v1776, %v1770
  %v1957 = vpack.c.b16 %v1777, %v1771
  %v1958 = vpack.c.b16 %v1778, %v1772
  %v1959 = vpack.c.b16 %v1785, %v1779
  %v1960 = vpack.c.b16 %v1786, %v1780
  %v1961 = vpack.c.b16 %v1787, %v1781
  %v1962 = vpack.c.b16 %v1788, %v1782
  %v1963 = vpack.c.b16 %v1789, %v1783
  %v1964 = vpack.c.b16 %v1790, %v1784
  %v1965 = vpack.c.b16 %v1797, %v1791
  %v1966 = vpack.c.b16 %v1798, %v1792
  %v1967 = vpack.c.b16 %v1799, %v1793
  %v1968 = vpack.c.b16 %v1800, %v1794
  %v1969 = vpack.c.b16 %v1801, %v1795
  %v1970 = vpack.c.b16 %v1802, %v1796
  %v1971 = vpack.c.b16 %v1809, %v1803
  %v1972 = vpack.c.b16 %v1810, %v1804
  %v1973 = vpack.c.b16 %v1811, %v1805
  %v1974 = vpack.c.b16 %v1812, %v1806
  %v1975 = vpack.c.b16 %v1813, %v1807
  %v1976 = vpack.c.b16 %v1814, %v1808
  %v1977 = vpack.c.b16 %v1821, %v1815
  %v1978 = vpack.c.b16 %v1822, %v1816
  %v1979 = vpack.c.b16 %v1823, %v1817
  %v1980 = vpack.c.b16 %v1824, %v1818
  %v1981 = vpack.c.b16 %v1825, %v1819
  %v1982 = vpack.c.b16 %v1826, %v1820
  %v1983 = vpack.c.b16 %v1833, %v1827
  %v1984 = vpack.c.b16 %v1834, %v1828
  %v1985 = vpack.c.b16 %v1835, %v1829
  %v1986 = vpack.c.b16 %v1836, %v1830
  %v1987 = vpack.c.b16 %v1837, %v1831
  %v1988 = vpack.c.b16 %v1838, %v1832
  %v1989 = vpack.c.b16 %v1845, %v1839
  %v1990 = vpack.c.b16 %v1846, %v1840
  %v1991 = vpack.c.b16 %v1847, %v1841
  %v1992 = vpack.c.b16 %v1848, %v1842
  %v1993 = vpack.c.b16 %v1849, %v1843
  %v1994 = vpack.c.b16 %v1850, %v1844
  %2139 = vmatprep.subr.bf16.mxu0 %v1894
  %2140 = vmatpush1.bf16.msra.mxu0 %v1893
  %2141 = vmatprep.subr.bf16.mxu0 %v1888
  %2142 = vmatpush1.bf16.msra.mxu0 %v1887
  %2143 = vmatprep.subr.bf16.mxu0 %v1882
  %2144 = vmatpush1.bf16.msra.mxu0 %v1881
  %2145 = vmatprep.subr.bf16.mxu0 %v1876
  %2146 = vmatpush1.bf16.msra.mxu0 %v1875
  %2147 = vmatprep.subr.bf16.mxu0 %v1870
  %2148 = vmatpush1.bf16.msra.mxu0 %v1869
  %2149 = vmatprep.subr.bf16.mxu0 %v1864
  %2150 = vmatpush1.bf16.msra.mxu0 %v1863
  %2151 = vmatprep.subr.bf16.mxu0 %v1858
  %2152 = vmatpush1.bf16.msra.mxu0 %v1857
  %2153 = vmatprep.subr.bf16.mxu0 %v1852
  %2154 = vmatpush1.bf16.msra.mxu0 %v1851
  %2155 = vmatprep.subr.bf16.mxu0 %v1942
  %2156 = vmatpush2.bf16.msra.mxu0 %v1941
  %2157 = vmatprep.subr.bf16.mxu0 %v1936
  %2158 = vmatpush2.bf16.msra.mxu0 %v1935
  %2159 = vmatprep.subr.bf16.mxu0 %v1930
  %2160 = vmatpush2.bf16.msra.mxu0 %v1929
  %2161 = vmatprep.subr.bf16.mxu0 %v1924
  %2162 = vmatpush2.bf16.msra.mxu0 %v1923
  %2163 = vmatprep.subr.bf16.mxu0 %v1918
  %2164 = vmatpush2.bf16.msra.mxu0 %v1917
  %2165 = vmatprep.subr.bf16.mxu0 %v1912
  %2166 = vmatpush2.bf16.msra.mxu0 %v1911
  %2167 = vmatprep.subr.bf16.mxu0 %v1906
  %2168 = vmatpush2.bf16.msra.mxu0 %v1905
  %2169 = vmatprep.subr.bf16.mxu0 %v1900
  %2170 = vmatpush2.bf16.msra.mxu0 %v1899
  %2171 = vmatprep.mubr.bf16.mxu0 %v1239
  %2172 = vmatmul.mubr.bf16.gmra.mxu0 %v1238
  %v2173 = vpop.f32.mrf.mxu0
  %v2174 = vadd.f32 %v1392, %v2173
  %v2175 = vpop.f32.mrf.mxu0
  %v2176 = vadd.f32 %v1396, %v2175
  %v2177 = vpop.f32.mrf.mxu0
  %v2178 = vadd.f32 %v1392, %v2177
  %v2179 = vpop.f32.mrf.mxu0
  %v2180 = vadd.f32 %v1396, %v2179
  %2181 = vdwg.mxu0
  %2182 = vmatprep.subr.bf16.mxu0 %v1990
  %2183 = vmatpush1.bf16.msra.mxu0 %v1989
  %2184 = vmatprep.subr.bf16.mxu0 %v1984
  %2185 = vmatpush1.bf16.msra.mxu0 %v1983
  %2186 = vmatprep.subr.bf16.mxu0 %v1978
  %2187 = vmatpush1.bf16.msra.mxu0 %v1977
  %2188 = vmatprep.subr.bf16.mxu0 %v1972
  %2189 = vmatpush1.bf16.msra.mxu0 %v1971
  %2190 = vmatprep.subr.bf16.mxu0 %v1966
  %2191 = vmatpush1.bf16.msra.mxu0 %v1965
  %2192 = vmatprep.subr.bf16.mxu0 %v1960
  %2193 = vmatpush1.bf16.msra.mxu0 %v1959
  %2194 = vmatprep.subr.bf16.mxu0 %v1954
  %2195 = vmatpush1.bf16.msra.mxu0 %v1953
  %2196 = vmatprep.subr.bf16.mxu0 %v1948
  %2197 = vmatpush1.bf16.msra.mxu0 %v1947
  %2198 = vmatprep.subr.bf16.mxu0 0
  %2199 = vmatpush2.bf16.msra.mxu0 0
  %2200 = vmatprep.subr.bf16.mxu0 0
  %2201 = vmatpush2.bf16.msra.mxu0 0
  %2202 = vmatprep.subr.bf16.mxu0 0
  %2203 = vmatpush2.bf16.msra.mxu0 0
  %2204 = vmatprep.subr.bf16.mxu0 0
  %2205 = vmatpush2.bf16.msra.mxu0 0
  %2206 = vmatprep.subr.bf16.mxu0 0
  %2207 = vmatpush2.bf16.msra.mxu0 0
  %2208 = vmatprep.subr.bf16.mxu0 0
  %2209 = vmatpush2.bf16.msra.mxu0 0
  %2210 = vmatprep.subr.bf16.mxu0 0
  %2211 = vmatpush2.bf16.msra.mxu0 0
  %2212 = vmatprep.subr.bf16.mxu0 0
  %2213 = vmatpush2.bf16.msra.mxu0 0
  %2214 = vmatprep.mubr.bf16.mxu0 0
  %2215 = vmatmul.mubr.bf16.gmra.mxu0 %v1240
  %v2216 = vpop.f32.mrf.mxu0
  %v2217 = vadd.f32 %v2174, %v2216
  %v2218 = vpop.f32.mrf.mxu0
  %v2219 = vadd.f32 %v2176, %v2218
  %v2220 = vpop.f32.mrf.mxu0
  %v2221 = vadd.f32 %v2178, %v2220
  %v2222 = vpop.f32.mrf.mxu0
  %v2223 = vadd.f32 %v2180, %v2222
  %2224 = vdwg.mxu0
  %2225 = vmatprep.subr.bf16.mxu0 %v1896
  %2226 = vmatpush1.bf16.msra.mxu0 %v1895
  %2227 = vmatprep.subr.bf16.mxu0 %v1890
  %2228 = vmatpush1.bf16.msra.mxu0 %v1889
  %2229 = vmatprep.subr.bf16.mxu0 %v1884
  %2230 = vmatpush1.bf16.msra.mxu0 %v1883
  %2231 = vmatprep.subr.bf16.mxu0 %v1878
  %2232 = vmatpush1.bf16.msra.mxu0 %v1877
  %2233 = vmatprep.subr.bf16.mxu0 %v1872
  %2234 = vmatpush1.bf16.msra.mxu0 %v1871
  %2235 = vmatprep.subr.bf16.mxu0 %v1866
  %2236 = vmatpush1.bf16.msra.mxu0 %v1865
  %2237 = vmatprep.subr.bf16.mxu0 %v1860
  %2238 = vmatpush1.bf16.msra.mxu0 %v1859
  %2239 = vmatprep.subr.bf16.mxu0 %v1854
  %2240 = vmatpush1.bf16.msra.mxu0 %v1853
  %2241 = vmatprep.subr.bf16.mxu0 %v1944
  %2242 = vmatpush2.bf16.msra.mxu0 %v1943
  %2243 = vmatprep.subr.bf16.mxu0 %v1938
  %2244 = vmatpush2.bf16.msra.mxu0 %v1937
  %2245 = vmatprep.subr.bf16.mxu0 %v1932
  %2246 = vmatpush2.bf16.msra.mxu0 %v1931
  %2247 = vmatprep.subr.bf16.mxu0 %v1926
  %2248 = vmatpush2.bf16.msra.mxu0 %v1925
  %2249 = vmatprep.subr.bf16.mxu0 %v1920
  %2250 = vmatpush2.bf16.msra.mxu0 %v1919
  %2251 = vmatprep.subr.bf16.mxu0 %v1914
  %2252 = vmatpush2.bf16.msra.mxu0 %v1913
  %2253 = vmatprep.subr.bf16.mxu0 %v1908
  %2254 = vmatpush2.bf16.msra.mxu0 %v1907
  %2255 = vmatprep.subr.bf16.mxu0 %v1902
  %2256 = vmatpush2.bf16.msra.mxu0 %v1901
  %2257 = vmatprep.mubr.bf16.mxu0 %v1239
  %2258 = vmatmul.mubr.bf16.gmra.mxu0 %v1238
  %v2259 = vpop.f32.mrf.mxu0
  %v2260 = vadd.f32 %v1400, %v2259
  %v2261 = vpop.f32.mrf.mxu0
  %v2262 = vadd.f32 %v1404, %v2261
  %v2263 = vpop.f32.mrf.mxu0
  %v2264 = vadd.f32 %v1400, %v2263
  %v2265 = vpop.f32.mrf.mxu0
  %v2266 = vadd.f32 %v1404, %v2265
  %2267 = vdwg.mxu0
  %2268 = vmatprep.subr.bf16.mxu0 %v1992
  %2269 = vmatpush1.bf16.msra.mxu0 %v1991
  %2270 = vmatprep.subr.bf16.mxu0 %v1986
  %2271 = vmatpush1.bf16.msra.mxu0 %v1985
  %2272 = vmatprep.subr.bf16.mxu0 %v1980
  %2273 = vmatpush1.bf16.msra.mxu0 %v1979
  %2274 = vmatprep.subr.bf16.mxu0 %v1974
  %2275 = vmatpush1.bf16.msra.mxu0 %v1973
  %2276 = vmatprep.subr.bf16.mxu0 %v1968
  %2277 = vmatpush1.bf16.msra.mxu0 %v1967
  %2278 = vmatprep.subr.bf16.mxu0 %v1962
  %2279 = vmatpush1.bf16.msra.mxu0 %v1961
  %2280 = vmatprep.subr.bf16.mxu0 %v1956
  %2281 = vmatpush1.bf16.msra.mxu0 %v1955
  %2282 = vmatprep.subr.bf16.mxu0 %v1950
  %2283 = vmatpush1.bf16.msra.mxu0 %v1949
  %2284 = vmatprep.subr.bf16.mxu0 0
  %2285 = vmatpush2.bf16.msra.mxu0 0
  %2286 = vmatprep.subr.bf16.mxu0 0
  %2287 = vmatpush2.bf16.msra.mxu0 0
  %2288 = vmatprep.subr.bf16.mxu0 0
  %2289 = vmatpush2.bf16.msra.mxu0 0
  %2290 = vmatprep.subr.bf16.mxu0 0
  %2291 = vmatpush2.bf16.msra.mxu0 0
  %2292 = vmatprep.subr.bf16.mxu0 0
  %2293 = vmatpush2.bf16.msra.mxu0 0
  %2294 = vmatprep.subr.bf16.mxu0 0
  %2295 = vmatpush2.bf16.msra.mxu0 0
  %2296 = vmatprep.subr.bf16.mxu0 0
  %2297 = vmatpush2.bf16.msra.mxu0 0
  %2298 = vmatprep.subr.bf16.mxu0 0
  %2299 = vmatpush2.bf16.msra.mxu0 0
  %2300 = vmatprep.mubr.bf16.mxu0 0
  %2301 = vmatmul.mubr.bf16.gmra.mxu0 %v1240
  %v2302 = vpop.f32.mrf.mxu0
  %v2303 = vadd.f32 %v2260, %v2302
  %v2304 = vpop.f32.mrf.mxu0
  %v2305 = vadd.f32 %v2262, %v2304
  %v2306 = vpop.f32.mrf.mxu0
  %v2307 = vadd.f32 %v2264, %v2306
  %v2308 = vpop.f32.mrf.mxu0
  %v2309 = vadd.f32 %v2266, %v2308
  %2310 = vdwg.mxu0
  %2311 = vmatprep.subr.bf16.mxu0 %v1898
  %2312 = vmatpush1.bf16.msra.mxu0 %v1897
  %2313 = vmatprep.subr.bf16.mxu0 %v1892
  %2314 = vmatpush1.bf16.msra.mxu0 %v1891
  %2315 = vmatprep.subr.bf16.mxu0 %v1886
  %2316 = vmatpush1.bf16.msra.mxu0 %v1885
  %2317 = vmatprep.subr.bf16.mxu0 %v1880
  %2318 = vmatpush1.bf16.msra.mxu0 %v1879
  %2319 = vmatprep.subr.bf16.mxu0 %v1874
  %2320 = vmatpush1.bf16.msra.mxu0 %v1873
  %2321 = vmatprep.subr.bf16.mxu0 %v1868
  %2322 = vmatpush1.bf16.msra.mxu0 %v1867
  %2323 = vmatprep.subr.bf16.mxu0 %v1862
  %2324 = vmatpush1.bf16.msra.mxu0 %v1861
  %2325 = vmatprep.subr.bf16.mxu0 %v1856
  %2326 = vmatpush1.bf16.msra.mxu0 %v1855
  %2327 = vmatprep.subr.bf16.mxu0 %v1946
  %2328 = vmatpush2.bf16.msra.mxu0 %v1945
  %2329 = vmatprep.subr.bf16.mxu0 %v1940
  %2330 = vmatpush2.bf16.msra.mxu0 %v1939
  %2331 = vmatprep.subr.bf16.mxu0 %v1934
  %2332 = vmatpush2.bf16.msra.mxu0 %v1933
  %2333 = vmatprep.subr.bf16.mxu0 %v1928
  %2334 = vmatpush2.bf16.msra.mxu0 %v1927
  %2335 = vmatprep.subr.bf16.mxu0 %v1922
  %2336 = vmatpush2.bf16.msra.mxu0 %v1921
  %2337 = vmatprep.subr.bf16.mxu0 %v1916
  %2338 = vmatpush2.bf16.msra.mxu0 %v1915
  %2339 = vmatprep.subr.bf16.mxu0 %v1910
  %2340 = vmatpush2.bf16.msra.mxu0 %v1909
  %2341 = vmatprep.subr.bf16.mxu0 %v1904
  %2342 = vmatpush2.bf16.msra.mxu0 %v1903
  %2343 = vmatprep.mubr.bf16.mxu0 %v1239
  %2344 = vmatmul.mubr.bf16.gmra.mxu0 %v1238
  %v2345 = vpop.f32.mrf.mxu0
  %v2346 = vadd.f32 %v1408, %v2345
  %v2347 = vpop.f32.mrf.mxu0
  %v2348 = vadd.f32 %v1412, %v2347
  %v2349 = vpop.f32.mrf.mxu0
  %v2350 = vadd.f32 %v1408, %v2349
  %v2351 = vpop.f32.mrf.mxu0
  %v2352 = vadd.f32 %v1412, %v2351
  %2353 = vdwg.mxu0
  %2354 = vmatprep.subr.bf16.mxu0 %v1994
  %2355 = vmatpush1.bf16.msra.mxu0 %v1993
  %2356 = vmatprep.subr.bf16.mxu0 %v1988
  %2357 = vmatpush1.bf16.msra.mxu0 %v1987
  %2358 = vmatprep.subr.bf16.mxu0 %v1982
  %2359 = vmatpush1.bf16.msra.mxu0 %v1981
  %2360 = vmatprep.subr.bf16.mxu0 %v1976
  %2361 = vmatpush1.bf16.msra.mxu0 %v1975
  %2362 = vmatprep.subr.bf16.mxu0 %v1970
  %2363 = vmatpush1.bf16.msra.mxu0 %v1969
  %2364 = vmatprep.subr.bf16.mxu0 %v1964
  %2365 = vmatpush1.bf16.msra.mxu0 %v1963
  %2366 = vmatprep.subr.bf16.mxu0 %v1958
  %2367 = vmatpush1.bf16.msra.mxu0 %v1957
  %2368 = vmatprep.subr.bf16.mxu0 %v1952
  %2369 = vmatpush1.bf16.msra.mxu0 %v1951
  %2370 = vmatprep.subr.bf16.mxu0 0
  %2371 = vmatpush2.bf16.msra.mxu0 0
  %2372 = vmatprep.subr.bf16.mxu0 0
  %2373 = vmatpush2.bf16.msra.mxu0 0
  %2374 = vmatprep.subr.bf16.mxu0 0
  %2375 = vmatpush2.bf16.msra.mxu0 0
  %2376 = vmatprep.subr.bf16.mxu0 0
  %2377 = vmatpush2.bf16.msra.mxu0 0
  %2378 = vmatprep.subr.bf16.mxu0 0
  %2379 = vmatpush2.bf16.msra.mxu0 0
  %2380 = vmatprep.subr.bf16.mxu0 0
  %2381 = vmatpush2.bf16.msra.mxu0 0
  %2382 = vmatprep.subr.bf16.mxu0 0
  %2383 = vmatpush2.bf16.msra.mxu0 0
  %2384 = vmatprep.subr.bf16.mxu0 0
  %2385 = vmatpush2.bf16.msra.mxu0 0
  %2386 = vmatprep.mubr.bf16.mxu0 0
  %2387 = vmatmul.mubr.bf16.gmra.mxu0 %v1240
  %v2388 = vpop.f32.mrf.mxu0
  %v2389 = vadd.f32 %v2346, %v2388
  %v2390 = vpop.f32.mrf.mxu0
  %v2391 = vadd.f32 %v2348, %v2390
  %v2392 = vpop.f32.mrf.mxu0
  %v2393 = vadd.f32 %v2350, %v2392
  %v2394 = vpop.f32.mrf.mxu0
  %v2395 = vadd.f32 %v2352, %v2394
  %2396 = vdwg.mxu0
  %v2397 = vxor.u32 %v2217, 2147483648
  %v2398 = vxor.u32 %v2219, 2147483648
  %v2399 = vxor.u32 %v2303, 2147483648
  %v2400 = vxor.u32 %v2221, 2147483648
  %v2401 = vxor.u32 %v2223, 2147483648
  %v2402 = vxor.u32 %v2307, 2147483648
  %v2403 = vmul.f32 %v2397, 1.442695
  %v2404 = vpow.pop %v2403
  %v2405 = vmul.f32 %v2398, 1.442695
  %v2406 = vpow.pop %v2405
  %v2407 = vmul.f32 %v2399, 1.442695
  %v2408 = vpow.pop %v2407
  %v2409 = vmul.f32 %v2400, 1.442695
  %v2410 = vpow.pop %v2409
  %v2411 = vmul.f32 %v2401, 1.442695
  %v2412 = vpow.pop %v2411
  %v2413 = vmul.f32 %v2402, 1.442695
  %v2414 = vpow.pop %v2413
  %v2415 = vadd.f32 %v2404, 1.0
  %v2416 = vadd.f32 %v2406, 1.0
  %v2417 = vadd.f32 %v2408, 1.0
  %v2418 = vadd.f32 %v2410, 1.0
  %v2419 = vadd.f32 %v2412, 1.0
  %v2420 = vadd.f32 %v2414, 1.0
  %v2421 = vrcp.pop %v2415
  %v2422 = vmul.f32 1.0, %v2421
  %v2423 = vrcp.pop %v2416
  %v2424 = vmul.f32 1.0, %v2423
  %v2425 = vrcp.pop %v2417
  %v2426 = vmul.f32 1.0, %v2425
  %v2427 = vrcp.pop %v2418
  %v2428 = vmul.f32 1.0, %v2427
  %v2429 = vrcp.pop %v2419
  %v2430 = vmul.f32 1.0, %v2429
  %v2431 = vrcp.pop %v2420
  %v2432 = vmul.f32 1.0, %v2431
  %v2433 = vmax.f32 %v2305, 0.0
  %v2434 = vmax.f32 %v2389, 0.0
  %v2435 = vmax.f32 %v2391, 0.0
  %v2436 = vmax.f32 %v2309, 0.0
  %v2437 = vmax.f32 %v2393, 0.0
  %v2438 = vmax.f32 %v2395, 0.0
  %v2439 = vsub.f32 %v2433, %v1232
  %v2440 = vsub.f32 %v2434, %v1233
  %v2441 = vsub.f32 %v2435, %v1234
  %v2442 = vsub.f32 %v2436, %v1235
  %v2443 = vsub.f32 %v2437, %v1236
  %v2444 = vsub.f32 %v2438, %v1237
  %v2445 = vmul.f32 %v2422, %v2439
  %v2446 = vmul.f32 %v2424, %v2440
  %v2447 = vmul.f32 %v2426, %v2441
  %v2448 = vmul.f32 %v2428, %v2442
  %v2449 = vmul.f32 %v2430, %v2443
  %v2450 = vmul.f32 %v2432, %v2444
  %v2451 = vadd.f32 %v1232, %v2445
  %v2452 = vadd.f32 %v1233, %v2446
  %v2453 = vadd.f32 %v1234, %v2447
  %v2454 = vadd.f32 %v1235, %v2448
  %v2455 = vadd.f32 %v1236, %v2449
  %v2456 = vadd.f32 %v1237, %v2450
  %2457 = vst [vmem:[%s3] sm:$0xff] %v2451
  %2458 = vst [vmem:[%s3 + $0x8] sm:$0xff] %v2452
  %2459 = vst [vmem:[%s3 + $0x10] sm:$0xff] %v2453
  %2460 = vst [vmem:[%s3 + $0x18] sm:$0xff] %v2454
  %2461 = vst [vmem:[%s3 + $0x20] sm:$0xff] %v2455
  %2462 = vst [vmem:[%s3 + $0x28] sm:$0xff] %v2456
  // Predicated region
  $region14: #{embedding_forward.7} parent=0 // pred_check
    _
  $region15: #{embedding_forward.7} parent=0 // pred_check_branch
    %2464 = sbr.rel (0) target = $region17
  $region16: #{embedding_forward.7} parent=0 // pred_region
    _
  $region17: #{embedding_forward.7} parent=0 // pred_fallthru
    _
  // Predicated region
  $region18: #{embedding_forward.7} parent=0 // pred_check
    _
  $region19: #{embedding_forward.7} parent=0 // pred_check_branch
    %2466 = sbr.rel (0) target = $region21
  $region20: #{embedding_forward.7} parent=0 // pred_region
    _
  $region21: #{embedding_forward.7} parent=0 // pred_fallthru
    _

</llo_original>
